<compile_context>
chip_gen: v5e
topology: v5e:2x2
jax: 0.10.0
libtpu: 0.0.40
codegen_flags: <defaults>
</compile_context>

<pallas_src>
import functools

import jax
import jax.numpy as jnp
from jax.experimental import pallas as pl
from jax.experimental.pallas import tpu as pltpu

LV_NUMBER = 10
D_IN = 784
D_HID = 392


def _xavier_normal(key, fan_in, fan_out):
    std = (2.0 / (fan_in + fan_out)) ** 0.5
    # PyTorch weight shape is (out, in); we return the transposed (in, out).
    return std * jax.random.normal(key, (fan_in, fan_out), dtype=jnp.float32)


def _round_up(n, m):
    return ((n + m - 1) // m) * m


def ae_kernel(x_ref,
              w1_ref, b1_ref,
              w2_ref, b2_ref,
              w3_ref, b3_ref,
              w4_ref, b4_ref,
              out_ref, lv_ref):
    x = x_ref[...]

    # encoder: Linear(784,392) + ReLU
    h1 = jnp.dot(x, w1_ref[...], preferred_element_type=jnp.float32) + b1_ref[...]
    h1 = jnp.maximum(h1, 0.0)

    # encoder: Linear(392,10) + ReLU  -> latent Lv
    lv = jnp.dot(h1, w2_ref[...], preferred_element_type=jnp.float32) + b2_ref[...]
    lv = jnp.maximum(lv, 0.0)

    # decoder: Linear(10,392) + ReLU
    h3 = jnp.dot(lv, w3_ref[...], preferred_element_type=jnp.float32) + b3_ref[...]
    h3 = jnp.maximum(h3, 0.0)

    # decoder: Linear(392,784) + Sigmoid (EUP transcendental, keeps VALU free)
    logits = jnp.dot(h3, w4_ref[...], preferred_element_type=jnp.float32) + b4_ref[...]
    out_ref[...] = jax.nn.sigmoid(logits)

    lv_ref[...] = lv


def _const_spec(shape, single_buffer):
    index_map = lambda i: (0,) * len(shape)
    if single_buffer:
        # Constant block index: weights stay resident, one buffer is enough
        # (saves ~2.5 MiB of duplicated VMEM -> headroom for larger tb on v7x).
        return pl.BlockSpec(shape, index_map, pipeline_mode=pl.Buffered(1))
    return pl.BlockSpec(shape, index_map)


def _build_call(b_pad, tb, single_buffer_weights):
    const = functools.partial(_const_spec, single_buffer=single_buffer_weights)
    n_param_elems = (D_IN * D_HID + D_HID + D_HID * LV_NUMBER + LV_NUMBER
                     + LV_NUMBER * D_HID + D_HID + D_HID * D_IN + D_IN)
    cost = pl.CostEstimate(
        flops=2 * b_pad * (D_IN * D_HID + D_HID * LV_NUMBER
                           + LV_NUMBER * D_HID + D_HID * D_IN),
        transcendentals=b_pad * D_IN,  # sigmoid on the reconstruction
        bytes_accessed=4 * (2 * b_pad * D_IN + b_pad * LV_NUMBER + n_param_elems),
    )
    return pl.pallas_call(
        ae_kernel,
        out_shape=(
            jax.ShapeDtypeStruct((b_pad, D_IN), jnp.float32),       # reconstruction
            jax.ShapeDtypeStruct((b_pad, LV_NUMBER), jnp.float32),  # latent Lv
        ),
        grid_spec=pltpu.PrefetchScalarGridSpec(
            num_scalar_prefetch=0,
            grid=(b_pad // tb,),
            in_specs=[
                pl.BlockSpec((tb, D_IN), lambda i: (i, 0)),          # x tile
                const((D_IN, D_HID)), const((1, D_HID)),             # W1, b1
                const((D_HID, LV_NUMBER)), const((1, LV_NUMBER)),    # W2, b2
                const((LV_NUMBER, D_HID)), const((1, D_HID)),        # W3, b3
                const((D_HID, D_IN)), const((1, D_IN)),              # W4, b4
            ],
            out_specs=[
                pl.BlockSpec((tb, D_IN), lambda i: (i, 0)),
                pl.BlockSpec((tb, LV_NUMBER), lambda i: (i, 0)),
            ],
        ),
        compiler_params=pltpu.CompilerParams(
            dimension_semantics=("parallel",)),
        cost_estimate=cost,
    )


def autoencoder_forward(x, params, *, tb=256):
    """AutoEncoder forward.

    tb is the batch tile presented to the MXU per grid step (default 256:
    fills the 256x256 MXU on v6e/v7x, 2x128 on v5e). For small batches the
    tile is clamped to the batch (rounded up to a sublane multiple of 8);
    ragged batches are zero-padded and the pad rows sliced off the outputs.
    On v7x, pick tb <= B/2 so the "parallel" grid axis spans both TensorCores.
    """
    B = x.shape[0]
    if tb % 8 != 0:
        raise ValueError("tb must be a multiple of 8")
    tb_eff = min(tb, _round_up(B, 8))
    b_pad = _round_up(B, tb_eff)
    x_p = jnp.pad(x, ((0, b_pad - B), (0, 0))) if b_pad != B else x

    try:
        out, lv = _build_call(b_pad, tb_eff, True)(x_p, *params)
    except Exception:
        # pl.Buffered(1) unsupported on this jax version: use default buffering.
        out, lv = _build_call(b_pad, tb_eff, False)(x_p, *params)

    if b_pad != B:
        out, lv = out[:B], lv[:B]
    return out, lv


def make_params(key):
    k1, k2, k3, k4 = jax.random.split(key, 4)
    w1 = _xavier_normal(k1, D_IN, D_HID)
    w2 = _xavier_normal(k2, D_HID, LV_NUMBER)
    w3 = _xavier_normal(k3, LV_NUMBER, D_HID)
    w4 = _xavier_normal(k4, D_HID, D_IN)
    b1 = jnp.zeros((1, D_HID), jnp.float32)
    b2 = jnp.zeros((1, LV_NUMBER), jnp.float32)
    b3 = jnp.zeros((1, D_HID), jnp.float32)
    b4 = jnp.zeros((1, D_IN), jnp.float32)
    return (w1, b1, w2, b2, w3, b3, w4, b4)


def reference_forward(x, params):
    w1, b1, w2, b2, w3, b3, w4, b4 = params
    h1 = jnp.maximum(x @ w1 + b1, 0.0)
    lv = jnp.maximum(h1 @ w2 + b2, 0.0)
    h3 = jnp.maximum(lv @ w3 + b3, 0.0)
    out = jax.nn.sigmoid(h3 @ w4 + b4)
    return out, lv


if __name__ == "__main__":
    key = jax.random.PRNGKey(0)
    kp, kx1, kx2 = jax.random.split(key, 3)
    params = make_params(kp)

    # Small batch: tile clamps to the batch (single grid step).
    B1 = 8
    x1 = jax.random.uniform(kx1, (B1, D_IN), dtype=jnp.float32)
    out1, lv1 = jax.block_until_ready(autoencoder_forward(x1, params))
    out1_ref, lv1_ref = reference_forward(x1, params)
    assert out1.shape == (B1, D_IN) and lv1.shape == (B1, LV_NUMBER)
    assert jnp.allclose(out1, out1_ref, atol=1e-5, rtol=1e-5)
    assert jnp.allclose(lv1, lv1_ref, atol=1e-5, rtol=1e-5)

    # Ragged batch with a multi-step grid: exercises padding + tail slicing.
    B2 = 40
    x2 = jax.random.uniform(kx2, (B2, D_IN), dtype=jnp.float32)
    out2, lv2 = jax.block_until_ready(autoencoder_forward(x2, params, tb=16))
    out2_ref, lv2_ref = reference_forward(x2, params)
    assert out2.shape == (B2, D_IN) and lv2.shape == (B2, LV_NUMBER)
    assert jnp.allclose(out2, out2_ref, atol=1e-5, rtol=1e-5)
    assert jnp.allclose(lv2, lv2_ref, atol=1e-5, rtol=1e-5)

    print("KERNEL_OK")
</pallas_src>

<mosaic_0001>
module attributes {stable_mosaic.version = 11 : i64} {
  func.func @ae_kernel(%arg0: i32, %arg1: memref<8x784xf32, #tpu.memory_space<vmem>>, %arg2: memref<784x392xf32, #tpu.memory_space<vmem>>, %arg3: memref<1x392xf32, #tpu.memory_space<vmem>>, %arg4: memref<392x10xf32, #tpu.memory_space<vmem>>, %arg5: memref<1x10xf32, #tpu.memory_space<vmem>>, %arg6: memref<10x392xf32, #tpu.memory_space<vmem>>, %arg7: memref<1x392xf32, #tpu.memory_space<vmem>>, %arg8: memref<392x784xf32, #tpu.memory_space<vmem>>, %arg9: memref<1x784xf32, #tpu.memory_space<vmem>>, %arg10: memref<8x784xf32, #tpu.memory_space<vmem>>, %arg11: memref<8x10xf32, #tpu.memory_space<vmem>>) attributes {dimension_semantics = [#tpu.dimension_semantics<parallel>], iteration_bounds = array<i64: 1>, scalar_prefetch = 0 : i64, scratch_operands = 0 : i64, tpu.core_type = #tpu.core_type<tc>, window_params = [{transform_indices = @transform_0, window_bounds = array<i64: 8, 784>}, {pipeline_mode = #tpu.pipeline_mode<synchronous>, transform_indices = @transform_1, window_bounds = array<i64: 784, 392>}, {pipeline_mode = #tpu.pipeline_mode<synchronous>, transform_indices = @transform_2, window_bounds = array<i64: 1, 392>}, {pipeline_mode = #tpu.pipeline_mode<synchronous>, transform_indices = @transform_3, window_bounds = array<i64: 392, 10>}, {pipeline_mode = #tpu.pipeline_mode<synchronous>, transform_indices = @transform_4, window_bounds = array<i64: 1, 10>}, {pipeline_mode = #tpu.pipeline_mode<synchronous>, transform_indices = @transform_5, window_bounds = array<i64: 10, 392>}, {pipeline_mode = #tpu.pipeline_mode<synchronous>, transform_indices = @transform_6, window_bounds = array<i64: 1, 392>}, {pipeline_mode = #tpu.pipeline_mode<synchronous>, transform_indices = @transform_7, window_bounds = array<i64: 392, 784>}, {pipeline_mode = #tpu.pipeline_mode<synchronous>, transform_indices = @transform_8, window_bounds = array<i64: 1, 784>}, {transform_indices = @transform_9, window_bounds = array<i64: 8, 784>}, {transform_indices = @transform_10, window_bounds = array<i64: 8, 10>}]} {
    %c0 = arith.constant 0 : index
    %c0_0 = arith.constant 0 : index
    %0 = vector.load %arg1[%c0, %c0_0] : memref<8x784xf32, #tpu.memory_space<vmem>>, vector<8x784xf32>
    %c0_1 = arith.constant 0 : index
    %c0_2 = arith.constant 0 : index
    %1 = vector.load %arg2[%c0_1, %c0_2] : memref<784x392xf32, #tpu.memory_space<vmem>>, vector<784x392xf32>
    %cst = arith.constant dense<0.000000e+00> : vector<8x392xf32>
    %2 = tpu.matmul %0, %1, %cst {dimension_numbers = #tpu.dot_dimension_numbers<[1], [0], [0], [1], [0, 0, 1, 1], [], []>} : vector<8x784xf32>, vector<784x392xf32>, vector<8x392xf32> -> vector<8x392xf32>
    %c0_3 = arith.constant 0 : index
    %c0_4 = arith.constant 0 : index
    %3 = vector.load %arg3[%c0_3, %c0_4] : memref<1x392xf32, #tpu.memory_space<vmem>>, vector<1x392xf32>
    %4 = vector.broadcast %3 : vector<1x392xf32> to vector<8x392xf32>
    %5 = arith.addf %2, %4 : vector<8x392xf32>
    %cst_5 = arith.constant 0.000000e+00 : f32
    %6 = vector.broadcast %cst_5 : f32 to vector<8x392xf32>
    %7 = arith.maximumf %5, %6 : vector<8x392xf32>
    %c0_6 = arith.constant 0 : index
    %c0_7 = arith.constant 0 : index
    %8 = vector.load %arg4[%c0_6, %c0_7] : memref<392x10xf32, #tpu.memory_space<vmem>>, vector<392x10xf32>
    %cst_8 = arith.constant dense<0.000000e+00> : vector<8x10xf32>
    %9 = tpu.matmul %7, %8, %cst_8 {dimension_numbers = #tpu.dot_dimension_numbers<[1], [0], [0], [1], [0, 0, 1, 1], [], []>} : vector<8x392xf32>, vector<392x10xf32>, vector<8x10xf32> -> vector<8x10xf32>
    %c0_9 = arith.constant 0 : index
    %c0_10 = arith.constant 0 : index
    %10 = vector.load %arg5[%c0_9, %c0_10] : memref<1x10xf32, #tpu.memory_space<vmem>>, vector<1x10xf32>
    %11 = vector.broadcast %10 : vector<1x10xf32> to vector<8x10xf32>
    %12 = arith.addf %9, %11 : vector<8x10xf32>
    %cst_11 = arith.constant 0.000000e+00 : f32
    %13 = vector.broadcast %cst_11 : f32 to vector<8x10xf32>
    %14 = arith.maximumf %12, %13 : vector<8x10xf32>
    %c0_12 = arith.constant 0 : index
    %c0_13 = arith.constant 0 : index
    %15 = vector.load %arg6[%c0_12, %c0_13] : memref<10x392xf32, #tpu.memory_space<vmem>>, vector<10x392xf32>
    %cst_14 = arith.constant dense<0.000000e+00> : vector<8x392xf32>
    %16 = tpu.matmul %14, %15, %cst_14 {dimension_numbers = #tpu.dot_dimension_numbers<[1], [0], [0], [1], [0, 0, 1, 1], [], []>} : vector<8x10xf32>, vector<10x392xf32>, vector<8x392xf32> -> vector<8x392xf32>
    %c0_15 = arith.constant 0 : index
    %c0_16 = arith.constant 0 : index
    %17 = vector.load %arg7[%c0_15, %c0_16] : memref<1x392xf32, #tpu.memory_space<vmem>>, vector<1x392xf32>
    %18 = vector.broadcast %17 : vector<1x392xf32> to vector<8x392xf32>
    %19 = arith.addf %16, %18 : vector<8x392xf32>
    %cst_17 = arith.constant 0.000000e+00 : f32
    %20 = vector.broadcast %cst_17 : f32 to vector<8x392xf32>
    %21 = arith.maximumf %19, %20 : vector<8x392xf32>
    %c0_18 = arith.constant 0 : index
    %c0_19 = arith.constant 0 : index
    %22 = vector.load %arg8[%c0_18, %c0_19] : memref<392x784xf32, #tpu.memory_space<vmem>>, vector<392x784xf32>
    %cst_20 = arith.constant dense<0.000000e+00> : vector<8x784xf32>
    %23 = tpu.matmul %21, %22, %cst_20 {dimension_numbers = #tpu.dot_dimension_numbers<[1], [0], [0], [1], [0, 0, 1, 1], [], []>} : vector<8x392xf32>, vector<392x784xf32>, vector<8x784xf32> -> vector<8x784xf32>
    %c0_21 = arith.constant 0 : index
    %c0_22 = arith.constant 0 : index
    %24 = vector.load %arg9[%c0_21, %c0_22] : memref<1x784xf32, #tpu.memory_space<vmem>>, vector<1x784xf32>
    %25 = vector.broadcast %24 : vector<1x784xf32> to vector<8x784xf32>
    %26 = arith.addf %23, %25 : vector<8x784xf32>
    %27 = arith.negf %26 : vector<8x784xf32>
    %28 = math.exp %27 : vector<8x784xf32>
    %cst_23 = arith.constant 1.000000e+00 : f32
    %29 = vector.broadcast %cst_23 : f32 to vector<8x784xf32>
    %30 = arith.addf %29, %28 : vector<8x784xf32>
    %31 = arith.divf %29, %30 : vector<8x784xf32>
    %c0_24 = arith.constant 0 : index
    %c0_25 = arith.constant 0 : index
    %32 = vector.load %arg10[%c0_24, %c0_25] : memref<8x784xf32, #tpu.memory_space<vmem>>, vector<8x784xf32>
    tpu.vector_store %arg10[%c0_24, %c0_25], %31 {strides = array<i32>} : memref<8x784xf32, #tpu.memory_space<vmem>>, vector<8x784xf32>,
    %c0_26 = arith.constant 0 : index
    %c0_27 = arith.constant 0 : index
    %33 = vector.load %arg11[%c0_26, %c0_27] : memref<8x10xf32, #tpu.memory_space<vmem>>, vector<8x10xf32>
    tpu.vector_store %arg11[%c0_26, %c0_27], %14 {strides = array<i32>} : memref<8x10xf32, #tpu.memory_space<vmem>>, vector<8x10xf32>,
    return
  }
  func.func @transform_0(%arg0: i32) -> (i32, i32) {
    %c0_i32 = arith.constant 0 : i32
    %c0_i32_0 = arith.constant 0 : i32
    return %arg0, %c0_i32 : i32, i32
  }
  func.func @transform_1(%arg0: i32) -> (i32, i32) {
    %c0_i32 = arith.constant 0 : i32
    %c0_i32_0 = arith.constant 0 : i32
    %c0_i32_1 = arith.constant 0 : i32
    return %c0_i32, %c0_i32_0 : i32, i32
  }
  func.func @transform_2(%arg0: i32) -> (i32, i32) {
    %c0_i32 = arith.constant 0 : i32
    %c0_i32_0 = arith.constant 0 : i32
    %c0_i32_1 = arith.constant 0 : i32
    return %c0_i32, %c0_i32_0 : i32, i32
  }
  func.func @transform_3(%arg0: i32) -> (i32, i32) {
    %c0_i32 = arith.constant 0 : i32
    %c0_i32_0 = arith.constant 0 : i32
    %c0_i32_1 = arith.constant 0 : i32
    return %c0_i32, %c0_i32_0 : i32, i32
  }
  func.func @transform_4(%arg0: i32) -> (i32, i32) {
    %c0_i32 = arith.constant 0 : i32
    %c0_i32_0 = arith.constant 0 : i32
    %c0_i32_1 = arith.constant 0 : i32
    return %c0_i32, %c0_i32_0 : i32, i32
  }
  func.func @transform_5(%arg0: i32) -> (i32, i32) {
    %c0_i32 = arith.constant 0 : i32
    %c0_i32_0 = arith.constant 0 : i32
    %c0_i32_1 = arith.constant 0 : i32
    return %c0_i32, %c0_i32_0 : i32, i32
  }
  func.func @transform_6(%arg0: i32) -> (i32, i32) {
    %c0_i32 = arith.constant 0 : i32
    %c0_i32_0 = arith.constant 0 : i32
    %c0_i32_1 = arith.constant 0 : i32
    return %c0_i32, %c0_i32_0 : i32, i32
  }
  func.func @transform_7(%arg0: i32) -> (i32, i32) {
    %c0_i32 = arith.constant 0 : i32
    %c0_i32_0 = arith.constant 0 : i32
    %c0_i32_1 = arith.constant 0 : i32
    return %c0_i32, %c0_i32_0 : i32, i32
  }
  func.func @transform_8(%arg0: i32) -> (i32, i32) {
    %c0_i32 = arith.constant 0 : i32
    %c0_i32_0 = arith.constant 0 : i32
    %c0_i32_1 = arith.constant 0 : i32
    return %c0_i32, %c0_i32_0 : i32, i32
  }
  func.func @transform_9(%arg0: i32) -> (i32, i32) {
    %c0_i32 = arith.constant 0 : i32
    %c0_i32_0 = arith.constant 0 : i32
    return %arg0, %c0_i32 : i32, i32
  }
  func.func @transform_10(%arg0: i32) -> (i32, i32) {
    %c0_i32 = arith.constant 0 : i32
    %c0_i32_0 = arith.constant 0 : i32
    return %arg0, %c0_i32 : i32, i32
  }
}

module attributes {stable_mosaic.version = 11 : i64} {
  func.func @ae_kernel(%arg0: i32, %arg1: memref<8x784xf32, #tpu.memory_space<vmem>>, %arg2: memref<784x392xf32, #tpu.memory_space<vmem>>, %arg3: memref<1x392xf32, #tpu.memory_space<vmem>>, %arg4: memref<392x10xf32, #tpu.memory_space<vmem>>, %arg5: memref<1x10xf32, #tpu.memory_space<vmem>>, %arg6: memref<10x392xf32, #tpu.memory_space<vmem>>, %arg7: memref<1x392xf32, #tpu.memory_space<vmem>>, %arg8: memref<392x784xf32, #tpu.memory_space<vmem>>, %arg9: memref<1x784xf32, #tpu.memory_space<vmem>>, %arg10: memref<8x784xf32, #tpu.memory_space<vmem>>, %arg11: memref<8x10xf32, #tpu.memory_space<vmem>>) attributes {dimension_semantics = [#tpu.dimension_semantics<parallel>], iteration_bounds = array<i64: 1>, scalar_prefetch = 0 : i64, scratch_operands = 0 : i64, tpu.core_type = #tpu.core_type<tc>, window_params = [{transform_indices = @transform_0, window_bounds = array<i64: 8, 784>}, {pipeline_mode = #tpu.pipeline_mode<synchronous>, transform_indices = @transform_1, window_bounds = array<i64: 784, 392>}, {pipeline_mode = #tpu.pipeline_mode<synchronous>, transform_indices = @transform_2, window_bounds = array<i64: 1, 392>}, {pipeline_mode = #tpu.pipeline_mode<synchronous>, transform_indices = @transform_3, window_bounds = array<i64: 392, 10>}, {pipeline_mode = #tpu.pipeline_mode<synchronous>, transform_indices = @transform_4, window_bounds = array<i64: 1, 10>}, {pipeline_mode = #tpu.pipeline_mode<synchronous>, transform_indices = @transform_5, window_bounds = array<i64: 10, 392>}, {pipeline_mode = #tpu.pipeline_mode<synchronous>, transform_indices = @transform_6, window_bounds = array<i64: 1, 392>}, {pipeline_mode = #tpu.pipeline_mode<synchronous>, transform_indices = @transform_7, window_bounds = array<i64: 392, 784>}, {pipeline_mode = #tpu.pipeline_mode<synchronous>, transform_indices = @transform_8, window_bounds = array<i64: 1, 784>}, {transform_indices = @transform_9, window_bounds = array<i64: 8, 784>}, {transform_indices = @transform_10, window_bounds = array<i64: 8, 10>}]} {
    %c0 = arith.constant 0 : index
    %c0_0 = arith.constant 0 : index
    %0 = vector.load %arg1[%c0, %c0_0] : memref<8x784xf32, #tpu.memory_space<vmem>>, vector<8x784xf32>
    %c0_1 = arith.constant 0 : index
    %c0_2 = arith.constant 0 : index
    %1 = vector.load %arg2[%c0_1, %c0_2] : memref<784x392xf32, #tpu.memory_space<vmem>>, vector<784x392xf32>
    %cst = arith.constant dense<0.000000e+00> : vector<8x392xf32>
    %2 = tpu.matmul %0, %1, %cst {dimension_numbers = #tpu.dot_dimension_numbers<[1], [0], [0], [1], [0, 0, 1, 1], [], []>} : vector<8x784xf32>, vector<784x392xf32>, vector<8x392xf32> -> vector<8x392xf32>
    %c0_3 = arith.constant 0 : index
    %c0_4 = arith.constant 0 : index
    %3 = vector.load %arg3[%c0_3, %c0_4] : memref<1x392xf32, #tpu.memory_space<vmem>>, vector<1x392xf32>
    %4 = vector.broadcast %3 : vector<1x392xf32> to vector<8x392xf32>
    %5 = arith.addf %2, %4 : vector<8x392xf32>
    %cst_5 = arith.constant 0.000000e+00 : f32
    %6 = vector.broadcast %cst_5 : f32 to vector<8x392xf32>
    %7 = arith.maximumf %5, %6 : vector<8x392xf32>
    %c0_6 = arith.constant 0 : index
    %c0_7 = arith.constant 0 : index
    %8 = vector.load %arg4[%c0_6, %c0_7] : memref<392x10xf32, #tpu.memory_space<vmem>>, vector<392x10xf32>
    %cst_8 = arith.constant dense<0.000000e+00> : vector<8x10xf32>
    %9 = tpu.matmul %7, %8, %cst_8 {dimension_numbers = #tpu.dot_dimension_numbers<[1], [0], [0], [1], [0, 0, 1, 1], [], []>} : vector<8x392xf32>, vector<392x10xf32>, vector<8x10xf32> -> vector<8x10xf32>
    %c0_9 = arith.constant 0 : index
    %c0_10 = arith.constant 0 : index
    %10 = vector.load %arg5[%c0_9, %c0_10] : memref<1x10xf32, #tpu.memory_space<vmem>>, vector<1x10xf32>
    %11 = vector.broadcast %10 : vector<1x10xf32> to vector<8x10xf32>
    %12 = arith.addf %9, %11 : vector<8x10xf32>
    %cst_11 = arith.constant 0.000000e+00 : f32
    %13 = vector.broadcast %cst_11 : f32 to vector<8x10xf32>
    %14 = arith.maximumf %12, %13 : vector<8x10xf32>
    %c0_12 = arith.constant 0 : index
    %c0_13 = arith.constant 0 : index
    %15 = vector.load %arg6[%c0_12, %c0_13] : memref<10x392xf32, #tpu.memory_space<vmem>>, vector<10x392xf32>
    %cst_14 = arith.constant dense<0.000000e+00> : vector<8x392xf32>
    %16 = tpu.matmul %14, %15, %cst_14 {dimension_numbers = #tpu.dot_dimension_numbers<[1], [0], [0], [1], [0, 0, 1, 1], [], []>} : vector<8x10xf32>, vector<10x392xf32>, vector<8x392xf32> -> vector<8x392xf32>
    %c0_15 = arith.constant 0 : index
    %c0_16 = arith.constant 0 : index
    %17 = vector.load %arg7[%c0_15, %c0_16] : memref<1x392xf32, #tpu.memory_space<vmem>>, vector<1x392xf32>
    %18 = vector.broadcast %17 : vector<1x392xf32> to vector<8x392xf32>
    %19 = arith.addf %16, %18 : vector<8x392xf32>
    %cst_17 = arith.constant 0.000000e+00 : f32
    %20 = vector.broadcast %cst_17 : f32 to vector<8x392xf32>
    %21 = arith.maximumf %19, %20 : vector<8x392xf32>
    %c0_18 = arith.constant 0 : index
    %c0_19 = arith.constant 0 : index
    %22 = vector.load %arg8[%c0_18, %c0_19] : memref<392x784xf32, #tpu.memory_space<vmem>>, vector<392x784xf32>
    %cst_20 = arith.constant dense<0.000000e+00> : vector<8x784xf32>
    %23 = tpu.matmul %21, %22, %cst_20 {dimension_numbers = #tpu.dot_dimension_numbers<[1], [0], [0], [1], [0, 0, 1, 1], [], []>} : vector<8x392xf32>, vector<392x784xf32>, vector<8x784xf32> -> vector<8x784xf32>
    %c0_21 = arith.constant 0 : index
    %c0_22 = arith.constant 0 : index
    %24 = vector.load %arg9[%c0_21, %c0_22] : memref<1x784xf32, #tpu.memory_space<vmem>>, vector<1x784xf32>
    %25 = vector.broadcast %24 : vector<1x784xf32> to vector<8x784xf32>
    %26 = arith.addf %23, %25 : vector<8x784xf32>
    %27 = arith.negf %26 : vector<8x784xf32>
    %28 = math.exp %27 : vector<8x784xf32>
    %cst_23 = arith.constant 1.000000e+00 : f32
    %29 = vector.broadcast %cst_23 : f32 to vector<8x784xf32>
    %30 = arith.addf %29, %28 : vector<8x784xf32>
    %31 = arith.divf %29, %30 : vector<8x784xf32>
    %c0_24 = arith.constant 0 : index
    %c0_25 = arith.constant 0 : index
    %32 = vector.load %arg10[%c0_24, %c0_25] : memref<8x784xf32, #tpu.memory_space<vmem>>, vector<8x784xf32>
    tpu.vector_store %arg10[%c0_24, %c0_25], %31 {strides = array<i32>} : memref<8x784xf32, #tpu.memory_space<vmem>>, vector<8x784xf32>,
    %c0_26 = arith.constant 0 : index
    %c0_27 = arith.constant 0 : index
    %33 = vector.load %arg11[%c0_26, %c0_27] : memref<8x10xf32, #tpu.memory_space<vmem>>, vector<8x10xf32>
    tpu.vector_store %arg11[%c0_26, %c0_27], %14 {strides = array<i32>} : memref<8x10xf32, #tpu.memory_space<vmem>>, vector<8x10xf32>,
    return
  }
  func.func @transform_0(%arg0: i32) -> (i32, i32) {
    %c0_i32 = arith.constant 0 : i32
    %c0_i32_0 = arith.constant 0 : i32
    return %arg0, %c0_i32 : i32, i32
  }
  func.func @transform_1(%arg0: i32) -> (i32, i32) {
    %c0_i32 = arith.constant 0 : i32
    %c0_i32_0 = arith.constant 0 : i32
    %c0_i32_1 = arith.constant 0 : i32
    return %c0_i32, %c0_i32_0 : i32, i32
  }
  func.func @transform_2(%arg0: i32) -> (i32, i32) {
    %c0_i32 = arith.constant 0 : i32
    %c0_i32_0 = arith.constant 0 : i32
    %c0_i32_1 = arith.constant 0 : i32
    return %c0_i32, %c0_i32_0 : i32, i32
  }
  func.func @transform_3(%arg0: i32) -> (i32, i32) {
    %c0_i32 = arith.constant 0 : i32
    %c0_i32_0 = arith.constant 0 : i32
    %c0_i32_1 = arith.constant 0 : i32
    return %c0_i32, %c0_i32_0 : i32, i32
  }
  func.func @transform_4(%arg0: i32) -> (i32, i32) {
    %c0_i32 = arith.constant 0 : i32
    %c0_i32_0 = arith.constant 0 : i32
    %c0_i32_1 = arith.constant 0 : i32
    return %c0_i32, %c0_i32_0 : i32, i32
  }
  func.func @transform_5(%arg0: i32) -> (i32, i32) {
    %c0_i32 = arith.constant 0 : i32
    %c0_i32_0 = arith.constant 0 : i32
    %c0_i32_1 = arith.constant 0 : i32
    return %c0_i32, %c0_i32_0 : i32, i32
  }
  func.func @transform_6(%arg0: i32) -> (i32, i32) {
    %c0_i32 = arith.constant 0 : i32
    %c0_i32_0 = arith.constant 0 : i32
    %c0_i32_1 = arith.constant 0 : i32
    return %c0_i32, %c0_i32_0 : i32, i32
  }
  func.func @transform_7(%arg0: i32) -> (i32, i32) {
    %c0_i32 = arith.constant 0 : i32
    %c0_i32_0 = arith.constant 0 : i32
    %c0_i32_1 = arith.constant 0 : i32
    return %c0_i32, %c0_i32_0 : i32, i32
  }
  func.func @transform_8(%arg0: i32) -> (i32, i32) {
    %c0_i32 = arith.constant 0 : i32
    %c0_i32_0 = arith.constant 0 : i32
    %c0_i32_1 = arith.constant 0 : i32
    return %c0_i32, %c0_i32_0 : i32, i32
  }
  func.func @transform_9(%arg0: i32) -> (i32, i32) {
    %c0_i32 = arith.constant 0 : i32
    %c0_i32_0 = arith.constant 0 : i32
    return %arg0, %c0_i32 : i32, i32
  }
  func.func @transform_10(%arg0: i32) -> (i32, i32) {
    %c0_i32 = arith.constant 0 : i32
    %c0_i32_0 = arith.constant 0 : i32
    return %arg0, %c0_i32 : i32, i32
  }
}

</mosaic_0001>

<llo_original>
// kernel: tpu_custom_call.1
$region0: #{tpu_custom_call.1}
  #allocation0 [shape = 'u32[]', space=smem, size = 0x4, offset = 0x4, fixed_abs, tag = 'smem constant byte address 0x4 - core index']
  #allocation1 [shape = 'u32[72,128]{1,0:T(1,128)}', space=vmem, size = 0x9000, scoped, tag = 'internal scratch']
  %s0 = inlined_call_operand.vmem [shape: f32[8,784], index: 0, kind: input, shape index: {}]
  %s1 = inlined_call_operand.vmem [shape: f32[784,392], index: 1, kind: input, shape index: {}]
  %s2 = inlined_call_operand.vmem [shape: f32[1,392], index: 2, kind: input, shape index: {}]
  %s3 = inlined_call_operand.vmem [shape: f32[392,10], index: 3, kind: input, shape index: {}]
  %s4 = inlined_call_operand.vmem [shape: f32[1,10], index: 4, kind: input, shape index: {}]
  %s5 = inlined_call_operand.vmem [shape: f32[10,392], index: 5, kind: input, shape index: {}]
  %s6 = inlined_call_operand.vmem [shape: f32[1,392], index: 6, kind: input, shape index: {}]
  %s7 = inlined_call_operand.vmem [shape: f32[392,784], index: 7, kind: input, shape index: {}]
  %s8 = inlined_call_operand.vmem [shape: f32[1,784], index: 8, kind: input, shape index: {}]
  %s9 = inlined_call_operand.hbm [shape: f32[8,784], index: 9, kind: output, shape index: {0}]
  %s10 = inlined_call_operand.hbm [shape: f32[8,10], index: 10, kind: output, shape index: {1}]
  %11 = xla_tuple %s9, %s10
  %s12 = sld [smem:[#allocation0]]
  $region54: #{tpu_custom_call.1} parent=0
    _
  %s14 = ssub.s32 1, %s12
  %s15 = scalar_select 0, %s14, %s12
  $region1: #{tpu_custom_call.1} parent=0
    #allocation2 [shape = 'u8[28672]{0}', space=vmem, size = 0x7000, scoped, tag = 'output window, operand 0, single buffered']
    #allocation3 [shape = 's32[1]{0}', space=sflag, size = 0x4, scoped, tag = 'scoped memory for tpu_custom_call.1']
    #allocation4 [shape = 'u8[4096]{0}', space=vmem, size = 0x1000, scoped, tag = 'output window, operand 1, single buffered']
    #allocation5 [shape = 's32[1]{0}', space=sflag, size = 0x4, scoped, tag = 'scoped memory for tpu_custom_call.1']
    %16 = vsyncpa [#allocation3], 0
    %17 = vsyncpa [#allocation5], 0
    // Predicated region
    $region2: #{tpu_custom_call.1} parent=1 // pred_check
      _
    $region3: #{tpu_custom_call.1} parent=1 // pred_check_branch
      %19 = sbr.rel (0) target = $region5
    $region4: #{tpu_custom_call.1} parent=1 // pred_region
      _
    $region5: #{tpu_custom_call.1} parent=1 // pred_fallthru
      _
    // Predicated region
    $region6: #{tpu_custom_call.1} parent=1 // pred_check
      _
    $region7: #{tpu_custom_call.1} parent=1 // pred_check_branch
      %21 = sbr.rel (0) target = $region9
    $region8: #{tpu_custom_call.1} parent=1 // pred_region
      _
    $region9: #{tpu_custom_call.1} parent=1 // pred_fallthru
      _
    // Predicated region
    $region10: #{tpu_custom_call.1} parent=1 // pred_check
      _
    $region11: #{tpu_custom_call.1} parent=1 // pred_check_branch
      %23 = sbr.rel (0) target = $region13
    $region12: #{tpu_custom_call.1} parent=1 // pred_region
      _
    $region13: #{tpu_custom_call.1} parent=1 // pred_fallthru
      _
    // Predicated region
    $region14: #{tpu_custom_call.1} parent=1 // pred_check
      _
    $region15: #{tpu_custom_call.1} parent=1 // pred_check_branch
      %25 = sbr.rel (0) target = $region17
    $region16: #{tpu_custom_call.1} parent=1 // pred_region
      _
    $region17: #{tpu_custom_call.1} parent=1 // pred_fallthru
      _
    // Predicated region
    $region18: #{tpu_custom_call.1} parent=1 // pred_check
      _
    $region19: #{tpu_custom_call.1} parent=1 // pred_check_branch
      %27 = sbr.rel (0) target = $region21
    $region20: #{tpu_custom_call.1} parent=1 // pred_region
      _
    $region21: #{tpu_custom_call.1} parent=1 // pred_fallthru
      _
    // Predicated region
    $region22: #{tpu_custom_call.1} parent=1 // pred_check
      _
    $region23: #{tpu_custom_call.1} parent=1 // pred_check_branch
      %29 = sbr.rel (0) target = $region25
    $region24: #{tpu_custom_call.1} parent=1 // pred_region
      _
    $region25: #{tpu_custom_call.1} parent=1 // pred_fallthru
      _
    // Predicated region
    $region26: #{tpu_custom_call.1} parent=1 // pred_check
      _
    $region27: #{tpu_custom_call.1} parent=1 // pred_check_branch
      %31 = sbr.rel (0) target = $region29
    $region28: #{tpu_custom_call.1} parent=1 // pred_region
      _
    $region29: #{tpu_custom_call.1} parent=1 // pred_fallthru
      _
    // Predicated region
    $region30: #{tpu_custom_call.1} parent=1 // pred_check
      _
    $region31: #{tpu_custom_call.1} parent=1 // pred_check_branch
      %33 = sbr.rel (0) target = $region33
    $region32: #{tpu_custom_call.1} parent=1 // pred_region
      _
    $region33: #{tpu_custom_call.1} parent=1 // pred_fallthru
      _
    // Predicated region
    $region34: #{tpu_custom_call.1} parent=1 // pred_check
      _
    $region35: #{tpu_custom_call.1} parent=1 // pred_check_branch
      %35 = sbr.rel (0) target = $region37
    $region36: #{tpu_custom_call.1} parent=1 // pred_region
      _
    $region37: #{tpu_custom_call.1} parent=1 // pred_fallthru
      _
    %v36 = vld [vmem:[%s0] sm:$0xff]
    %v37 = vld [vmem:[%s0 + $0x8] sm:$0xff]
    %v38 = vld [vmem:[%s0 + $0x10] sm:$0xff]
    %v39 = vld [vmem:[%s0 + $0x18] sm:$0xff]
    %v40 = vld [vmem:[%s0 + $0x20] sm:$0xff]
    %v41 = vld [vmem:[%s0 + $0x28] sm:$0xff]
    %v42 = vld [vmem:[%s0 + $0x30] sm:$0xff]
    %v43 = vld [vmem:[%s1] sm:$0xff]
    %v44 = vld [vmem:[%s1 + $0x8] sm:$0xff]
    %v45 = vld [vmem:[%s1 + $0x10] sm:$0xff]
    %v46 = vld [vmem:[%s1 + $0x18] sm:$0xff]
    %v47 = vld [vmem:[%s1 + $0x20] sm:$0xff]
    %v48 = vld [vmem:[%s1 + $0x28] sm:$0xff]
    %v49 = vld [vmem:[%s1 + $0x30] sm:$0xff]
    %v50 = vld [vmem:[%s1 + $0x38] sm:$0xff]
    %v51 = vld [vmem:[%s1 + $0x40] sm:$0xff]
    %v52 = vld [vmem:[%s1 + $0x48] sm:$0xff]
    %v53 = vld [vmem:[%s1 + $0x50] sm:$0xff]
    %v54 = vld [vmem:[%s1 + $0x58] sm:$0xff]
    %v55 = vld [vmem:[%s1 + $0x60] sm:$0xff]
    %v56 = vld [vmem:[%s1 + $0x68] sm:$0xff]
    %v57 = vld [vmem:[%s1 + $0x70] sm:$0xff]
    %v58 = vld [vmem:[%s1 + $0x78] sm:$0xff]
    %v59 = vld [vmem:[%s1 + $0x80] sm:$0xff]
    %v60 = vld [vmem:[%s1 + $0x88] sm:$0xff]
    %v61 = vld [vmem:[%s1 + $0x90] sm:$0xff]
    %v62 = vld [vmem:[%s1 + $0x98] sm:$0xff]
    %v63 = vld [vmem:[%s1 + $0xa0] sm:$0xff]
    %v64 = vld [vmem:[%s1 + $0xa8] sm:$0xff]
    %v65 = vld [vmem:[%s1 + $0xb0] sm:$0xff]
    %v66 = vld [vmem:[%s1 + $0xb8] sm:$0xff]
    %v67 = vld [vmem:[%s1 + $0xc0] sm:$0xff]
    %v68 = vld [vmem:[%s1 + $0xc8] sm:$0xff]
    %v69 = vld [vmem:[%s1 + $0xd0] sm:$0xff]
    %v70 = vld [vmem:[%s1 + $0xd8] sm:$0xff]
    %v71 = vld [vmem:[%s1 + $0xe0] sm:$0xff]
    %v72 = vld [vmem:[%s1 + $0xe8] sm:$0xff]
    %v73 = vld [vmem:[%s1 + $0xf0] sm:$0xff]
    %v74 = vld [vmem:[%s1 + $0xf8] sm:$0xff]
    %v75 = vld [vmem:[%s1 + $0x100] sm:$0xff]
    %v76 = vld [vmem:[%s1 + $0x108] sm:$0xff]
    %v77 = vld [vmem:[%s1 + $0x110] sm:$0xff]
    %v78 = vld [vmem:[%s1 + $0x118] sm:$0xff]
    %v79 = vld [vmem:[%s1 + $0x120] sm:$0xff]
    %v80 = vld [vmem:[%s1 + $0x128] sm:$0xff]
    %v81 = vld [vmem:[%s1 + $0x130] sm:$0xff]
    %v82 = vld [vmem:[%s1 + $0x138] sm:$0xff]
    %v83 = vld [vmem:[%s1 + $0x140] sm:$0xff]
    %v84 = vld [vmem:[%s1 + $0x148] sm:$0xff]
    %v85 = vld [vmem:[%s1 + $0x150] sm:$0xff]
    %v86 = vld [vmem:[%s1 + $0x158] sm:$0xff]
    %v87 = vld [vmem:[%s1 + $0x160] sm:$0xff]
    %v88 = vld [vmem:[%s1 + $0x168] sm:$0xff]
    %v89 = vld [vmem:[%s1 + $0x170] sm:$0xff]
    %v90 = vld [vmem:[%s1 + $0x178] sm:$0xff]
    %v91 = vld [vmem:[%s1 + $0x180] sm:$0xff]
    %v92 = vld [vmem:[%s1 + $0x188] sm:$0xff]
    %v93 = vld [vmem:[%s1 + $0x190] sm:$0xff]
    %v94 = vld [vmem:[%s1 + $0x198] sm:$0xff]
    %v95 = vld [vmem:[%s1 + $0x1a0] sm:$0xff]
    %v96 = vld [vmem:[%s1 + $0x1a8] sm:$0xff]
    %v97 = vld [vmem:[%s1 + $0x1b0] sm:$0xff]
    %v98 = vld [vmem:[%s1 + $0x1b8] sm:$0xff]
    %v99 = vld [vmem:[%s1 + $0x1c0] sm:$0xff]
    %v100 = vld [vmem:[%s1 + $0x1c8] sm:$0xff]
    %v101 = vld [vmem:[%s1 + $0x1d0] sm:$0xff]
    %v102 = vld [vmem:[%s1 + $0x1d8] sm:$0xff]
    %v103 = vld [vmem:[%s1 + $0x1e0] sm:$0xff]
    %v104 = vld [vmem:[%s1 + $0x1e8] sm:$0xff]
    %v105 = vld [vmem:[%s1 + $0x1f0] sm:$0xff]
    %v106 = vld [vmem:[%s1 + $0x1f8] sm:$0xff]
    %v107 = vld [vmem:[%s1 + $0x200] sm:$0xff]
    %v108 = vld [vmem:[%s1 + $0x208] sm:$0xff]
    %v109 = vld [vmem:[%s1 + $0x210] sm:$0xff]
    %v110 = vld [vmem:[%s1 + $0x218] sm:$0xff]
    %v111 = vld [vmem:[%s1 + $0x220] sm:$0xff]
    %v112 = vld [vmem:[%s1 + $0x228] sm:$0xff]
    %v113 = vld [vmem:[%s1 + $0x230] sm:$0xff]
    %v114 = vld [vmem:[%s1 + $0x238] sm:$0xff]
    %v115 = vld [vmem:[%s1 + $0x240] sm:$0xff]
    %v116 = vld [vmem:[%s1 + $0x248] sm:$0xff]
    %v117 = vld [vmem:[%s1 + $0x250] sm:$0xff]
    %v118 = vld [vmem:[%s1 + $0x258] sm:$0xff]
    %v119 = vld [vmem:[%s1 + $0x260] sm:$0xff]
    %v120 = vld [vmem:[%s1 + $0x268] sm:$0xff]
    %v121 = vld [vmem:[%s1 + $0x270] sm:$0xff]
    %v122 = vld [vmem:[%s1 + $0x278] sm:$0xff]
    %v123 = vld [vmem:[%s1 + $0x280] sm:$0xff]
    %v124 = vld [vmem:[%s1 + $0x288] sm:$0xff]
    %v125 = vld [vmem:[%s1 + $0x290] sm:$0xff]
    %v126 = vld [vmem:[%s1 + $0x298] sm:$0xff]
    %v127 = vld [vmem:[%s1 + $0x2a0] sm:$0xff]
    %v128 = vld [vmem:[%s1 + $0x2a8] sm:$0xff]
    %v129 = vld [vmem:[%s1 + $0x2b0] sm:$0xff]
    %v130 = vld [vmem:[%s1 + $0x2b8] sm:$0xff]
    %v131 = vld [vmem:[%s1 + $0x2c0] sm:$0xff]
    %v132 = vld [vmem:[%s1 + $0x2c8] sm:$0xff]
    %v133 = vld [vmem:[%s1 + $0x2d0] sm:$0xff]
    %v134 = vld [vmem:[%s1 + $0x2d8] sm:$0xff]
    %v135 = vld [vmem:[%s1 + $0x2e0] sm:$0xff]
    %v136 = vld [vmem:[%s1 + $0x2e8] sm:$0xff]
    %v137 = vld [vmem:[%s1 + $0x2f0] sm:$0xff]
    %v138 = vld [vmem:[%s1 + $0x2f8] sm:$0xff]
    %v139 = vld [vmem:[%s1 + $0x300] sm:$0xff]
    %v140 = vld [vmem:[%s1 + $0x308] sm:$0xff]
    %v141 = vld [vmem:[%s1 + $0x310] sm:$0xff]
    %v142 = vld [vmem:[%s1 + $0x318] sm:$0xff]
    %v143 = vld [vmem:[%s1 + $0x320] sm:$0xff]
    %v144 = vld [vmem:[%s1 + $0x328] sm:$0xff]
    %v145 = vld [vmem:[%s1 + $0x330] sm:$0xff]
    %v146 = vld [vmem:[%s1 + $0x338] sm:$0xff]
    %v147 = vld [vmem:[%s1 + $0x340] sm:$0xff]
    %v148 = vld [vmem:[%s1 + $0x348] sm:$0xff]
    %v149 = vld [vmem:[%s1 + $0x350] sm:$0xff]
    %v150 = vld [vmem:[%s1 + $0x358] sm:$0xff]
    %v151 = vld [vmem:[%s1 + $0x360] sm:$0xff]
    %v152 = vld [vmem:[%s1 + $0x368] sm:$0xff]
    %v153 = vld [vmem:[%s1 + $0x370] sm:$0xff]
    %v154 = vld [vmem:[%s1 + $0x378] sm:$0xff]
    %v155 = vld [vmem:[%s1 + $0x380] sm:$0xff]
    %v156 = vld [vmem:[%s1 + $0x388] sm:$0xff]
    %v157 = vld [vmem:[%s1 + $0x390] sm:$0xff]
    %v158 = vld [vmem:[%s1 + $0x398] sm:$0xff]
    %v159 = vld [vmem:[%s1 + $0x3a0] sm:$0xff]
    %v160 = vld [vmem:[%s1 + $0x3a8] sm:$0xff]
    %v161 = vld [vmem:[%s1 + $0x3b0] sm:$0xff]
    %v162 = vld [vmem:[%s1 + $0x3b8] sm:$0xff]
    %v163 = vld [vmem:[%s1 + $0x3c0] sm:$0xff]
    %v164 = vld [vmem:[%s1 + $0x3c8] sm:$0xff]
    %v165 = vld [vmem:[%s1 + $0x3d0] sm:$0xff]
    %v166 = vld [vmem:[%s1 + $0x3d8] sm:$0xff]
    %v167 = vld [vmem:[%s1 + $0x3e0] sm:$0xff]
    %v168 = vld [vmem:[%s1 + $0x3e8] sm:$0xff]
    %v169 = vld [vmem:[%s1 + $0x3f0] sm:$0xff]
    %v170 = vld [vmem:[%s1 + $0x3f8] sm:$0xff]
    %v171 = vld [vmem:[%s1 + $0x400] sm:$0xff]
    %v172 = vld [vmem:[%s1 + $0x408] sm:$0xff]
    %v173 = vld [vmem:[%s1 + $0x410] sm:$0xff]
    %v174 = vld [vmem:[%s1 + $0x418] sm:$0xff]
    %v175 = vld [vmem:[%s1 + $0x420] sm:$0xff]
    %v176 = vld [vmem:[%s1 + $0x428] sm:$0xff]
    %v177 = vld [vmem:[%s1 + $0x430] sm:$0xff]
    %v178 = vld [vmem:[%s1 + $0x438] sm:$0xff]
    %v179 = vld [vmem:[%s1 + $0x440] sm:$0xff]
    %v180 = vld [vmem:[%s1 + $0x448] sm:$0xff]
    %v181 = vld [vmem:[%s1 + $0x450] sm:$0xff]
    %v182 = vld [vmem:[%s1 + $0x458] sm:$0xff]
    %v183 = vld [vmem:[%s1 + $0x460] sm:$0xff]
    %v184 = vld [vmem:[%s1 + $0x468] sm:$0xff]
    %v185 = vld [vmem:[%s1 + $0x470] sm:$0xff]
    %v186 = vld [vmem:[%s1 + $0x478] sm:$0xff]
    %v187 = vld [vmem:[%s1 + $0x480] sm:$0xff]
    %v188 = vld [vmem:[%s1 + $0x488] sm:$0xff]
    %v189 = vld [vmem:[%s1 + $0x490] sm:$0xff]
    %v190 = vld [vmem:[%s1 + $0x498] sm:$0xff]
    %v191 = vld [vmem:[%s1 + $0x4a0] sm:$0xff]
    %v192 = vld [vmem:[%s1 + $0x4a8] sm:$0xff]
    %v193 = vld [vmem:[%s1 + $0x4b0] sm:$0xff]
    %v194 = vld [vmem:[%s1 + $0x4b8] sm:$0xff]
    %v195 = vld [vmem:[%s1 + $0x4c0] sm:$0xff]
    %v196 = vld [vmem:[%s1 + $0x4c8] sm:$0xff]
    %v197 = vld [vmem:[%s1 + $0x4d0] sm:$0xff]
    %v198 = vld [vmem:[%s1 + $0x4d8] sm:$0xff]
    %v199 = vld [vmem:[%s1 + $0x4e0] sm:$0xff]
    %v200 = vld [vmem:[%s1 + $0x4e8] sm:$0xff]
    %v201 = vld [vmem:[%s1 + $0x4f0] sm:$0xff]
    %v202 = vld [vmem:[%s1 + $0x4f8] sm:$0xff]
    %v203 = vld [vmem:[%s1 + $0x500] sm:$0xff]
    %v204 = vld [vmem:[%s1 + $0x508] sm:$0xff]
    %v205 = vld [vmem:[%s1 + $0x510] sm:$0xff]
    %v206 = vld [vmem:[%s1 + $0x518] sm:$0xff]
    %v207 = vld [vmem:[%s1 + $0x520] sm:$0xff]
    %v208 = vld [vmem:[%s1 + $0x528] sm:$0xff]
    %v209 = vld [vmem:[%s1 + $0x530] sm:$0xff]
    %v210 = vld [vmem:[%s1 + $0x538] sm:$0xff]
    %v211 = vld [vmem:[%s1 + $0x540] sm:$0xff]
    %v212 = vld [vmem:[%s1 + $0x548] sm:$0xff]
    %v213 = vld [vmem:[%s1 + $0x550] sm:$0xff]
    %v214 = vld [vmem:[%s1 + $0x558] sm:$0xff]
    %v215 = vld [vmem:[%s1 + $0x560] sm:$0xff]
    %v216 = vld [vmem:[%s1 + $0x568] sm:$0xff]
    %v217 = vld [vmem:[%s1 + $0x570] sm:$0xff]
    %v218 = vld [vmem:[%s1 + $0x578] sm:$0xff]
    %v219 = vld [vmem:[%s1 + $0x580] sm:$0xff]
    %v220 = vld [vmem:[%s1 + $0x588] sm:$0xff]
    %v221 = vld [vmem:[%s1 + $0x590] sm:$0xff]
    %v222 = vld [vmem:[%s1 + $0x598] sm:$0xff]
    %v223 = vld [vmem:[%s1 + $0x5a0] sm:$0xff]
    %v224 = vld [vmem:[%s1 + $0x5a8] sm:$0xff]
    %v225 = vld [vmem:[%s1 + $0x5b0] sm:$0xff]
    %v226 = vld [vmem:[%s1 + $0x5b8] sm:$0xff]
    %v227 = vld [vmem:[%s1 + $0x5c0] sm:$0xff]
    %v228 = vld [vmem:[%s1 + $0x5c8] sm:$0xff]
    %v229 = vld [vmem:[%s1 + $0x5d0] sm:$0xff]
    %v230 = vld [vmem:[%s1 + $0x5d8] sm:$0xff]
    %v231 = vld [vmem:[%s1 + $0x5e0] sm:$0xff]
    %v232 = vld [vmem:[%s1 + $0x5e8] sm:$0xff]
    %v233 = vld [vmem:[%s1 + $0x5f0] sm:$0xff]
    %v234 = vld [vmem:[%s1 + $0x5f8] sm:$0xff]
    %v235 = vld [vmem:[%s1 + $0x600] sm:$0xff]
    %v236 = vld [vmem:[%s1 + $0x608] sm:$0xff]
    %v237 = vld [vmem:[%s1 + $0x610] sm:$0xff]
    %v238 = vld [vmem:[%s1 + $0x618] sm:$0xff]
    %v239 = vld [vmem:[%s1 + $0x620] sm:$0xff]
    %v240 = vld [vmem:[%s1 + $0x628] sm:$0xff]
    %v241 = vld [vmem:[%s1 + $0x630] sm:$0xff]
    %v242 = vld [vmem:[%s1 + $0x638] sm:$0xff]
    %v243 = vld [vmem:[%s1 + $0x640] sm:$0xff]
    %v244 = vld [vmem:[%s1 + $0x648] sm:$0xff]
    %v245 = vld [vmem:[%s1 + $0x650] sm:$0xff]
    %v246 = vld [vmem:[%s1 + $0x658] sm:$0xff]
    %v247 = vld [vmem:[%s1 + $0x660] sm:$0xff]
    %v248 = vld [vmem:[%s1 + $0x668] sm:$0xff]
    %v249 = vld [vmem:[%s1 + $0x670] sm:$0xff]
    %v250 = vld [vmem:[%s1 + $0x678] sm:$0xff]
    %v251 = vld [vmem:[%s1 + $0x680] sm:$0xff]
    %v252 = vld [vmem:[%s1 + $0x688] sm:$0xff]
    %v253 = vld [vmem:[%s1 + $0x690] sm:$0xff]
    %v254 = vld [vmem:[%s1 + $0x698] sm:$0xff]
    %v255 = vld [vmem:[%s1 + $0x6a0] sm:$0xff]
    %v256 = vld [vmem:[%s1 + $0x6a8] sm:$0xff]
    %v257 = vld [vmem:[%s1 + $0x6b0] sm:$0xff]
    %v258 = vld [vmem:[%s1 + $0x6b8] sm:$0xff]
    %v259 = vld [vmem:[%s1 + $0x6c0] sm:$0xff]
    %v260 = vld [vmem:[%s1 + $0x6c8] sm:$0xff]
    %v261 = vld [vmem:[%s1 + $0x6d0] sm:$0xff]
    %v262 = vld [vmem:[%s1 + $0x6d8] sm:$0xff]
    %v263 = vld [vmem:[%s1 + $0x6e0] sm:$0xff]
    %v264 = vld [vmem:[%s1 + $0x6e8] sm:$0xff]
    %v265 = vld [vmem:[%s1 + $0x6f0] sm:$0xff]
    %v266 = vld [vmem:[%s1 + $0x6f8] sm:$0xff]
    %v267 = vld [vmem:[%s1 + $0x700] sm:$0xff]
    %v268 = vld [vmem:[%s1 + $0x708] sm:$0xff]
    %v269 = vld [vmem:[%s1 + $0x710] sm:$0xff]
    %v270 = vld [vmem:[%s1 + $0x718] sm:$0xff]
    %v271 = vld [vmem:[%s1 + $0x720] sm:$0xff]
    %v272 = vld [vmem:[%s1 + $0x728] sm:$0xff]
    %v273 = vld [vmem:[%s1 + $0x730] sm:$0xff]
    %v274 = vld [vmem:[%s1 + $0x738] sm:$0xff]
    %v275 = vld [vmem:[%s1 + $0x740] sm:$0xff]
    %v276 = vld [vmem:[%s1 + $0x748] sm:$0xff]
    %v277 = vld [vmem:[%s1 + $0x750] sm:$0xff]
    %v278 = vld [vmem:[%s1 + $0x758] sm:$0xff]
    %v279 = vld [vmem:[%s1 + $0x760] sm:$0xff]
    %v280 = vld [vmem:[%s1 + $0x768] sm:$0xff]
    %v281 = vld [vmem:[%s1 + $0x770] sm:$0xff]
    %v282 = vld [vmem:[%s1 + $0x778] sm:$0xff]
    %v283 = vld [vmem:[%s1 + $0x780] sm:$0xff]
    %v284 = vld [vmem:[%s1 + $0x788] sm:$0xff]
    %v285 = vld [vmem:[%s1 + $0x790] sm:$0xff]
    %v286 = vld [vmem:[%s1 + $0x798] sm:$0xff]
    %v287 = vld [vmem:[%s1 + $0x7a0] sm:$0xff]
    %v288 = vld [vmem:[%s1 + $0x7a8] sm:$0xff]
    %v289 = vld [vmem:[%s1 + $0x7b0] sm:$0xff]
    %v290 = vld [vmem:[%s1 + $0x7b8] sm:$0xff]
    %v291 = vld [vmem:[%s1 + $0x7c0] sm:$0xff]
    %v292 = vld [vmem:[%s1 + $0x7c8] sm:$0xff]
    %v293 = vld [vmem:[%s1 + $0x7d0] sm:$0xff]
    %v294 = vld [vmem:[%s1 + $0x7d8] sm:$0xff]
    %v295 = vld [vmem:[%s1 + $0x7e0] sm:$0xff]
    %v296 = vld [vmem:[%s1 + $0x7e8] sm:$0xff]
    %v297 = vld [vmem:[%s1 + $0x7f0] sm:$0xff]
    %v298 = vld [vmem:[%s1 + $0x7f8] sm:$0xff]
    %v299 = vld [vmem:[%s1 + $0x800] sm:$0xff]
    %v300 = vld [vmem:[%s1 + $0x808] sm:$0xff]
    %v301 = vld [vmem:[%s1 + $0x810] sm:$0xff]
    %v302 = vld [vmem:[%s1 + $0x818] sm:$0xff]
    %v303 = vld [vmem:[%s1 + $0x820] sm:$0xff]
    %v304 = vld [vmem:[%s1 + $0x828] sm:$0xff]
    %v305 = vld [vmem:[%s1 + $0x830] sm:$0xff]
    %v306 = vld [vmem:[%s1 + $0x838] sm:$0xff]
    %v307 = vld [vmem:[%s1 + $0x840] sm:$0xff]
    %v308 = vld [vmem:[%s1 + $0x848] sm:$0xff]
    %v309 = vld [vmem:[%s1 + $0x850] sm:$0xff]
    %v310 = vld [vmem:[%s1 + $0x858] sm:$0xff]
    %v311 = vld [vmem:[%s1 + $0x860] sm:$0xff]
    %v312 = vld [vmem:[%s1 + $0x868] sm:$0xff]
    %v313 = vld [vmem:[%s1 + $0x870] sm:$0xff]
    %v314 = vld [vmem:[%s1 + $0x878] sm:$0xff]
    %v315 = vld [vmem:[%s1 + $0x880] sm:$0xff]
    %v316 = vld [vmem:[%s1 + $0x888] sm:$0xff]
    %v317 = vld [vmem:[%s1 + $0x890] sm:$0xff]
    %v318 = vld [vmem:[%s1 + $0x898] sm:$0xff]
    %v319 = vld [vmem:[%s1 + $0x8a0] sm:$0xff]
    %v320 = vld [vmem:[%s1 + $0x8a8] sm:$0xff]
    %v321 = vld [vmem:[%s1 + $0x8b0] sm:$0xff]
    %v322 = vld [vmem:[%s1 + $0x8b8] sm:$0xff]
    %v323 = vld [vmem:[%s1 + $0x8c0] sm:$0xff]
    %v324 = vld [vmem:[%s1 + $0x8c8] sm:$0xff]
    %v325 = vld [vmem:[%s1 + $0x8d0] sm:$0xff]
    %v326 = vld [vmem:[%s1 + $0x8d8] sm:$0xff]
    %v327 = vld [vmem:[%s1 + $0x8e0] sm:$0xff]
    %v328 = vld [vmem:[%s1 + $0x8e8] sm:$0xff]
    %v329 = vld [vmem:[%s1 + $0x8f0] sm:$0xff]
    %v330 = vld [vmem:[%s1 + $0x8f8] sm:$0xff]
    %v331 = vld [vmem:[%s1 + $0x900] sm:$0xff]
    %v332 = vld [vmem:[%s1 + $0x908] sm:$0xff]
    %v333 = vld [vmem:[%s1 + $0x910] sm:$0xff]
    %v334 = vld [vmem:[%s1 + $0x918] sm:$0xff]
    %v335 = vld [vmem:[%s1 + $0x920] sm:$0xff]
    %v336 = vld [vmem:[%s1 + $0x928] sm:$0xff]
    %v337 = vld [vmem:[%s1 + $0x930] sm:$0xff]
    %v338 = vld [vmem:[%s1 + $0x938] sm:$0xff]
    %v339 = vld [vmem:[%s1 + $0x940] sm:$0xff]
    %v340 = vld [vmem:[%s1 + $0x948] sm:$0xff]
    %v341 = vld [vmem:[%s1 + $0x950] sm:$0xff]
    %v342 = vld [vmem:[%s1 + $0x958] sm:$0xff]
    %v343 = vld [vmem:[%s1 + $0x960] sm:$0xff]
    %v344 = vld [vmem:[%s1 + $0x968] sm:$0xff]
    %v345 = vld [vmem:[%s1 + $0x970] sm:$0xff]
    %v346 = vld [vmem:[%s1 + $0x978] sm:$0xff]
    %v347 = vld [vmem:[%s1 + $0x980] sm:$0xff]
    %v348 = vld [vmem:[%s1 + $0x988] sm:$0xff]
    %v349 = vld [vmem:[%s1 + $0x990] sm:$0xff]
    %v350 = vld [vmem:[%s1 + $0x998] sm:$0xff]
    %v351 = vld [vmem:[%s1 + $0x9a0] sm:$0xff]
    %v352 = vld [vmem:[%s1 + $0x9a8] sm:$0xff]
    %v353 = vld [vmem:[%s1 + $0x9b0] sm:$0xff]
    %v354 = vld [vmem:[%s1 + $0x9b8] sm:$0xff]
    %v355 = vld [vmem:[%s1 + $0x9c0] sm:$0xff]
    %v356 = vld [vmem:[%s1 + $0x9c8] sm:$0xff]
    %v357 = vld [vmem:[%s1 + $0x9d0] sm:$0xff]
    %v358 = vld [vmem:[%s1 + $0x9d8] sm:$0xff]
    %v359 = vld [vmem:[%s1 + $0x9e0] sm:$0xff]
    %v360 = vld [vmem:[%s1 + $0x9e8] sm:$0xff]
    %v361 = vld [vmem:[%s1 + $0x9f0] sm:$0xff]
    %v362 = vld [vmem:[%s1 + $0x9f8] sm:$0xff]
    %v363 = vld [vmem:[%s1 + $0xa00] sm:$0xff]
    %v364 = vld [vmem:[%s1 + $0xa08] sm:$0xff]
    %v365 = vld [vmem:[%s1 + $0xa10] sm:$0xff]
    %v366 = vld [vmem:[%s1 + $0xa18] sm:$0xff]
    %v367 = vld [vmem:[%s1 + $0xa20] sm:$0xff]
    %v368 = vld [vmem:[%s1 + $0xa28] sm:$0xff]
    %v369 = vld [vmem:[%s1 + $0xa30] sm:$0xff]
    %v370 = vld [vmem:[%s1 + $0xa38] sm:$0xff]
    %v371 = vld [vmem:[%s1 + $0xa40] sm:$0xff]
    %v372 = vld [vmem:[%s1 + $0xa48] sm:$0xff]
    %v373 = vld [vmem:[%s1 + $0xa50] sm:$0xff]
    %v374 = vld [vmem:[%s1 + $0xa58] sm:$0xff]
    %v375 = vld [vmem:[%s1 + $0xa60] sm:$0xff]
    %v376 = vld [vmem:[%s1 + $0xa68] sm:$0xff]
    %v377 = vld [vmem:[%s1 + $0xa70] sm:$0xff]
    %v378 = vld [vmem:[%s1 + $0xa78] sm:$0xff]
    %v379 = vld [vmem:[%s1 + $0xa80] sm:$0xff]
    %v380 = vld [vmem:[%s1 + $0xa88] sm:$0xff]
    %v381 = vld [vmem:[%s1 + $0xa90] sm:$0xff]
    %v382 = vld [vmem:[%s1 + $0xa98] sm:$0xff]
    %v383 = vld [vmem:[%s1 + $0xaa0] sm:$0xff]
    %v384 = vld [vmem:[%s1 + $0xaa8] sm:$0xff]
    %v385 = vld [vmem:[%s1 + $0xab0] sm:$0xff]
    %v386 = vld [vmem:[%s1 + $0xab8] sm:$0xff]
    %v387 = vld [vmem:[%s1 + $0xac0] sm:$0xff]
    %v388 = vld [vmem:[%s1 + $0xac8] sm:$0xff]
    %v389 = vld [vmem:[%s1 + $0xad0] sm:$0xff]
    %v390 = vld [vmem:[%s1 + $0xad8] sm:$0xff]
    %v391 = vld [vmem:[%s1 + $0xae0] sm:$0xff]
    %v392 = vld [vmem:[%s1 + $0xae8] sm:$0xff]
    %v393 = vld [vmem:[%s1 + $0xaf0] sm:$0xff]
    %v394 = vld [vmem:[%s1 + $0xaf8] sm:$0xff]
    %v395 = vld [vmem:[%s1 + $0xb00] sm:$0xff]
    %v396 = vld [vmem:[%s1 + $0xb08] sm:$0xff]
    %v397 = vld [vmem:[%s1 + $0xb10] sm:$0xff]
    %v398 = vld [vmem:[%s1 + $0xb18] sm:$0xff]
    %v399 = vld [vmem:[%s1 + $0xb20] sm:$0xff]
    %v400 = vld [vmem:[%s1 + $0xb28] sm:$0xff]
    %v401 = vld [vmem:[%s1 + $0xb30] sm:$0xff]
    %v402 = vld [vmem:[%s1 + $0xb38] sm:$0xff]
    %v403 = vld [vmem:[%s1 + $0xb40] sm:$0xff]
    %v404 = vld [vmem:[%s1 + $0xb48] sm:$0xff]
    %v405 = vld [vmem:[%s1 + $0xb50] sm:$0xff]
    %v406 = vld [vmem:[%s1 + $0xb58] sm:$0xff]
    %v407 = vld [vmem:[%s1 + $0xb60] sm:$0xff]
    %v408 = vld [vmem:[%s1 + $0xb68] sm:$0xff]
    %v409 = vld [vmem:[%s1 + $0xb70] sm:$0xff]
    %v410 = vld [vmem:[%s1 + $0xb78] sm:$0xff]
    %v411 = vld [vmem:[%s1 + $0xb80] sm:$0xff]
    %v412 = vld [vmem:[%s1 + $0xb88] sm:$0xff]
    %v413 = vld [vmem:[%s1 + $0xb90] sm:$0xff]
    %v414 = vld [vmem:[%s1 + $0xb98] sm:$0xff]
    %v415 = vld [vmem:[%s1 + $0xba0] sm:$0xff]
    %v416 = vld [vmem:[%s1 + $0xba8] sm:$0xff]
    %v417 = vld [vmem:[%s1 + $0xbb0] sm:$0xff]
    %v418 = vld [vmem:[%s1 + $0xbb8] sm:$0xff]
    %v419 = vld [vmem:[%s1 + $0xbc0] sm:$0xff]
    %v420 = vld [vmem:[%s1 + $0xbc8] sm:$0xff]
    %v421 = vld [vmem:[%s1 + $0xbd0] sm:$0xff]
    %v422 = vld [vmem:[%s1 + $0xbd8] sm:$0xff]
    %v423 = vld [vmem:[%s1 + $0xbe0] sm:$0xff]
    %v424 = vld [vmem:[%s1 + $0xbe8] sm:$0xff]
    %v425 = vld [vmem:[%s1 + $0xbf0] sm:$0xff]
    %v426 = vld [vmem:[%s1 + $0xbf8] sm:$0xff]
    %v427 = vld [vmem:[%s1 + $0xc00] sm:$0xff]
    %v428 = vld [vmem:[%s1 + $0xc08] sm:$0xff]
    %v429 = vld [vmem:[%s1 + $0xc10] sm:$0xff]
    %v430 = vld [vmem:[%s1 + $0xc18] sm:$0xff]
    %v431 = vld [vmem:[%s1 + $0xc20] sm:$0xff]
    %v432 = vld [vmem:[%s1 + $0xc28] sm:$0xff]
    %v433 = vld [vmem:[%s1 + $0xc30] sm:$0xff]
    %v434 = vld [vmem:[%s1 + $0xc38] sm:$0xff]
    %v435 = vld [vmem:[%s2] sm:$0xf]
    %v437 = vperm.slane %v435, 0
    %v438 = vperm.slane %v435, 1
    %v439 = vperm.slane %v435, 2
    %v440 = vperm.slane %v435, 3
    %vm445 = vcmask 130048
    %v447 = vsel %vm445, %v42, 0
    %449 = vmatpush.msra.mxu0 %v103
    %450 = vmatpush.msra.mxu0 %v99
    %451 = vmatpush.msra.mxu0 %v95
    %452 = vmatpush.msra.mxu0 %v91
    %453 = vmatpush.msra.mxu0 %v87
    %454 = vmatpush.msra.mxu0 %v83
    %455 = vmatpush.msra.mxu0 %v79
    %456 = vmatpush.msra.mxu0 %v75
    %457 = vmatpush.msra.mxu0 %v71
    %458 = vmatpush.msra.mxu0 %v67
    %459 = vmatpush.msra.mxu0 %v63
    %460 = vmatpush.msra.mxu0 %v59
    %461 = vmatpush.msra.mxu0 %v55
    %462 = vmatpush.msra.mxu0 %v51
    %463 = vmatpush.msra.mxu0 %v47
    %464 = vmatpush.msra.mxu0 %v43
    %465 = vmatmul.f32.gmra.mxu0 %v36
    %v466 = vpop.f32.mrf.mxu0
    %v467 = vadd.f32 %v437, %v466
    %468 = vdwg.mxu0
    %469 = vmatpush.msra.mxu0 %v167
    %470 = vmatpush.msra.mxu0 %v163
    %471 = vmatpush.msra.mxu0 %v159
    %472 = vmatpush.msra.mxu0 %v155
    %473 = vmatpush.msra.mxu0 %v151
    %474 = vmatpush.msra.mxu0 %v147
    %475 = vmatpush.msra.mxu0 %v143
    %476 = vmatpush.msra.mxu0 %v139
    %477 = vmatpush.msra.mxu0 %v135
    %478 = vmatpush.msra.mxu0 %v131
    %479 = vmatpush.msra.mxu0 %v127
    %480 = vmatpush.msra.mxu0 %v123
    %481 = vmatpush.msra.mxu0 %v119
    %482 = vmatpush.msra.mxu0 %v115
    %483 = vmatpush.msra.mxu0 %v111
    %484 = vmatpush.msra.mxu0 %v107
    %485 = vmatmul.f32.gmra.mxu0 %v37
    %v486 = vpop.f32.mrf.mxu0
    %v487 = vadd.f32 %v467, %v486
    %488 = vdwg.mxu0
    %489 = vmatpush.msra.mxu0 %v231
    %490 = vmatpush.msra.mxu0 %v227
    %491 = vmatpush.msra.mxu0 %v223
    %492 = vmatpush.msra.mxu0 %v219
    %493 = vmatpush.msra.mxu0 %v215
    %494 = vmatpush.msra.mxu0 %v211
    %495 = vmatpush.msra.mxu0 %v207
    %496 = vmatpush.msra.mxu0 %v203
    %497 = vmatpush.msra.mxu0 %v199
    %498 = vmatpush.msra.mxu0 %v195
    %499 = vmatpush.msra.mxu0 %v191
    %500 = vmatpush.msra.mxu0 %v187
    %501 = vmatpush.msra.mxu0 %v183
    %502 = vmatpush.msra.mxu0 %v179
    %503 = vmatpush.msra.mxu0 %v175
    %504 = vmatpush.msra.mxu0 %v171
    %505 = vmatmul.f32.gmra.mxu0 %v38
    %v506 = vpop.f32.mrf.mxu0
    %v507 = vadd.f32 %v487, %v506
    %508 = vdwg.mxu0
    %509 = vmatpush.msra.mxu0 %v295
    %510 = vmatpush.msra.mxu0 %v291
    %511 = vmatpush.msra.mxu0 %v287
    %512 = vmatpush.msra.mxu0 %v283
    %513 = vmatpush.msra.mxu0 %v279
    %514 = vmatpush.msra.mxu0 %v275
    %515 = vmatpush.msra.mxu0 %v271
    %516 = vmatpush.msra.mxu0 %v267
    %517 = vmatpush.msra.mxu0 %v263
    %518 = vmatpush.msra.mxu0 %v259
    %519 = vmatpush.msra.mxu0 %v255
    %520 = vmatpush.msra.mxu0 %v251
    %521 = vmatpush.msra.mxu0 %v247
    %522 = vmatpush.msra.mxu0 %v243
    %523 = vmatpush.msra.mxu0 %v239
    %524 = vmatpush.msra.mxu0 %v235
    %525 = vmatmul.f32.gmra.mxu0 %v39
    %v526 = vpop.f32.mrf.mxu0
    %v527 = vadd.f32 %v507, %v526
    %528 = vdwg.mxu0
    %529 = vmatpush.msra.mxu0 %v359
    %530 = vmatpush.msra.mxu0 %v355
    %531 = vmatpush.msra.mxu0 %v351
    %532 = vmatpush.msra.mxu0 %v347
    %533 = vmatpush.msra.mxu0 %v343
    %534 = vmatpush.msra.mxu0 %v339
    %535 = vmatpush.msra.mxu0 %v335
    %536 = vmatpush.msra.mxu0 %v331
    %537 = vmatpush.msra.mxu0 %v327
    %538 = vmatpush.msra.mxu0 %v323
    %539 = vmatpush.msra.mxu0 %v319
    %540 = vmatpush.msra.mxu0 %v315
    %541 = vmatpush.msra.mxu0 %v311
    %542 = vmatpush.msra.mxu0 %v307
    %543 = vmatpush.msra.mxu0 %v303
    %544 = vmatpush.msra.mxu0 %v299
    %545 = vmatmul.f32.gmra.mxu0 %v40
    %v546 = vpop.f32.mrf.mxu0
    %v547 = vadd.f32 %v527, %v546
    %548 = vdwg.mxu0
    %549 = vmatpush.msra.mxu0 %v423
    %550 = vmatpush.msra.mxu0 %v419
    %551 = vmatpush.msra.mxu0 %v415
    %552 = vmatpush.msra.mxu0 %v411
    %553 = vmatpush.msra.mxu0 %v407
    %554 = vmatpush.msra.mxu0 %v403
    %555 = vmatpush.msra.mxu0 %v399
    %556 = vmatpush.msra.mxu0 %v395
    %557 = vmatpush.msra.mxu0 %v391
    %558 = vmatpush.msra.mxu0 %v387
    %559 = vmatpush.msra.mxu0 %v383
    %560 = vmatpush.msra.mxu0 %v379
    %561 = vmatpush.msra.mxu0 %v375
    %562 = vmatpush.msra.mxu0 %v371
    %563 = vmatpush.msra.mxu0 %v367
    %564 = vmatpush.msra.mxu0 %v363
    %565 = vmatmul.f32.gmra.mxu0 %v41
    %v566 = vpop.f32.mrf.mxu0
    %v567 = vadd.f32 %v547, %v566
    %568 = vdwg.mxu0
    %569 = vmatpush.msra.mxu0 0.0
    %570 = vmatpush.msra.mxu0 0.0
    %571 = vmatpush.msra.mxu0 0.0
    %572 = vmatpush.msra.mxu0 0.0
    %573 = vmatpush.msra.mxu0 0.0
    %574 = vmatpush.msra.mxu0 0.0
    %575 = vmatpush.msra.mxu0 0.0
    %576 = vmatpush.msra.mxu0 0.0
    %577 = vmatpush.msra.mxu0 0.0
    %578 = vmatpush.msra.mxu0 0.0
    %579 = vmatpush.msra.mxu0 0.0
    %580 = vmatpush.msra.mxu0 0.0
    %581 = vmatpush.msra.mxu0 0.0
    %582 = vmatpush.msra.mxu0 0.0
    %583 = vmatpush.msra.mxu0 %v431
    %584 = vmatpush.msra.mxu0 %v427
    %585 = vmatmul.f32.gmra.mxu0 %v447
    %v586 = vpop.f32.mrf.mxu0
    %v587 = vadd.f32 %v567, %v586
    %588 = vdwg.mxu0
    %589 = vmatpush.msra.mxu0 %v104
    %590 = vmatpush.msra.mxu0 %v100
    %591 = vmatpush.msra.mxu0 %v96
    %592 = vmatpush.msra.mxu0 %v92
    %593 = vmatpush.msra.mxu0 %v88
    %594 = vmatpush.msra.mxu0 %v84
    %595 = vmatpush.msra.mxu0 %v80
    %596 = vmatpush.msra.mxu0 %v76
    %597 = vmatpush.msra.mxu0 %v72
    %598 = vmatpush.msra.mxu0 %v68
    %599 = vmatpush.msra.mxu0 %v64
    %600 = vmatpush.msra.mxu0 %v60
    %601 = vmatpush.msra.mxu0 %v56
    %602 = vmatpush.msra.mxu0 %v52
    %603 = vmatpush.msra.mxu0 %v48
    %604 = vmatpush.msra.mxu0 %v44
    %605 = vmatmul.f32.gmra.mxu0 %v36
    %v606 = vpop.f32.mrf.mxu0
    %v607 = vadd.f32 %v438, %v606
    %608 = vdwg.mxu0
    %609 = vmatpush.msra.mxu0 %v168
    %610 = vmatpush.msra.mxu0 %v164
    %611 = vmatpush.msra.mxu0 %v160
    %612 = vmatpush.msra.mxu0 %v156
    %613 = vmatpush.msra.mxu0 %v152
    %614 = vmatpush.msra.mxu0 %v148
    %615 = vmatpush.msra.mxu0 %v144
    %616 = vmatpush.msra.mxu0 %v140
    %617 = vmatpush.msra.mxu0 %v136
    %618 = vmatpush.msra.mxu0 %v132
    %619 = vmatpush.msra.mxu0 %v128
    %620 = vmatpush.msra.mxu0 %v124
    %621 = vmatpush.msra.mxu0 %v120
    %622 = vmatpush.msra.mxu0 %v116
    %623 = vmatpush.msra.mxu0 %v112
    %624 = vmatpush.msra.mxu0 %v108
    %625 = vmatmul.f32.gmra.mxu0 %v37
    %v626 = vpop.f32.mrf.mxu0
    %v627 = vadd.f32 %v607, %v626
    %628 = vdwg.mxu0
    %629 = vmatpush.msra.mxu0 %v232
    %630 = vmatpush.msra.mxu0 %v228
    %631 = vmatpush.msra.mxu0 %v224
    %632 = vmatpush.msra.mxu0 %v220
    %633 = vmatpush.msra.mxu0 %v216
    %634 = vmatpush.msra.mxu0 %v212
    %635 = vmatpush.msra.mxu0 %v208
    %636 = vmatpush.msra.mxu0 %v204
    %637 = vmatpush.msra.mxu0 %v200
    %638 = vmatpush.msra.mxu0 %v196
    %639 = vmatpush.msra.mxu0 %v192
    %640 = vmatpush.msra.mxu0 %v188
    %641 = vmatpush.msra.mxu0 %v184
    %642 = vmatpush.msra.mxu0 %v180
    %643 = vmatpush.msra.mxu0 %v176
    %644 = vmatpush.msra.mxu0 %v172
    %645 = vmatmul.f32.gmra.mxu0 %v38
    %v646 = vpop.f32.mrf.mxu0
    %v647 = vadd.f32 %v627, %v646
    %648 = vdwg.mxu0
    %649 = vmatpush.msra.mxu0 %v296
    %650 = vmatpush.msra.mxu0 %v292
    %651 = vmatpush.msra.mxu0 %v288
    %652 = vmatpush.msra.mxu0 %v284
    %653 = vmatpush.msra.mxu0 %v280
    %654 = vmatpush.msra.mxu0 %v276
    %655 = vmatpush.msra.mxu0 %v272
    %656 = vmatpush.msra.mxu0 %v268
    %657 = vmatpush.msra.mxu0 %v264
    %658 = vmatpush.msra.mxu0 %v260
    %659 = vmatpush.msra.mxu0 %v256
    %660 = vmatpush.msra.mxu0 %v252
    %661 = vmatpush.msra.mxu0 %v248
    %662 = vmatpush.msra.mxu0 %v244
    %663 = vmatpush.msra.mxu0 %v240
    %664 = vmatpush.msra.mxu0 %v236
    %665 = vmatmul.f32.gmra.mxu0 %v39
    %v666 = vpop.f32.mrf.mxu0
    %v667 = vadd.f32 %v647, %v666
    %668 = vdwg.mxu0
    %669 = vmatpush.msra.mxu0 %v360
    %670 = vmatpush.msra.mxu0 %v356
    %671 = vmatpush.msra.mxu0 %v352
    %672 = vmatpush.msra.mxu0 %v348
    %673 = vmatpush.msra.mxu0 %v344
    %674 = vmatpush.msra.mxu0 %v340
    %675 = vmatpush.msra.mxu0 %v336
    %676 = vmatpush.msra.mxu0 %v332
    %677 = vmatpush.msra.mxu0 %v328
    %678 = vmatpush.msra.mxu0 %v324
    %679 = vmatpush.msra.mxu0 %v320
    %680 = vmatpush.msra.mxu0 %v316
    %681 = vmatpush.msra.mxu0 %v312
    %682 = vmatpush.msra.mxu0 %v308
    %683 = vmatpush.msra.mxu0 %v304
    %684 = vmatpush.msra.mxu0 %v300
    %685 = vmatmul.f32.gmra.mxu0 %v40
    %v686 = vpop.f32.mrf.mxu0
    %v687 = vadd.f32 %v667, %v686
    %688 = vdwg.mxu0
    %689 = vmatpush.msra.mxu0 %v424
    %690 = vmatpush.msra.mxu0 %v420
    %691 = vmatpush.msra.mxu0 %v416
    %692 = vmatpush.msra.mxu0 %v412
    %693 = vmatpush.msra.mxu0 %v408
    %694 = vmatpush.msra.mxu0 %v404
    %695 = vmatpush.msra.mxu0 %v400
    %696 = vmatpush.msra.mxu0 %v396
    %697 = vmatpush.msra.mxu0 %v392
    %698 = vmatpush.msra.mxu0 %v388
    %699 = vmatpush.msra.mxu0 %v384
    %700 = vmatpush.msra.mxu0 %v380
    %701 = vmatpush.msra.mxu0 %v376
    %702 = vmatpush.msra.mxu0 %v372
    %703 = vmatpush.msra.mxu0 %v368
    %704 = vmatpush.msra.mxu0 %v364
    %705 = vmatmul.f32.gmra.mxu0 %v41
    %v706 = vpop.f32.mrf.mxu0
    %v707 = vadd.f32 %v687, %v706
    %708 = vdwg.mxu0
    %709 = vmatpush.msra.mxu0 0.0
    %710 = vmatpush.msra.mxu0 0.0
    %711 = vmatpush.msra.mxu0 0.0
    %712 = vmatpush.msra.mxu0 0.0
    %713 = vmatpush.msra.mxu0 0.0
    %714 = vmatpush.msra.mxu0 0.0
    %715 = vmatpush.msra.mxu0 0.0
    %716 = vmatpush.msra.mxu0 0.0
    %717 = vmatpush.msra.mxu0 0.0
    %718 = vmatpush.msra.mxu0 0.0
    %719 = vmatpush.msra.mxu0 0.0
    %720 = vmatpush.msra.mxu0 0.0
    %721 = vmatpush.msra.mxu0 0.0
    %722 = vmatpush.msra.mxu0 0.0
    %723 = vmatpush.msra.mxu0 %v432
    %724 = vmatpush.msra.mxu0 %v428
    %725 = vmatmul.f32.gmra.mxu0 %v447
    %v726 = vpop.f32.mrf.mxu0
    %v727 = vadd.f32 %v707, %v726
    %728 = vdwg.mxu0
    %729 = vmatpush.msra.mxu0 %v105
    %730 = vmatpush.msra.mxu0 %v101
    %731 = vmatpush.msra.mxu0 %v97
    %732 = vmatpush.msra.mxu0 %v93
    %733 = vmatpush.msra.mxu0 %v89
    %734 = vmatpush.msra.mxu0 %v85
    %735 = vmatpush.msra.mxu0 %v81
    %736 = vmatpush.msra.mxu0 %v77
    %737 = vmatpush.msra.mxu0 %v73
    %738 = vmatpush.msra.mxu0 %v69
    %739 = vmatpush.msra.mxu0 %v65
    %740 = vmatpush.msra.mxu0 %v61
    %741 = vmatpush.msra.mxu0 %v57
    %742 = vmatpush.msra.mxu0 %v53
    %743 = vmatpush.msra.mxu0 %v49
    %744 = vmatpush.msra.mxu0 %v45
    %745 = vmatmul.f32.gmra.mxu0 %v36
    %v746 = vpop.f32.mrf.mxu0
    %v747 = vadd.f32 %v439, %v746
    %748 = vdwg.mxu0
    %749 = vmatpush.msra.mxu0 %v169
    %750 = vmatpush.msra.mxu0 %v165
    %751 = vmatpush.msra.mxu0 %v161
    %752 = vmatpush.msra.mxu0 %v157
    %753 = vmatpush.msra.mxu0 %v153
    %754 = vmatpush.msra.mxu0 %v149
    %755 = vmatpush.msra.mxu0 %v145
    %756 = vmatpush.msra.mxu0 %v141
    %757 = vmatpush.msra.mxu0 %v137
    %758 = vmatpush.msra.mxu0 %v133
    %759 = vmatpush.msra.mxu0 %v129
    %760 = vmatpush.msra.mxu0 %v125
    %761 = vmatpush.msra.mxu0 %v121
    %762 = vmatpush.msra.mxu0 %v117
    %763 = vmatpush.msra.mxu0 %v113
    %764 = vmatpush.msra.mxu0 %v109
    %765 = vmatmul.f32.gmra.mxu0 %v37
    %v766 = vpop.f32.mrf.mxu0
    %v767 = vadd.f32 %v747, %v766
    %768 = vdwg.mxu0
    %769 = vmatpush.msra.mxu0 %v233
    %770 = vmatpush.msra.mxu0 %v229
    %771 = vmatpush.msra.mxu0 %v225
    %772 = vmatpush.msra.mxu0 %v221
    %773 = vmatpush.msra.mxu0 %v217
    %774 = vmatpush.msra.mxu0 %v213
    %775 = vmatpush.msra.mxu0 %v209
    %776 = vmatpush.msra.mxu0 %v205
    %777 = vmatpush.msra.mxu0 %v201
    %778 = vmatpush.msra.mxu0 %v197
    %779 = vmatpush.msra.mxu0 %v193
    %780 = vmatpush.msra.mxu0 %v189
    %781 = vmatpush.msra.mxu0 %v185
    %782 = vmatpush.msra.mxu0 %v181
    %783 = vmatpush.msra.mxu0 %v177
    %784 = vmatpush.msra.mxu0 %v173
    %785 = vmatmul.f32.gmra.mxu0 %v38
    %v786 = vpop.f32.mrf.mxu0
    %v787 = vadd.f32 %v767, %v786
    %788 = vdwg.mxu0
    %789 = vmatpush.msra.mxu0 %v297
    %790 = vmatpush.msra.mxu0 %v293
    %791 = vmatpush.msra.mxu0 %v289
    %792 = vmatpush.msra.mxu0 %v285
    %793 = vmatpush.msra.mxu0 %v281
    %794 = vmatpush.msra.mxu0 %v277
    %795 = vmatpush.msra.mxu0 %v273
    %796 = vmatpush.msra.mxu0 %v269
    %797 = vmatpush.msra.mxu0 %v265
    %798 = vmatpush.msra.mxu0 %v261
    %799 = vmatpush.msra.mxu0 %v257
    %800 = vmatpush.msra.mxu0 %v253
    %801 = vmatpush.msra.mxu0 %v249
    %802 = vmatpush.msra.mxu0 %v245
    %803 = vmatpush.msra.mxu0 %v241
    %804 = vmatpush.msra.mxu0 %v237
    %805 = vmatmul.f32.gmra.mxu0 %v39
    %v806 = vpop.f32.mrf.mxu0
    %v807 = vadd.f32 %v787, %v806
    %808 = vdwg.mxu0
    %809 = vmatpush.msra.mxu0 %v361
    %810 = vmatpush.msra.mxu0 %v357
    %811 = vmatpush.msra.mxu0 %v353
    %812 = vmatpush.msra.mxu0 %v349
    %813 = vmatpush.msra.mxu0 %v345
    %814 = vmatpush.msra.mxu0 %v341
    %815 = vmatpush.msra.mxu0 %v337
    %816 = vmatpush.msra.mxu0 %v333
    %817 = vmatpush.msra.mxu0 %v329
    %818 = vmatpush.msra.mxu0 %v325
    %819 = vmatpush.msra.mxu0 %v321
    %820 = vmatpush.msra.mxu0 %v317
    %821 = vmatpush.msra.mxu0 %v313
    %822 = vmatpush.msra.mxu0 %v309
    %823 = vmatpush.msra.mxu0 %v305
    %824 = vmatpush.msra.mxu0 %v301
    %825 = vmatmul.f32.gmra.mxu0 %v40
    %v826 = vpop.f32.mrf.mxu0
    %v827 = vadd.f32 %v807, %v826
    %828 = vdwg.mxu0
    %829 = vmatpush.msra.mxu0 %v425
    %830 = vmatpush.msra.mxu0 %v421
    %831 = vmatpush.msra.mxu0 %v417
    %832 = vmatpush.msra.mxu0 %v413
    %833 = vmatpush.msra.mxu0 %v409
    %834 = vmatpush.msra.mxu0 %v405
    %835 = vmatpush.msra.mxu0 %v401
    %836 = vmatpush.msra.mxu0 %v397
    %837 = vmatpush.msra.mxu0 %v393
    %838 = vmatpush.msra.mxu0 %v389
    %839 = vmatpush.msra.mxu0 %v385
    %840 = vmatpush.msra.mxu0 %v381
    %841 = vmatpush.msra.mxu0 %v377
    %842 = vmatpush.msra.mxu0 %v373
    %843 = vmatpush.msra.mxu0 %v369
    %844 = vmatpush.msra.mxu0 %v365
    %845 = vmatmul.f32.gmra.mxu0 %v41
    %v846 = vpop.f32.mrf.mxu0
    %v847 = vadd.f32 %v827, %v846
    %848 = vdwg.mxu0
    %849 = vmatpush.msra.mxu0 0.0
    %850 = vmatpush.msra.mxu0 0.0
    %851 = vmatpush.msra.mxu0 0.0
    %852 = vmatpush.msra.mxu0 0.0
    %853 = vmatpush.msra.mxu0 0.0
    %854 = vmatpush.msra.mxu0 0.0
    %855 = vmatpush.msra.mxu0 0.0
    %856 = vmatpush.msra.mxu0 0.0
    %857 = vmatpush.msra.mxu0 0.0
    %858 = vmatpush.msra.mxu0 0.0
    %859 = vmatpush.msra.mxu0 0.0
    %860 = vmatpush.msra.mxu0 0.0
    %861 = vmatpush.msra.mxu0 0.0
    %862 = vmatpush.msra.mxu0 0.0
    %863 = vmatpush.msra.mxu0 %v433
    %864 = vmatpush.msra.mxu0 %v429
    %865 = vmatmul.f32.gmra.mxu0 %v447
    %v866 = vpop.f32.mrf.mxu0
    %v867 = vadd.f32 %v847, %v866
    %868 = vdwg.mxu0
    %869 = vmatpush.msra.mxu0 %v106
    %870 = vmatpush.msra.mxu0 %v102
    %871 = vmatpush.msra.mxu0 %v98
    %872 = vmatpush.msra.mxu0 %v94
    %873 = vmatpush.msra.mxu0 %v90
    %874 = vmatpush.msra.mxu0 %v86
    %875 = vmatpush.msra.mxu0 %v82
    %876 = vmatpush.msra.mxu0 %v78
    %877 = vmatpush.msra.mxu0 %v74
    %878 = vmatpush.msra.mxu0 %v70
    %879 = vmatpush.msra.mxu0 %v66
    %880 = vmatpush.msra.mxu0 %v62
    %881 = vmatpush.msra.mxu0 %v58
    %882 = vmatpush.msra.mxu0 %v54
    %883 = vmatpush.msra.mxu0 %v50
    %884 = vmatpush.msra.mxu0 %v46
    %885 = vmatmul.f32.gmra.mxu0 %v36
    %v886 = vpop.f32.mrf.mxu0
    %v887 = vadd.f32 %v440, %v886
    %888 = vdwg.mxu0
    %889 = vmatpush.msra.mxu0 %v170
    %890 = vmatpush.msra.mxu0 %v166
    %891 = vmatpush.msra.mxu0 %v162
    %892 = vmatpush.msra.mxu0 %v158
    %893 = vmatpush.msra.mxu0 %v154
    %894 = vmatpush.msra.mxu0 %v150
    %895 = vmatpush.msra.mxu0 %v146
    %896 = vmatpush.msra.mxu0 %v142
    %897 = vmatpush.msra.mxu0 %v138
    %898 = vmatpush.msra.mxu0 %v134
    %899 = vmatpush.msra.mxu0 %v130
    %900 = vmatpush.msra.mxu0 %v126
    %901 = vmatpush.msra.mxu0 %v122
    %902 = vmatpush.msra.mxu0 %v118
    %903 = vmatpush.msra.mxu0 %v114
    %904 = vmatpush.msra.mxu0 %v110
    %905 = vmatmul.f32.gmra.mxu0 %v37
    %v906 = vpop.f32.mrf.mxu0
    %v907 = vadd.f32 %v887, %v906
    %908 = vdwg.mxu0
    %909 = vmatpush.msra.mxu0 %v234
    %910 = vmatpush.msra.mxu0 %v230
    %911 = vmatpush.msra.mxu0 %v226
    %912 = vmatpush.msra.mxu0 %v222
    %913 = vmatpush.msra.mxu0 %v218
    %914 = vmatpush.msra.mxu0 %v214
    %915 = vmatpush.msra.mxu0 %v210
    %916 = vmatpush.msra.mxu0 %v206
    %917 = vmatpush.msra.mxu0 %v202
    %918 = vmatpush.msra.mxu0 %v198
    %919 = vmatpush.msra.mxu0 %v194
    %920 = vmatpush.msra.mxu0 %v190
    %921 = vmatpush.msra.mxu0 %v186
    %922 = vmatpush.msra.mxu0 %v182
    %923 = vmatpush.msra.mxu0 %v178
    %924 = vmatpush.msra.mxu0 %v174
    %925 = vmatmul.f32.gmra.mxu0 %v38
    %v926 = vpop.f32.mrf.mxu0
    %v927 = vadd.f32 %v907, %v926
    %928 = vdwg.mxu0
    %929 = vmatpush.msra.mxu0 %v298
    %930 = vmatpush.msra.mxu0 %v294
    %931 = vmatpush.msra.mxu0 %v290
    %932 = vmatpush.msra.mxu0 %v286
    %933 = vmatpush.msra.mxu0 %v282
    %934 = vmatpush.msra.mxu0 %v278
    %935 = vmatpush.msra.mxu0 %v274
    %936 = vmatpush.msra.mxu0 %v270
    %937 = vmatpush.msra.mxu0 %v266
    %938 = vmatpush.msra.mxu0 %v262
    %939 = vmatpush.msra.mxu0 %v258
    %940 = vmatpush.msra.mxu0 %v254
    %941 = vmatpush.msra.mxu0 %v250
    %942 = vmatpush.msra.mxu0 %v246
    %943 = vmatpush.msra.mxu0 %v242
    %944 = vmatpush.msra.mxu0 %v238
    %945 = vmatmul.f32.gmra.mxu0 %v39
    %v946 = vpop.f32.mrf.mxu0
    %v947 = vadd.f32 %v927, %v946
    %948 = vdwg.mxu0
    %949 = vmatpush.msra.mxu0 %v362
    %950 = vmatpush.msra.mxu0 %v358
    %951 = vmatpush.msra.mxu0 %v354
    %952 = vmatpush.msra.mxu0 %v350
    %953 = vmatpush.msra.mxu0 %v346
    %954 = vmatpush.msra.mxu0 %v342
    %955 = vmatpush.msra.mxu0 %v338
    %956 = vmatpush.msra.mxu0 %v334
    %957 = vmatpush.msra.mxu0 %v330
    %958 = vmatpush.msra.mxu0 %v326
    %959 = vmatpush.msra.mxu0 %v322
    %960 = vmatpush.msra.mxu0 %v318
    %961 = vmatpush.msra.mxu0 %v314
    %962 = vmatpush.msra.mxu0 %v310
    %963 = vmatpush.msra.mxu0 %v306
    %964 = vmatpush.msra.mxu0 %v302
    %965 = vmatmul.f32.gmra.mxu0 %v40
    %v966 = vpop.f32.mrf.mxu0
    %v967 = vadd.f32 %v947, %v966
    %968 = vdwg.mxu0
    %969 = vmatpush.msra.mxu0 %v426
    %970 = vmatpush.msra.mxu0 %v422
    %971 = vmatpush.msra.mxu0 %v418
    %972 = vmatpush.msra.mxu0 %v414
    %973 = vmatpush.msra.mxu0 %v410
    %974 = vmatpush.msra.mxu0 %v406
    %975 = vmatpush.msra.mxu0 %v402
    %976 = vmatpush.msra.mxu0 %v398
    %977 = vmatpush.msra.mxu0 %v394
    %978 = vmatpush.msra.mxu0 %v390
    %979 = vmatpush.msra.mxu0 %v386
    %980 = vmatpush.msra.mxu0 %v382
    %981 = vmatpush.msra.mxu0 %v378
    %982 = vmatpush.msra.mxu0 %v374
    %983 = vmatpush.msra.mxu0 %v370
    %984 = vmatpush.msra.mxu0 %v366
    %985 = vmatmul.f32.gmra.mxu0 %v41
    %v986 = vpop.f32.mrf.mxu0
    %v987 = vadd.f32 %v967, %v986
    %988 = vdwg.mxu0
    %989 = vmatpush.msra.mxu0 0.0
    %990 = vmatpush.msra.mxu0 0.0
    %991 = vmatpush.msra.mxu0 0.0
    %992 = vmatpush.msra.mxu0 0.0
    %993 = vmatpush.msra.mxu0 0.0
    %994 = vmatpush.msra.mxu0 0.0
    %995 = vmatpush.msra.mxu0 0.0
    %996 = vmatpush.msra.mxu0 0.0
    %997 = vmatpush.msra.mxu0 0.0
    %998 = vmatpush.msra.mxu0 0.0
    %999 = vmatpush.msra.mxu0 0.0
    %1000 = vmatpush.msra.mxu0 0.0
    %1001 = vmatpush.msra.mxu0 0.0
    %1002 = vmatpush.msra.mxu0 0.0
    %1003 = vmatpush.msra.mxu0 %v434
    %1004 = vmatpush.msra.mxu0 %v430
    %1005 = vmatmul.f32.gmra.mxu0 %v447
    %v1006 = vpop.f32.mrf.mxu0
    %v1007 = vadd.f32 %v987, %v1006
    %1008 = vdwg.mxu0
    %v1009 = vmax.f32 %v587, 0.0
    %v1010 = vmax.f32 %v727, 0.0
    %v1011 = vmax.f32 %v867, 0.0
    %v1012 = vmax.f32 %v1007, 0.0
    %v1013 = vld [vmem:[%s3] sm:$0xff]
    %v1014 = vld [vmem:[%s3 + $0x8] sm:$0xff]
    %v1015 = vld [vmem:[%s3 + $0x10] sm:$0xff]
    %v1016 = vld [vmem:[%s3 + $0x18] sm:$0xff]
    %v1017 = vld [vmem:[%s3 + $0x20] sm:$0xff]
    %v1018 = vld [vmem:[%s3 + $0x28] sm:$0xff]
    %v1019 = vld [vmem:[%s3 + $0x30] sm:$0xff]
    %v1020 = vld [vmem:[%s3 + $0x38] sm:$0xff]
    %v1021 = vld [vmem:[%s3 + $0x40] sm:$0xff]
    %v1022 = vld [vmem:[%s3 + $0x48] sm:$0xff]
    %v1023 = vld [vmem:[%s3 + $0x50] sm:$0xff]
    %v1024 = vld [vmem:[%s3 + $0x58] sm:$0xff]
    %v1025 = vld [vmem:[%s3 + $0x60] sm:$0xff]
    %v1026 = vld [vmem:[%s3 + $0x68] sm:$0xff]
    %v1027 = vld [vmem:[%s3 + $0x70] sm:$0xff]
    %v1028 = vld [vmem:[%s3 + $0x78] sm:$0xff]
    %v1029 = vld [vmem:[%s3 + $0x80] sm:$0xff]
    %v1030 = vld [vmem:[%s3 + $0x88] sm:$0xff]
    %v1031 = vld [vmem:[%s3 + $0x90] sm:$0xff]
    %v1032 = vld [vmem:[%s3 + $0x98] sm:$0xff]
    %v1033 = vld [vmem:[%s3 + $0xa0] sm:$0xff]
    %v1034 = vld [vmem:[%s3 + $0xa8] sm:$0xff]
    %v1035 = vld [vmem:[%s3 + $0xb0] sm:$0xff]
    %v1036 = vld [vmem:[%s3 + $0xb8] sm:$0xff]
    %v1037 = vld [vmem:[%s3 + $0xc0] sm:$0xff]
    %v1038 = vld [vmem:[%s3 + $0xc8] sm:$0xff]
    %v1039 = vld [vmem:[%s3 + $0xd0] sm:$0xff]
    %v1040 = vld [vmem:[%s3 + $0xd8] sm:$0xff]
    %v1041 = vld [vmem:[%s3 + $0xe0] sm:$0xff]
    %v1042 = vld [vmem:[%s3 + $0xe8] sm:$0xff]
    %v1043 = vld [vmem:[%s3 + $0xf0] sm:$0xff]
    %v1044 = vld [vmem:[%s3 + $0xf8] sm:$0xff]
    %v1045 = vld [vmem:[%s3 + $0x100] sm:$0xff]
    %v1046 = vld [vmem:[%s3 + $0x108] sm:$0xff]
    %v1047 = vld [vmem:[%s3 + $0x110] sm:$0xff]
    %v1048 = vld [vmem:[%s3 + $0x118] sm:$0xff]
    %v1049 = vld [vmem:[%s3 + $0x120] sm:$0xff]
    %v1050 = vld [vmem:[%s3 + $0x128] sm:$0xff]
    %v1051 = vld [vmem:[%s3 + $0x130] sm:$0xff]
    %v1052 = vld [vmem:[%s3 + $0x138] sm:$0xff]
    %v1053 = vld [vmem:[%s3 + $0x140] sm:$0xff]
    %v1054 = vld [vmem:[%s3 + $0x148] sm:$0xff]
    %v1055 = vld [vmem:[%s3 + $0x150] sm:$0xff]
    %v1056 = vld [vmem:[%s3 + $0x158] sm:$0xff]
    %v1057 = vld [vmem:[%s3 + $0x160] sm:$0xff]
    %v1058 = vld [vmem:[%s3 + $0x168] sm:$0xff]
    %v1059 = vld [vmem:[%s3 + $0x170] sm:$0xff]
    %v1060 = vld [vmem:[%s3 + $0x178] sm:$0xff]
    %v1061 = vld [vmem:[%s3 + $0x180] sm:$0xff]
    %v1062 = vld [vmem:[%s4] sm:$0x1]
    %v1064 = vperm.slane %v1062, 0
    %vm1066 = vcmask 64512
    %v1068 = vsel %vm1066, %v1012, 0
    %1070 = vmatpush.msra.mxu0 %v1028
    %1071 = vmatpush.msra.mxu0 %v1027
    %1072 = vmatpush.msra.mxu0 %v1026
    %1073 = vmatpush.msra.mxu0 %v1025
    %1074 = vmatpush.msra.mxu0 %v1024
    %1075 = vmatpush.msra.mxu0 %v1023
    %1076 = vmatpush.msra.mxu0 %v1022
    %1077 = vmatpush.msra.mxu0 %v1021
    %1078 = vmatpush.msra.mxu0 %v1020
    %1079 = vmatpush.msra.mxu0 %v1019
    %1080 = vmatpush.msra.mxu0 %v1018
    %1081 = vmatpush.msra.mxu0 %v1017
    %1082 = vmatpush.msra.mxu0 %v1016
    %1083 = vmatpush.msra.mxu0 %v1015
    %1084 = vmatpush.msra.mxu0 %v1014
    %1085 = vmatpush.msra.mxu0 %v1013
    %1086 = vmatmul.f32.gmra.mxu0 %v1009
    %v1087 = vpop.f32.mrf.mxu0
    %v1088 = vadd.f32 %v1064, %v1087
    %1089 = vdwg.mxu0
    %1090 = vmatpush.msra.mxu0 %v1044
    %1091 = vmatpush.msra.mxu0 %v1043
    %1092 = vmatpush.msra.mxu0 %v1042
    %1093 = vmatpush.msra.mxu0 %v1041
    %1094 = vmatpush.msra.mxu0 %v1040
    %1095 = vmatpush.msra.mxu0 %v1039
    %1096 = vmatpush.msra.mxu0 %v1038
    %1097 = vmatpush.msra.mxu0 %v1037
    %1098 = vmatpush.msra.mxu0 %v1036
    %1099 = vmatpush.msra.mxu0 %v1035
    %1100 = vmatpush.msra.mxu0 %v1034
    %1101 = vmatpush.msra.mxu0 %v1033
    %1102 = vmatpush.msra.mxu0 %v1032
    %1103 = vmatpush.msra.mxu0 %v1031
    %1104 = vmatpush.msra.mxu0 %v1030
    %1105 = vmatpush.msra.mxu0 %v1029
    %1106 = vmatmul.f32.gmra.mxu0 %v1010
    %v1107 = vpop.f32.mrf.mxu0
    %v1108 = vadd.f32 %v1088, %v1107
    %1109 = vdwg.mxu0
    %1110 = vmatpush.msra.mxu0 %v1060
    %1111 = vmatpush.msra.mxu0 %v1059
    %1112 = vmatpush.msra.mxu0 %v1058
    %1113 = vmatpush.msra.mxu0 %v1057
    %1114 = vmatpush.msra.mxu0 %v1056
    %1115 = vmatpush.msra.mxu0 %v1055
    %1116 = vmatpush.msra.mxu0 %v1054
    %1117 = vmatpush.msra.mxu0 %v1053
    %1118 = vmatpush.msra.mxu0 %v1052
    %1119 = vmatpush.msra.mxu0 %v1051
    %1120 = vmatpush.msra.mxu0 %v1050
    %1121 = vmatpush.msra.mxu0 %v1049
    %1122 = vmatpush.msra.mxu0 %v1048
    %1123 = vmatpush.msra.mxu0 %v1047
    %1124 = vmatpush.msra.mxu0 %v1046
    %1125 = vmatpush.msra.mxu0 %v1045
    %1126 = vmatmul.f32.gmra.mxu0 %v1011
    %v1127 = vpop.f32.mrf.mxu0
    %v1128 = vadd.f32 %v1108, %v1127
    %1129 = vdwg.mxu0
    %1130 = vmatpush.msra.mxu0 0.0
    %1131 = vmatpush.msra.mxu0 0.0
    %1132 = vmatpush.msra.mxu0 0.0
    %1133 = vmatpush.msra.mxu0 0.0
    %1134 = vmatpush.msra.mxu0 0.0
    %1135 = vmatpush.msra.mxu0 0.0
    %1136 = vmatpush.msra.mxu0 0.0
    %1137 = vmatpush.msra.mxu0 0.0
    %1138 = vmatpush.msra.mxu0 0.0
    %1139 = vmatpush.msra.mxu0 0.0
    %1140 = vmatpush.msra.mxu0 0.0
    %1141 = vmatpush.msra.mxu0 0.0
    %1142 = vmatpush.msra.mxu0 0.0
    %1143 = vmatpush.msra.mxu0 0.0
    %1144 = vmatpush.msra.mxu0 0.0
    %1145 = vmatpush.msra.mxu0 %v1061
    %1146 = vmatmul.f32.gmra.mxu0 %v1068
    %v1147 = vpop.f32.mrf.mxu0
    %v1148 = vadd.f32 %v1128, %v1147
    %1149 = vdwg.mxu0
    %v1150 = vmax.f32 %v1148, 0.0
    %v1151 = vld [vmem:[%s5] sm:$0xff]
    %v1152 = vld [vmem:[%s5 + $0x8] sm:$0xff]
    %v1153 = vld [vmem:[%s5 + $0x10] sm:$0xff]
    %v1154 = vld [vmem:[%s5 + $0x18] sm:$0xff]
    %v1155 = vld [vmem:[%s5 + $0x20] sm:$0x3]
    %v1156 = vld [vmem:[%s5 + $0x28] sm:$0x3]
    %v1157 = vld [vmem:[%s5 + $0x30] sm:$0x3]
    %v1158 = vld [vmem:[%s5 + $0x38] sm:$0x3]
    %v1159 = vld [vmem:[%s6] sm:$0xf]
    %v1161 = vperm.slane %v1159, 0
    %v1162 = vperm.slane %v1159, 1
    %v1163 = vperm.slane %v1159, 2
    %v1164 = vperm.slane %v1159, 3
    %vm1169 = vcmask 80896
    %v1171 = vsel %vm1169, %v1150, 0
    %vm1173 = vcmask 1041408
    %v1175 = vsel %vm1173, %v1155, 0
    %v1178 = vsel %vm1173, %v1156, 0
    %v1181 = vsel %vm1173, %v1157, 0
    %v1184 = vsel %vm1173, %v1158, 0
    %1186 = vmatpush.msra.mxu0 0.0
    %1187 = vmatpush.msra.mxu0 0.0
    %1188 = vmatpush.msra.mxu0 0.0
    %1189 = vmatpush.msra.mxu0 0.0
    %1190 = vmatpush.msra.mxu0 0.0
    %1191 = vmatpush.msra.mxu0 0.0
    %1192 = vmatpush.msra.mxu0 0.0
    %1193 = vmatpush.msra.mxu0 0.0
    %1194 = vmatpush.msra.mxu0 0.0
    %1195 = vmatpush.msra.mxu0 0.0
    %1196 = vmatpush.msra.mxu0 0.0
    %1197 = vmatpush.msra.mxu0 0.0
    %1198 = vmatpush.msra.mxu0 0.0
    %1199 = vmatpush.msra.mxu0 0.0
    %1200 = vmatpush.msra.mxu0 %v1175
    %1201 = vmatpush.msra.mxu0 %v1151
    %1202 = vmatmul.f32.gmra.mxu0 %v1171
    %v1203 = vpop.f32.mrf.mxu0
    %v1204 = vadd.f32 %v1161, %v1203
    %1205 = vdwg.mxu0
    %1206 = vmatpush.msra.mxu0 0.0
    %1207 = vmatpush.msra.mxu0 0.0
    %1208 = vmatpush.msra.mxu0 0.0
    %1209 = vmatpush.msra.mxu0 0.0
    %1210 = vmatpush.msra.mxu0 0.0
    %1211 = vmatpush.msra.mxu0 0.0
    %1212 = vmatpush.msra.mxu0 0.0
    %1213 = vmatpush.msra.mxu0 0.0
    %1214 = vmatpush.msra.mxu0 0.0
    %1215 = vmatpush.msra.mxu0 0.0
    %1216 = vmatpush.msra.mxu0 0.0
    %1217 = vmatpush.msra.mxu0 0.0
    %1218 = vmatpush.msra.mxu0 0.0
    %1219 = vmatpush.msra.mxu0 0.0
    %1220 = vmatpush.msra.mxu0 %v1178
    %1221 = vmatpush.msra.mxu0 %v1152
    %1222 = vmatmul.f32.gmra.mxu0 %v1171
    %v1223 = vpop.f32.mrf.mxu0
    %v1224 = vadd.f32 %v1162, %v1223
    %1225 = vdwg.mxu0
    %1226 = vmatpush.msra.mxu0 0.0
    %1227 = vmatpush.msra.mxu0 0.0
    %1228 = vmatpush.msra.mxu0 0.0
    %1229 = vmatpush.msra.mxu0 0.0
    %1230 = vmatpush.msra.mxu0 0.0
    %1231 = vmatpush.msra.mxu0 0.0
    %1232 = vmatpush.msra.mxu0 0.0
    %1233 = vmatpush.msra.mxu0 0.0
    %1234 = vmatpush.msra.mxu0 0.0
    %1235 = vmatpush.msra.mxu0 0.0
    %1236 = vmatpush.msra.mxu0 0.0
    %1237 = vmatpush.msra.mxu0 0.0
    %1238 = vmatpush.msra.mxu0 0.0
    %1239 = vmatpush.msra.mxu0 0.0
    %1240 = vmatpush.msra.mxu0 %v1181
    %1241 = vmatpush.msra.mxu0 %v1153
    %1242 = vmatmul.f32.gmra.mxu0 %v1171
    %v1243 = vpop.f32.mrf.mxu0
    %v1244 = vadd.f32 %v1163, %v1243
    %1245 = vdwg.mxu0
    %1246 = vmatpush.msra.mxu0 0.0
    %1247 = vmatpush.msra.mxu0 0.0
    %1248 = vmatpush.msra.mxu0 0.0
    %1249 = vmatpush.msra.mxu0 0.0
    %1250 = vmatpush.msra.mxu0 0.0
    %1251 = vmatpush.msra.mxu0 0.0
    %1252 = vmatpush.msra.mxu0 0.0
    %1253 = vmatpush.msra.mxu0 0.0
    %1254 = vmatpush.msra.mxu0 0.0
    %1255 = vmatpush.msra.mxu0 0.0
    %1256 = vmatpush.msra.mxu0 0.0
    %1257 = vmatpush.msra.mxu0 0.0
    %1258 = vmatpush.msra.mxu0 0.0
    %1259 = vmatpush.msra.mxu0 0.0
    %1260 = vmatpush.msra.mxu0 %v1184
    %1261 = vmatpush.msra.mxu0 %v1154
    %1262 = vmatmul.f32.gmra.mxu0 %v1171
    %v1263 = vpop.f32.mrf.mxu0
    %v1264 = vadd.f32 %v1164, %v1263
    %1265 = vdwg.mxu0
    %v1266 = vmax.f32 %v1204, 0.0
    %v1267 = vmax.f32 %v1224, 0.0
    %v1268 = vmax.f32 %v1244, 0.0
    %v1269 = vmax.f32 %v1264, 0.0
    %v1270 = vld [vmem:[%s7] sm:$0xff]
    %v1271 = vld [vmem:[%s7 + $0x8] sm:$0xff]
    %v1272 = vld [vmem:[%s7 + $0x10] sm:$0xff]
    %v1273 = vld [vmem:[%s7 + $0x18] sm:$0xff]
    %v1274 = vld [vmem:[%s7 + $0x20] sm:$0xff]
    %v1275 = vld [vmem:[%s7 + $0x28] sm:$0xff]
    %v1276 = vld [vmem:[%s7 + $0x30] sm:$0xff]
    %v1277 = vld [vmem:[%s7 + $0x38] sm:$0xff]
    %v1278 = vld [vmem:[%s7 + $0x40] sm:$0xff]
    %v1279 = vld [vmem:[%s7 + $0x48] sm:$0xff]
    %v1280 = vld [vmem:[%s7 + $0x50] sm:$0xff]
    %v1281 = vld [vmem:[%s7 + $0x58] sm:$0xff]
    %v1282 = vld [vmem:[%s7 + $0x60] sm:$0xff]
    %v1283 = vld [vmem:[%s7 + $0x68] sm:$0xff]
    %v1284 = vld [vmem:[%s7 + $0x70] sm:$0xff]
    %v1285 = vld [vmem:[%s7 + $0x78] sm:$0xff]
    %v1286 = vld [vmem:[%s7 + $0x80] sm:$0xff]
    %v1287 = vld [vmem:[%s7 + $0x88] sm:$0xff]
    %v1288 = vld [vmem:[%s7 + $0x90] sm:$0xff]
    %v1289 = vld [vmem:[%s7 + $0x98] sm:$0xff]
    %v1290 = vld [vmem:[%s7 + $0xa0] sm:$0xff]
    %v1291 = vld [vmem:[%s7 + $0xa8] sm:$0xff]
    %v1292 = vld [vmem:[%s7 + $0xb0] sm:$0xff]
    %v1293 = vld [vmem:[%s7 + $0xb8] sm:$0xff]
    %v1294 = vld [vmem:[%s7 + $0xc0] sm:$0xff]
    %v1295 = vld [vmem:[%s7 + $0xc8] sm:$0xff]
    %v1296 = vld [vmem:[%s7 + $0xd0] sm:$0xff]
    %v1297 = vld [vmem:[%s7 + $0xd8] sm:$0xff]
    %v1298 = vld [vmem:[%s7 + $0xe0] sm:$0xff]
    %v1299 = vld [vmem:[%s7 + $0xe8] sm:$0xff]
    %v1300 = vld [vmem:[%s7 + $0xf0] sm:$0xff]
    %v1301 = vld [vmem:[%s7 + $0xf8] sm:$0xff]
    %v1302 = vld [vmem:[%s7 + $0x100] sm:$0xff]
    %v1303 = vld [vmem:[%s7 + $0x108] sm:$0xff]
    %v1304 = vld [vmem:[%s7 + $0x110] sm:$0xff]
    %v1305 = vld [vmem:[%s7 + $0x118] sm:$0xff]
    %v1306 = vld [vmem:[%s7 + $0x120] sm:$0xff]
    %v1307 = vld [vmem:[%s7 + $0x128] sm:$0xff]
    %v1308 = vld [vmem:[%s7 + $0x130] sm:$0xff]
    %v1309 = vld [vmem:[%s7 + $0x138] sm:$0xff]
    %v1310 = vld [vmem:[%s7 + $0x140] sm:$0xff]
    %v1311 = vld [vmem:[%s7 + $0x148] sm:$0xff]
    %v1312 = vld [vmem:[%s7 + $0x150] sm:$0xff]
    %v1313 = vld [vmem:[%s7 + $0x158] sm:$0xff]
    %v1314 = vld [vmem:[%s7 + $0x160] sm:$0xff]
    %v1315 = vld [vmem:[%s7 + $0x168] sm:$0xff]
    %v1316 = vld [vmem:[%s7 + $0x170] sm:$0xff]
    %v1317 = vld [vmem:[%s7 + $0x178] sm:$0xff]
    %v1318 = vld [vmem:[%s7 + $0x180] sm:$0xff]
    %v1319 = vld [vmem:[%s7 + $0x188] sm:$0xff]
    %v1320 = vld [vmem:[%s7 + $0x190] sm:$0xff]
    %v1321 = vld [vmem:[%s7 + $0x198] sm:$0xff]
    %v1322 = vld [vmem:[%s7 + $0x1a0] sm:$0xff]
    %v1323 = vld [vmem:[%s7 + $0x1a8] sm:$0xff]
    %v1324 = vld [vmem:[%s7 + $0x1b0] sm:$0xff]
    %v1325 = vld [vmem:[%s7 + $0x1b8] sm:$0xff]
    %v1326 = vld [vmem:[%s7 + $0x1c0] sm:$0xff]
    %v1327 = vld [vmem:[%s7 + $0x1c8] sm:$0xff]
    %v1328 = vld [vmem:[%s7 + $0x1d0] sm:$0xff]
    %v1329 = vld [vmem:[%s7 + $0x1d8] sm:$0xff]
    %v1330 = vld [vmem:[%s7 + $0x1e0] sm:$0xff]
    %v1331 = vld [vmem:[%s7 + $0x1e8] sm:$0xff]
    %v1332 = vld [vmem:[%s7 + $0x1f0] sm:$0xff]
    %v1333 = vld [vmem:[%s7 + $0x1f8] sm:$0xff]
    %v1334 = vld [vmem:[%s7 + $0x200] sm:$0xff]
    %v1335 = vld [vmem:[%s7 + $0x208] sm:$0xff]
    %v1336 = vld [vmem:[%s7 + $0x210] sm:$0xff]
    %v1337 = vld [vmem:[%s7 + $0x218] sm:$0xff]
    %v1338 = vld [vmem:[%s7 + $0x220] sm:$0xff]
    %v1339 = vld [vmem:[%s7 + $0x228] sm:$0xff]
    %v1340 = vld [vmem:[%s7 + $0x230] sm:$0xff]
    %v1341 = vld [vmem:[%s7 + $0x238] sm:$0xff]
    %v1342 = vld [vmem:[%s7 + $0x240] sm:$0xff]
    %v1343 = vld [vmem:[%s7 + $0x248] sm:$0xff]
    %v1344 = vld [vmem:[%s7 + $0x250] sm:$0xff]
    %v1345 = vld [vmem:[%s7 + $0x258] sm:$0xff]
    %v1346 = vld [vmem:[%s7 + $0x260] sm:$0xff]
    %v1347 = vld [vmem:[%s7 + $0x268] sm:$0xff]
    %v1348 = vld [vmem:[%s7 + $0x270] sm:$0xff]
    %v1349 = vld [vmem:[%s7 + $0x278] sm:$0xff]
    %v1350 = vld [vmem:[%s7 + $0x280] sm:$0xff]
    %v1351 = vld [vmem:[%s7 + $0x288] sm:$0xff]
    %v1352 = vld [vmem:[%s7 + $0x290] sm:$0xff]
    %v1353 = vld [vmem:[%s7 + $0x298] sm:$0xff]
    %v1354 = vld [vmem:[%s7 + $0x2a0] sm:$0xff]
    %v1355 = vld [vmem:[%s7 + $0x2a8] sm:$0xff]
    %v1356 = vld [vmem:[%s7 + $0x2b0] sm:$0xff]
    %v1357 = vld [vmem:[%s7 + $0x2b8] sm:$0xff]
    %v1358 = vld [vmem:[%s7 + $0x2c0] sm:$0xff]
    %v1359 = vld [vmem:[%s7 + $0x2c8] sm:$0xff]
    %v1360 = vld [vmem:[%s7 + $0x2d0] sm:$0xff]
    %v1361 = vld [vmem:[%s7 + $0x2d8] sm:$0xff]
    %v1362 = vld [vmem:[%s7 + $0x2e0] sm:$0xff]
    %v1363 = vld [vmem:[%s7 + $0x2e8] sm:$0xff]
    %v1364 = vld [vmem:[%s7 + $0x2f0] sm:$0xff]
    %v1365 = vld [vmem:[%s7 + $0x2f8] sm:$0xff]
    %v1366 = vld [vmem:[%s7 + $0x300] sm:$0xff]
    %v1367 = vld [vmem:[%s7 + $0x308] sm:$0xff]
    %v1368 = vld [vmem:[%s7 + $0x310] sm:$0xff]
    %v1369 = vld [vmem:[%s7 + $0x318] sm:$0xff]
    %v1370 = vld [vmem:[%s7 + $0x320] sm:$0xff]
    %v1371 = vld [vmem:[%s7 + $0x328] sm:$0xff]
    %v1372 = vld [vmem:[%s7 + $0x330] sm:$0xff]
    %v1373 = vld [vmem:[%s7 + $0x338] sm:$0xff]
    %v1374 = vld [vmem:[%s7 + $0x340] sm:$0xff]
    %v1375 = vld [vmem:[%s7 + $0x348] sm:$0xff]
    %v1376 = vld [vmem:[%s7 + $0x350] sm:$0xff]
    %v1377 = vld [vmem:[%s7 + $0x358] sm:$0xff]
    %v1378 = vld [vmem:[%s7 + $0x360] sm:$0xff]
    %v1379 = vld [vmem:[%s7 + $0x368] sm:$0xff]
    %v1380 = vld [vmem:[%s7 + $0x370] sm:$0xff]
    %v1381 = vld [vmem:[%s7 + $0x378] sm:$0xff]
    %v1382 = vld [vmem:[%s7 + $0x380] sm:$0xff]
    %v1383 = vld [vmem:[%s7 + $0x388] sm:$0xff]
    %v1384 = vld [vmem:[%s7 + $0x390] sm:$0xff]
    %v1385 = vld [vmem:[%s7 + $0x398] sm:$0xff]
    %v1386 = vld [vmem:[%s7 + $0x3a0] sm:$0xff]
    %v1387 = vld [vmem:[%s7 + $0x3a8] sm:$0xff]
    %v1388 = vld [vmem:[%s7 + $0x3b0] sm:$0xff]
    %v1389 = vld [vmem:[%s7 + $0x3b8] sm:$0xff]
    %v1390 = vld [vmem:[%s7 + $0x3c0] sm:$0xff]
    %v1391 = vld [vmem:[%s7 + $0x3c8] sm:$0xff]
    %v1392 = vld [vmem:[%s7 + $0x3d0] sm:$0xff]
    %v1393 = vld [vmem:[%s7 + $0x3d8] sm:$0xff]
    %v1394 = vld [vmem:[%s7 + $0x3e0] sm:$0xff]
    %v1395 = vld [vmem:[%s7 + $0x3e8] sm:$0xff]
    %v1396 = vld [vmem:[%s7 + $0x3f0] sm:$0xff]
    %v1397 = vld [vmem:[%s7 + $0x3f8] sm:$0xff]
    %v1398 = vld [vmem:[%s7 + $0x400] sm:$0xff]
    %v1399 = vld [vmem:[%s7 + $0x408] sm:$0xff]
    %v1400 = vld [vmem:[%s7 + $0x410] sm:$0xff]
    %v1401 = vld [vmem:[%s7 + $0x418] sm:$0xff]
    %v1402 = vld [vmem:[%s7 + $0x420] sm:$0xff]
    %v1403 = vld [vmem:[%s7 + $0x428] sm:$0xff]
    %v1404 = vld [vmem:[%s7 + $0x430] sm:$0xff]
    %v1405 = vld [vmem:[%s7 + $0x438] sm:$0xff]
    %v1406 = vld [vmem:[%s7 + $0x440] sm:$0xff]
    %v1407 = vld [vmem:[%s7 + $0x448] sm:$0xff]
    %v1408 = vld [vmem:[%s7 + $0x450] sm:$0xff]
    %v1409 = vld [vmem:[%s7 + $0x458] sm:$0xff]
    %v1410 = vld [vmem:[%s7 + $0x460] sm:$0xff]
    %v1411 = vld [vmem:[%s7 + $0x468] sm:$0xff]
    %v1412 = vld [vmem:[%s7 + $0x470] sm:$0xff]
    %v1413 = vld [vmem:[%s7 + $0x478] sm:$0xff]
    %v1414 = vld [vmem:[%s7 + $0x480] sm:$0xff]
    %v1415 = vld [vmem:[%s7 + $0x488] sm:$0xff]
    %v1416 = vld [vmem:[%s7 + $0x490] sm:$0xff]
    %v1417 = vld [vmem:[%s7 + $0x498] sm:$0xff]
    %v1418 = vld [vmem:[%s7 + $0x4a0] sm:$0xff]
    %v1419 = vld [vmem:[%s7 + $0x4a8] sm:$0xff]
    %v1420 = vld [vmem:[%s7 + $0x4b0] sm:$0xff]
    %v1421 = vld [vmem:[%s7 + $0x4b8] sm:$0xff]
    %v1422 = vld [vmem:[%s7 + $0x4c0] sm:$0xff]
    %v1423 = vld [vmem:[%s7 + $0x4c8] sm:$0xff]
    %v1424 = vld [vmem:[%s7 + $0x4d0] sm:$0xff]
    %v1425 = vld [vmem:[%s7 + $0x4d8] sm:$0xff]
    %v1426 = vld [vmem:[%s7 + $0x4e0] sm:$0xff]
    %v1427 = vld [vmem:[%s7 + $0x4e8] sm:$0xff]
    %v1428 = vld [vmem:[%s7 + $0x4f0] sm:$0xff]
    %v1429 = vld [vmem:[%s7 + $0x4f8] sm:$0xff]
    %v1430 = vld [vmem:[%s7 + $0x500] sm:$0xff]
    %v1431 = vld [vmem:[%s7 + $0x508] sm:$0xff]
    %v1432 = vld [vmem:[%s7 + $0x510] sm:$0xff]
    %v1433 = vld [vmem:[%s7 + $0x518] sm:$0xff]
    %v1434 = vld [vmem:[%s7 + $0x520] sm:$0xff]
    %v1435 = vld [vmem:[%s7 + $0x528] sm:$0xff]
    %v1436 = vld [vmem:[%s7 + $0x530] sm:$0xff]
    %v1437 = vld [vmem:[%s7 + $0x538] sm:$0xff]
    %v1438 = vld [vmem:[%s7 + $0x540] sm:$0xff]
    %v1439 = vld [vmem:[%s7 + $0x548] sm:$0xff]
    %v1440 = vld [vmem:[%s7 + $0x550] sm:$0xff]
    %v1441 = vld [vmem:[%s7 + $0x558] sm:$0xff]
    %v1442 = vld [vmem:[%s7 + $0x560] sm:$0xff]
    %v1443 = vld [vmem:[%s7 + $0x568] sm:$0xff]
    %v1444 = vld [vmem:[%s7 + $0x570] sm:$0xff]
    %v1445 = vld [vmem:[%s7 + $0x578] sm:$0xff]
    %v1446 = vld [vmem:[%s7 + $0x580] sm:$0xff]
    %v1447 = vld [vmem:[%s7 + $0x588] sm:$0xff]
    %v1448 = vld [vmem:[%s7 + $0x590] sm:$0xff]
    %v1449 = vld [vmem:[%s7 + $0x598] sm:$0xff]
    %v1450 = vld [vmem:[%s7 + $0x5a0] sm:$0xff]
    %v1451 = vld [vmem:[%s7 + $0x5a8] sm:$0xff]
    %v1452 = vld [vmem:[%s7 + $0x5b0] sm:$0xff]
    %v1453 = vld [vmem:[%s7 + $0x5b8] sm:$0xff]
    %v1454 = vld [vmem:[%s7 + $0x5c0] sm:$0xff]
    %v1455 = vld [vmem:[%s7 + $0x5c8] sm:$0xff]
    %v1456 = vld [vmem:[%s7 + $0x5d0] sm:$0xff]
    %v1457 = vld [vmem:[%s7 + $0x5d8] sm:$0xff]
    %v1458 = vld [vmem:[%s7 + $0x5e0] sm:$0xff]
    %v1459 = vld [vmem:[%s7 + $0x5e8] sm:$0xff]
    %v1460 = vld [vmem:[%s7 + $0x5f0] sm:$0xff]
    %v1461 = vld [vmem:[%s7 + $0x5f8] sm:$0xff]
    %v1462 = vld [vmem:[%s7 + $0x600] sm:$0xff]
    %v1463 = vld [vmem:[%s7 + $0x608] sm:$0xff]
    %v1464 = vld [vmem:[%s7 + $0x610] sm:$0xff]
    %v1465 = vld [vmem:[%s7 + $0x618] sm:$0xff]
    %v1466 = vld [vmem:[%s7 + $0x620] sm:$0xff]
    %v1467 = vld [vmem:[%s7 + $0x628] sm:$0xff]
    %v1468 = vld [vmem:[%s7 + $0x630] sm:$0xff]
    %v1469 = vld [vmem:[%s7 + $0x638] sm:$0xff]
    %v1470 = vld [vmem:[%s7 + $0x640] sm:$0xff]
    %v1471 = vld [vmem:[%s7 + $0x648] sm:$0xff]
    %v1472 = vld [vmem:[%s7 + $0x650] sm:$0xff]
    %v1473 = vld [vmem:[%s7 + $0x658] sm:$0xff]
    %v1474 = vld [vmem:[%s7 + $0x660] sm:$0xff]
    %v1475 = vld [vmem:[%s7 + $0x668] sm:$0xff]
    %v1476 = vld [vmem:[%s7 + $0x670] sm:$0xff]
    %v1477 = vld [vmem:[%s7 + $0x678] sm:$0xff]
    %v1478 = vld [vmem:[%s7 + $0x680] sm:$0xff]
    %v1479 = vld [vmem:[%s7 + $0x688] sm:$0xff]
    %v1480 = vld [vmem:[%s7 + $0x690] sm:$0xff]
    %v1481 = vld [vmem:[%s7 + $0x698] sm:$0xff]
    %v1482 = vld [vmem:[%s7 + $0x6a0] sm:$0xff]
    %v1483 = vld [vmem:[%s7 + $0x6a8] sm:$0xff]
    %v1484 = vld [vmem:[%s7 + $0x6b0] sm:$0xff]
    %v1485 = vld [vmem:[%s7 + $0x6b8] sm:$0xff]
    %v1486 = vld [vmem:[%s7 + $0x6c0] sm:$0xff]
    %v1487 = vld [vmem:[%s7 + $0x6c8] sm:$0xff]
    %v1488 = vld [vmem:[%s7 + $0x6d0] sm:$0xff]
    %v1489 = vld [vmem:[%s7 + $0x6d8] sm:$0xff]
    %v1490 = vld [vmem:[%s7 + $0x6e0] sm:$0xff]
    %v1491 = vld [vmem:[%s7 + $0x6e8] sm:$0xff]
    %v1492 = vld [vmem:[%s7 + $0x6f0] sm:$0xff]
    %v1493 = vld [vmem:[%s7 + $0x6f8] sm:$0xff]
    %v1494 = vld [vmem:[%s7 + $0x700] sm:$0xff]
    %v1495 = vld [vmem:[%s7 + $0x708] sm:$0xff]
    %v1496 = vld [vmem:[%s7 + $0x710] sm:$0xff]
    %v1497 = vld [vmem:[%s7 + $0x718] sm:$0xff]
    %v1498 = vld [vmem:[%s7 + $0x720] sm:$0xff]
    %v1499 = vld [vmem:[%s7 + $0x728] sm:$0xff]
    %v1500 = vld [vmem:[%s7 + $0x730] sm:$0xff]
    %v1501 = vld [vmem:[%s7 + $0x738] sm:$0xff]
    %v1502 = vld [vmem:[%s7 + $0x740] sm:$0xff]
    %v1503 = vld [vmem:[%s7 + $0x748] sm:$0xff]
    %v1504 = vld [vmem:[%s7 + $0x750] sm:$0xff]
    %v1505 = vld [vmem:[%s7 + $0x758] sm:$0xff]
    %v1506 = vld [vmem:[%s7 + $0x760] sm:$0xff]
    %v1507 = vld [vmem:[%s7 + $0x768] sm:$0xff]
    %v1508 = vld [vmem:[%s7 + $0x770] sm:$0xff]
    %v1509 = vld [vmem:[%s7 + $0x778] sm:$0xff]
    %v1510 = vld [vmem:[%s7 + $0x780] sm:$0xff]
    %v1511 = vld [vmem:[%s7 + $0x788] sm:$0xff]
    %v1512 = vld [vmem:[%s7 + $0x790] sm:$0xff]
    %v1513 = vld [vmem:[%s7 + $0x798] sm:$0xff]
    %v1514 = vld [vmem:[%s7 + $0x7a0] sm:$0xff]
    %v1515 = vld [vmem:[%s7 + $0x7a8] sm:$0xff]
    %v1516 = vld [vmem:[%s7 + $0x7b0] sm:$0xff]
    %v1517 = vld [vmem:[%s7 + $0x7b8] sm:$0xff]
    %v1518 = vld [vmem:[%s7 + $0x7c0] sm:$0xff]
    %v1519 = vld [vmem:[%s7 + $0x7c8] sm:$0xff]
    %v1520 = vld [vmem:[%s7 + $0x7d0] sm:$0xff]
    %v1521 = vld [vmem:[%s7 + $0x7d8] sm:$0xff]
    %v1522 = vld [vmem:[%s7 + $0x7e0] sm:$0xff]
    %v1523 = vld [vmem:[%s7 + $0x7e8] sm:$0xff]
    %v1524 = vld [vmem:[%s7 + $0x7f0] sm:$0xff]
    %v1525 = vld [vmem:[%s7 + $0x7f8] sm:$0xff]
    %v1526 = vld [vmem:[%s7 + $0x800] sm:$0xff]
    %v1527 = vld [vmem:[%s7 + $0x808] sm:$0xff]
    %v1528 = vld [vmem:[%s7 + $0x810] sm:$0xff]
    %v1529 = vld [vmem:[%s7 + $0x818] sm:$0xff]
    %v1530 = vld [vmem:[%s7 + $0x820] sm:$0xff]
    %v1531 = vld [vmem:[%s7 + $0x828] sm:$0xff]
    %v1532 = vld [vmem:[%s7 + $0x830] sm:$0xff]
    %v1533 = vld [vmem:[%s7 + $0x838] sm:$0xff]
    %v1534 = vld [vmem:[%s7 + $0x840] sm:$0xff]
    %v1535 = vld [vmem:[%s7 + $0x848] sm:$0xff]
    %v1536 = vld [vmem:[%s7 + $0x850] sm:$0xff]
    %v1537 = vld [vmem:[%s7 + $0x858] sm:$0xff]
    %v1538 = vld [vmem:[%s7 + $0x860] sm:$0xff]
    %v1539 = vld [vmem:[%s7 + $0x868] sm:$0xff]
    %v1540 = vld [vmem:[%s7 + $0x870] sm:$0xff]
    %v1541 = vld [vmem:[%s7 + $0x878] sm:$0xff]
    %v1542 = vld [vmem:[%s7 + $0x880] sm:$0xff]
    %v1543 = vld [vmem:[%s7 + $0x888] sm:$0xff]
    %v1544 = vld [vmem:[%s7 + $0x890] sm:$0xff]
    %v1545 = vld [vmem:[%s7 + $0x898] sm:$0xff]
    %v1546 = vld [vmem:[%s7 + $0x8a0] sm:$0xff]
    %v1547 = vld [vmem:[%s7 + $0x8a8] sm:$0xff]
    %v1548 = vld [vmem:[%s7 + $0x8b0] sm:$0xff]
    %v1549 = vld [vmem:[%s7 + $0x8b8] sm:$0xff]
    %v1550 = vld [vmem:[%s7 + $0x8c0] sm:$0xff]
    %v1551 = vld [vmem:[%s7 + $0x8c8] sm:$0xff]
    %v1552 = vld [vmem:[%s7 + $0x8d0] sm:$0xff]
    %v1553 = vld [vmem:[%s7 + $0x8d8] sm:$0xff]
    %v1554 = vld [vmem:[%s7 + $0x8e0] sm:$0xff]
    %v1555 = vld [vmem:[%s7 + $0x8e8] sm:$0xff]
    %v1556 = vld [vmem:[%s7 + $0x8f0] sm:$0xff]
    %v1557 = vld [vmem:[%s7 + $0x8f8] sm:$0xff]
    %v1558 = vld [vmem:[%s7 + $0x900] sm:$0xff]
    %v1559 = vld [vmem:[%s7 + $0x908] sm:$0xff]
    %v1560 = vld [vmem:[%s7 + $0x910] sm:$0xff]
    %v1561 = vld [vmem:[%s7 + $0x918] sm:$0xff]
    %v1562 = vld [vmem:[%s7 + $0x920] sm:$0xff]
    %v1563 = vld [vmem:[%s7 + $0x928] sm:$0xff]
    %v1564 = vld [vmem:[%s7 + $0x930] sm:$0xff]
    %v1565 = vld [vmem:[%s7 + $0x938] sm:$0xff]
    %v1566 = vld [vmem:[%s7 + $0x940] sm:$0xff]
    %v1567 = vld [vmem:[%s7 + $0x948] sm:$0xff]
    %v1568 = vld [vmem:[%s7 + $0x950] sm:$0xff]
    %v1569 = vld [vmem:[%s7 + $0x958] sm:$0xff]
    %v1570 = vld [vmem:[%s7 + $0x960] sm:$0xff]
    %v1571 = vld [vmem:[%s7 + $0x968] sm:$0xff]
    %v1572 = vld [vmem:[%s7 + $0x970] sm:$0xff]
    %v1573 = vld [vmem:[%s7 + $0x978] sm:$0xff]
    %v1574 = vld [vmem:[%s7 + $0x980] sm:$0xff]
    %v1575 = vld [vmem:[%s7 + $0x988] sm:$0xff]
    %v1576 = vld [vmem:[%s7 + $0x990] sm:$0xff]
    %v1577 = vld [vmem:[%s7 + $0x998] sm:$0xff]
    %v1578 = vld [vmem:[%s7 + $0x9a0] sm:$0xff]
    %v1579 = vld [vmem:[%s7 + $0x9a8] sm:$0xff]
    %v1580 = vld [vmem:[%s7 + $0x9b0] sm:$0xff]
    %v1581 = vld [vmem:[%s7 + $0x9b8] sm:$0xff]
    %v1582 = vld [vmem:[%s7 + $0x9c0] sm:$0xff]
    %v1583 = vld [vmem:[%s7 + $0x9c8] sm:$0xff]
    %v1584 = vld [vmem:[%s7 + $0x9d0] sm:$0xff]
    %v1585 = vld [vmem:[%s7 + $0x9d8] sm:$0xff]
    %v1586 = vld [vmem:[%s7 + $0x9e0] sm:$0xff]
    %v1587 = vld [vmem:[%s7 + $0x9e8] sm:$0xff]
    %v1588 = vld [vmem:[%s7 + $0x9f0] sm:$0xff]
    %v1589 = vld [vmem:[%s7 + $0x9f8] sm:$0xff]
    %v1590 = vld [vmem:[%s7 + $0xa00] sm:$0xff]
    %v1591 = vld [vmem:[%s7 + $0xa08] sm:$0xff]
    %v1592 = vld [vmem:[%s7 + $0xa10] sm:$0xff]
    %v1593 = vld [vmem:[%s7 + $0xa18] sm:$0xff]
    %v1594 = vld [vmem:[%s7 + $0xa20] sm:$0xff]
    %v1595 = vld [vmem:[%s7 + $0xa28] sm:$0xff]
    %v1596 = vld [vmem:[%s7 + $0xa30] sm:$0xff]
    %v1597 = vld [vmem:[%s7 + $0xa38] sm:$0xff]
    %v1598 = vld [vmem:[%s7 + $0xa40] sm:$0xff]
    %v1599 = vld [vmem:[%s7 + $0xa48] sm:$0xff]
    %v1600 = vld [vmem:[%s7 + $0xa50] sm:$0xff]
    %v1601 = vld [vmem:[%s7 + $0xa58] sm:$0xff]
    %v1602 = vld [vmem:[%s7 + $0xa60] sm:$0xff]
    %v1603 = vld [vmem:[%s7 + $0xa68] sm:$0xff]
    %v1604 = vld [vmem:[%s7 + $0xa70] sm:$0xff]
    %v1605 = vld [vmem:[%s7 + $0xa78] sm:$0xff]
    %v1606 = vld [vmem:[%s7 + $0xa80] sm:$0xff]
    %v1607 = vld [vmem:[%s7 + $0xa88] sm:$0xff]
    %v1608 = vld [vmem:[%s7 + $0xa90] sm:$0xff]
    %v1609 = vld [vmem:[%s7 + $0xa98] sm:$0xff]
    %v1610 = vld [vmem:[%s7 + $0xaa0] sm:$0xff]
    %v1611 = vld [vmem:[%s7 + $0xaa8] sm:$0xff]
    %v1612 = vld [vmem:[%s7 + $0xab0] sm:$0xff]
    %v1613 = vld [vmem:[%s8] sm:$0x7f]
    %v1615 = vperm.slane %v1613, 0
    %v1616 = vperm.slane %v1613, 1
    %v1617 = vperm.slane %v1613, 2
    %v1618 = vperm.slane %v1613, 3
    %v1619 = vperm.slane %v1613, 4
    %v1620 = vperm.slane %v1613, 5
    %v1621 = vperm.slane %v1613, 6
    %v1630 = vsel %vm1066, %v1269, 0
    %1632 = vmatpush.msra.mxu0 %v1375
    %1633 = vmatpush.msra.mxu0 %v1368
    %1634 = vmatpush.msra.mxu0 %v1361
    %1635 = vmatpush.msra.mxu0 %v1354
    %1636 = vmatpush.msra.mxu0 %v1347
    %1637 = vmatpush.msra.mxu0 %v1340
    %1638 = vmatpush.msra.mxu0 %v1333
    %1639 = vmatpush.msra.mxu0 %v1326
    %1640 = vmatpush.msra.mxu0 %v1319
    %1641 = vmatpush.msra.mxu0 %v1312
    %1642 = vmatpush.msra.mxu0 %v1305
    %1643 = vmatpush.msra.mxu0 %v1298
    %1644 = vmatpush.msra.mxu0 %v1291
    %1645 = vmatpush.msra.mxu0 %v1284
    %1646 = vmatpush.msra.mxu0 %v1277
    %1647 = vmatpush.msra.mxu0 %v1270
    %1648 = vmatmul.f32.gmra.mxu0 %v1266
    %v1649 = vpop.f32.mrf.mxu0
    %v1650 = vadd.f32 %v1615, %v1649
    %1651 = vdwg.mxu0
    %1652 = vmatpush.msra.mxu0 %v1487
    %1653 = vmatpush.msra.mxu0 %v1480
    %1654 = vmatpush.msra.mxu0 %v1473
    %1655 = vmatpush.msra.mxu0 %v1466
    %1656 = vmatpush.msra.mxu0 %v1459
    %1657 = vmatpush.msra.mxu0 %v1452
    %1658 = vmatpush.msra.mxu0 %v1445
    %1659 = vmatpush.msra.mxu0 %v1438
    %1660 = vmatpush.msra.mxu0 %v1431
    %1661 = vmatpush.msra.mxu0 %v1424
    %1662 = vmatpush.msra.mxu0 %v1417
    %1663 = vmatpush.msra.mxu0 %v1410
    %1664 = vmatpush.msra.mxu0 %v1403
    %1665 = vmatpush.msra.mxu0 %v1396
    %1666 = vmatpush.msra.mxu0 %v1389
    %1667 = vmatpush.msra.mxu0 %v1382
    %1668 = vmatmul.f32.gmra.mxu0 %v1267
    %v1669 = vpop.f32.mrf.mxu0
    %v1670 = vadd.f32 %v1650, %v1669
    %1671 = vdwg.mxu0
    %1672 = vmatpush.msra.mxu0 %v1599
    %1673 = vmatpush.msra.mxu0 %v1592
    %1674 = vmatpush.msra.mxu0 %v1585
    %1675 = vmatpush.msra.mxu0 %v1578
    %1676 = vmatpush.msra.mxu0 %v1571
    %1677 = vmatpush.msra.mxu0 %v1564
    %1678 = vmatpush.msra.mxu0 %v1557
    %1679 = vmatpush.msra.mxu0 %v1550
    %1680 = vmatpush.msra.mxu0 %v1543
    %1681 = vmatpush.msra.mxu0 %v1536
    %1682 = vmatpush.msra.mxu0 %v1529
    %1683 = vmatpush.msra.mxu0 %v1522
    %1684 = vmatpush.msra.mxu0 %v1515
    %1685 = vmatpush.msra.mxu0 %v1508
    %1686 = vmatpush.msra.mxu0 %v1501
    %1687 = vmatpush.msra.mxu0 %v1494
    %1688 = vmatmul.f32.gmra.mxu0 %v1268
    %v1689 = vpop.f32.mrf.mxu0
    %v1690 = vadd.f32 %v1670, %v1689
    %1691 = vdwg.mxu0
    %1692 = vmatpush.msra.mxu0 0.0
    %1693 = vmatpush.msra.mxu0 0.0
    %1694 = vmatpush.msra.mxu0 0.0
    %1695 = vmatpush.msra.mxu0 0.0
    %1696 = vmatpush.msra.mxu0 0.0
    %1697 = vmatpush.msra.mxu0 0.0
    %1698 = vmatpush.msra.mxu0 0.0
    %1699 = vmatpush.msra.mxu0 0.0
    %1700 = vmatpush.msra.mxu0 0.0
    %1701 = vmatpush.msra.mxu0 0.0
    %1702 = vmatpush.msra.mxu0 0.0
    %1703 = vmatpush.msra.mxu0 0.0
    %1704 = vmatpush.msra.mxu0 0.0
    %1705 = vmatpush.msra.mxu0 0.0
    %1706 = vmatpush.msra.mxu0 0.0
    %1707 = vmatpush.msra.mxu0 %v1606
    %1708 = vmatmul.f32.gmra.mxu0 %v1630
    %v1709 = vpop.f32.mrf.mxu0
    %v1710 = vadd.f32 %v1690, %v1709
    %1711 = vdwg.mxu0
    %1712 = vmatpush.msra.mxu0 %v1376
    %1713 = vmatpush.msra.mxu0 %v1369
    %1714 = vmatpush.msra.mxu0 %v1362
    %1715 = vmatpush.msra.mxu0 %v1355
    %1716 = vmatpush.msra.mxu0 %v1348
    %1717 = vmatpush.msra.mxu0 %v1341
    %1718 = vmatpush.msra.mxu0 %v1334
    %1719 = vmatpush.msra.mxu0 %v1327
    %1720 = vmatpush.msra.mxu0 %v1320
    %1721 = vmatpush.msra.mxu0 %v1313
    %1722 = vmatpush.msra.mxu0 %v1306
    %1723 = vmatpush.msra.mxu0 %v1299
    %1724 = vmatpush.msra.mxu0 %v1292
    %1725 = vmatpush.msra.mxu0 %v1285
    %1726 = vmatpush.msra.mxu0 %v1278
    %1727 = vmatpush.msra.mxu0 %v1271
    %1728 = vmatmul.f32.gmra.mxu0 %v1266
    %v1729 = vpop.f32.mrf.mxu0
    %v1730 = vadd.f32 %v1616, %v1729
    %1731 = vdwg.mxu0
    %1732 = vmatpush.msra.mxu0 %v1488
    %1733 = vmatpush.msra.mxu0 %v1481
    %1734 = vmatpush.msra.mxu0 %v1474
    %1735 = vmatpush.msra.mxu0 %v1467
    %1736 = vmatpush.msra.mxu0 %v1460
    %1737 = vmatpush.msra.mxu0 %v1453
    %1738 = vmatpush.msra.mxu0 %v1446
    %1739 = vmatpush.msra.mxu0 %v1439
    %1740 = vmatpush.msra.mxu0 %v1432
    %1741 = vmatpush.msra.mxu0 %v1425
    %1742 = vmatpush.msra.mxu0 %v1418
    %1743 = vmatpush.msra.mxu0 %v1411
    %1744 = vmatpush.msra.mxu0 %v1404
    %1745 = vmatpush.msra.mxu0 %v1397
    %1746 = vmatpush.msra.mxu0 %v1390
    %1747 = vmatpush.msra.mxu0 %v1383
    %1748 = vmatmul.f32.gmra.mxu0 %v1267
    %v1749 = vpop.f32.mrf.mxu0
    %v1750 = vadd.f32 %v1730, %v1749
    %1751 = vdwg.mxu0
    %1752 = vmatpush.msra.mxu0 %v1600
    %1753 = vmatpush.msra.mxu0 %v1593
    %1754 = vmatpush.msra.mxu0 %v1586
    %1755 = vmatpush.msra.mxu0 %v1579
    %1756 = vmatpush.msra.mxu0 %v1572
    %1757 = vmatpush.msra.mxu0 %v1565
    %1758 = vmatpush.msra.mxu0 %v1558
    %1759 = vmatpush.msra.mxu0 %v1551
    %1760 = vmatpush.msra.mxu0 %v1544
    %1761 = vmatpush.msra.mxu0 %v1537
    %1762 = vmatpush.msra.mxu0 %v1530
    %1763 = vmatpush.msra.mxu0 %v1523
    %1764 = vmatpush.msra.mxu0 %v1516
    %1765 = vmatpush.msra.mxu0 %v1509
    %1766 = vmatpush.msra.mxu0 %v1502
    %1767 = vmatpush.msra.mxu0 %v1495
    %1768 = vmatmul.f32.gmra.mxu0 %v1268
    %v1769 = vpop.f32.mrf.mxu0
    %v1770 = vadd.f32 %v1750, %v1769
    %1771 = vdwg.mxu0
    %1772 = vmatpush.msra.mxu0 0.0
    %1773 = vmatpush.msra.mxu0 0.0
    %1774 = vmatpush.msra.mxu0 0.0
    %1775 = vmatpush.msra.mxu0 0.0
    %1776 = vmatpush.msra.mxu0 0.0
    %1777 = vmatpush.msra.mxu0 0.0
    %1778 = vmatpush.msra.mxu0 0.0
    %1779 = vmatpush.msra.mxu0 0.0
    %1780 = vmatpush.msra.mxu0 0.0
    %1781 = vmatpush.msra.mxu0 0.0
    %1782 = vmatpush.msra.mxu0 0.0
    %1783 = vmatpush.msra.mxu0 0.0
    %1784 = vmatpush.msra.mxu0 0.0
    %1785 = vmatpush.msra.mxu0 0.0
    %1786 = vmatpush.msra.mxu0 0.0
    %1787 = vmatpush.msra.mxu0 %v1607
    %1788 = vmatmul.f32.gmra.mxu0 %v1630
    %v1789 = vpop.f32.mrf.mxu0
    %v1790 = vadd.f32 %v1770, %v1789
    %1791 = vdwg.mxu0
    %1792 = vmatpush.msra.mxu0 %v1377
    %1793 = vmatpush.msra.mxu0 %v1370
    %1794 = vmatpush.msra.mxu0 %v1363
    %1795 = vmatpush.msra.mxu0 %v1356
    %1796 = vmatpush.msra.mxu0 %v1349
    %1797 = vmatpush.msra.mxu0 %v1342
    %1798 = vmatpush.msra.mxu0 %v1335
    %1799 = vmatpush.msra.mxu0 %v1328
    %1800 = vmatpush.msra.mxu0 %v1321
    %1801 = vmatpush.msra.mxu0 %v1314
    %1802 = vmatpush.msra.mxu0 %v1307
    %1803 = vmatpush.msra.mxu0 %v1300
    %1804 = vmatpush.msra.mxu0 %v1293
    %1805 = vmatpush.msra.mxu0 %v1286
    %1806 = vmatpush.msra.mxu0 %v1279
    %1807 = vmatpush.msra.mxu0 %v1272
    %1808 = vmatmul.f32.gmra.mxu0 %v1266
    %v1809 = vpop.f32.mrf.mxu0
    %v1810 = vadd.f32 %v1617, %v1809
    %1811 = vdwg.mxu0
    %1812 = vmatpush.msra.mxu0 %v1489
    %1813 = vmatpush.msra.mxu0 %v1482
    %1814 = vmatpush.msra.mxu0 %v1475
    %1815 = vmatpush.msra.mxu0 %v1468
    %1816 = vmatpush.msra.mxu0 %v1461
    %1817 = vmatpush.msra.mxu0 %v1454
    %1818 = vmatpush.msra.mxu0 %v1447
    %1819 = vmatpush.msra.mxu0 %v1440
    %1820 = vmatpush.msra.mxu0 %v1433
    %1821 = vmatpush.msra.mxu0 %v1426
    %1822 = vmatpush.msra.mxu0 %v1419
    %1823 = vmatpush.msra.mxu0 %v1412
    %1824 = vmatpush.msra.mxu0 %v1405
    %1825 = vmatpush.msra.mxu0 %v1398
    %1826 = vmatpush.msra.mxu0 %v1391
    %1827 = vmatpush.msra.mxu0 %v1384
    %1828 = vmatmul.f32.gmra.mxu0 %v1267
    %v1829 = vpop.f32.mrf.mxu0
    %v1830 = vadd.f32 %v1810, %v1829
    %1831 = vdwg.mxu0
    %1832 = vmatpush.msra.mxu0 %v1601
    %1833 = vmatpush.msra.mxu0 %v1594
    %1834 = vmatpush.msra.mxu0 %v1587
    %1835 = vmatpush.msra.mxu0 %v1580
    %1836 = vmatpush.msra.mxu0 %v1573
    %1837 = vmatpush.msra.mxu0 %v1566
    %1838 = vmatpush.msra.mxu0 %v1559
    %1839 = vmatpush.msra.mxu0 %v1552
    %1840 = vmatpush.msra.mxu0 %v1545
    %1841 = vmatpush.msra.mxu0 %v1538
    %1842 = vmatpush.msra.mxu0 %v1531
    %1843 = vmatpush.msra.mxu0 %v1524
    %1844 = vmatpush.msra.mxu0 %v1517
    %1845 = vmatpush.msra.mxu0 %v1510
    %1846 = vmatpush.msra.mxu0 %v1503
    %1847 = vmatpush.msra.mxu0 %v1496
    %1848 = vmatmul.f32.gmra.mxu0 %v1268
    %v1849 = vpop.f32.mrf.mxu0
    %v1850 = vadd.f32 %v1830, %v1849
    %1851 = vdwg.mxu0
    %1852 = vmatpush.msra.mxu0 0.0
    %1853 = vmatpush.msra.mxu0 0.0
    %1854 = vmatpush.msra.mxu0 0.0
    %1855 = vmatpush.msra.mxu0 0.0
    %1856 = vmatpush.msra.mxu0 0.0
    %1857 = vmatpush.msra.mxu0 0.0
    %1858 = vmatpush.msra.mxu0 0.0
    %1859 = vmatpush.msra.mxu0 0.0
    %1860 = vmatpush.msra.mxu0 0.0
    %1861 = vmatpush.msra.mxu0 0.0
    %1862 = vmatpush.msra.mxu0 0.0
    %1863 = vmatpush.msra.mxu0 0.0
    %1864 = vmatpush.msra.mxu0 0.0
    %1865 = vmatpush.msra.mxu0 0.0
    %1866 = vmatpush.msra.mxu0 0.0
    %1867 = vmatpush.msra.mxu0 %v1608
    %1868 = vmatmul.f32.gmra.mxu0 %v1630
    %v1869 = vpop.f32.mrf.mxu0
    %v1870 = vadd.f32 %v1850, %v1869
    %1871 = vdwg.mxu0
    %1872 = vmatpush.msra.mxu0 %v1378
    %1873 = vmatpush.msra.mxu0 %v1371
    %1874 = vmatpush.msra.mxu0 %v1364
    %1875 = vmatpush.msra.mxu0 %v1357
    %1876 = vmatpush.msra.mxu0 %v1350
    %1877 = vmatpush.msra.mxu0 %v1343
    %1878 = vmatpush.msra.mxu0 %v1336
    %1879 = vmatpush.msra.mxu0 %v1329
    %1880 = vmatpush.msra.mxu0 %v1322
    %1881 = vmatpush.msra.mxu0 %v1315
    %1882 = vmatpush.msra.mxu0 %v1308
    %1883 = vmatpush.msra.mxu0 %v1301
    %1884 = vmatpush.msra.mxu0 %v1294
    %1885 = vmatpush.msra.mxu0 %v1287
    %1886 = vmatpush.msra.mxu0 %v1280
    %1887 = vmatpush.msra.mxu0 %v1273
    %1888 = vmatmul.f32.gmra.mxu0 %v1266
    %v1889 = vpop.f32.mrf.mxu0
    %v1890 = vadd.f32 %v1618, %v1889
    %1891 = vdwg.mxu0
    %1892 = vmatpush.msra.mxu0 %v1490
    %1893 = vmatpush.msra.mxu0 %v1483
    %1894 = vmatpush.msra.mxu0 %v1476
    %1895 = vmatpush.msra.mxu0 %v1469
    %1896 = vmatpush.msra.mxu0 %v1462
    %1897 = vmatpush.msra.mxu0 %v1455
    %1898 = vmatpush.msra.mxu0 %v1448
    %1899 = vmatpush.msra.mxu0 %v1441
    %1900 = vmatpush.msra.mxu0 %v1434
    %1901 = vmatpush.msra.mxu0 %v1427
    %1902 = vmatpush.msra.mxu0 %v1420
    %1903 = vmatpush.msra.mxu0 %v1413
    %1904 = vmatpush.msra.mxu0 %v1406
    %1905 = vmatpush.msra.mxu0 %v1399
    %1906 = vmatpush.msra.mxu0 %v1392
    %1907 = vmatpush.msra.mxu0 %v1385
    %1908 = vmatmul.f32.gmra.mxu0 %v1267
    %v1909 = vpop.f32.mrf.mxu0
    %v1910 = vadd.f32 %v1890, %v1909
    %1911 = vdwg.mxu0
    %1912 = vmatpush.msra.mxu0 %v1602
    %1913 = vmatpush.msra.mxu0 %v1595
    %1914 = vmatpush.msra.mxu0 %v1588
    %1915 = vmatpush.msra.mxu0 %v1581
    %1916 = vmatpush.msra.mxu0 %v1574
    %1917 = vmatpush.msra.mxu0 %v1567
    %1918 = vmatpush.msra.mxu0 %v1560
    %1919 = vmatpush.msra.mxu0 %v1553
    %1920 = vmatpush.msra.mxu0 %v1546
    %1921 = vmatpush.msra.mxu0 %v1539
    %1922 = vmatpush.msra.mxu0 %v1532
    %1923 = vmatpush.msra.mxu0 %v1525
    %1924 = vmatpush.msra.mxu0 %v1518
    %1925 = vmatpush.msra.mxu0 %v1511
    %1926 = vmatpush.msra.mxu0 %v1504
    %1927 = vmatpush.msra.mxu0 %v1497
    %1928 = vmatmul.f32.gmra.mxu0 %v1268
    %v1929 = vpop.f32.mrf.mxu0
    %v1930 = vadd.f32 %v1910, %v1929
    %1931 = vdwg.mxu0
    %1932 = vmatpush.msra.mxu0 0.0
    %1933 = vmatpush.msra.mxu0 0.0
    %1934 = vmatpush.msra.mxu0 0.0
    %1935 = vmatpush.msra.mxu0 0.0
    %1936 = vmatpush.msra.mxu0 0.0
    %1937 = vmatpush.msra.mxu0 0.0
    %1938 = vmatpush.msra.mxu0 0.0
    %1939 = vmatpush.msra.mxu0 0.0
    %1940 = vmatpush.msra.mxu0 0.0
    %1941 = vmatpush.msra.mxu0 0.0
    %1942 = vmatpush.msra.mxu0 0.0
    %1943 = vmatpush.msra.mxu0 0.0
    %1944 = vmatpush.msra.mxu0 0.0
    %1945 = vmatpush.msra.mxu0 0.0
    %1946 = vmatpush.msra.mxu0 0.0
    %1947 = vmatpush.msra.mxu0 %v1609
    %1948 = vmatmul.f32.gmra.mxu0 %v1630
    %v1949 = vpop.f32.mrf.mxu0
    %v1950 = vadd.f32 %v1930, %v1949
    %1951 = vdwg.mxu0
    %1952 = vmatpush.msra.mxu0 %v1379
    %1953 = vmatpush.msra.mxu0 %v1372
    %1954 = vmatpush.msra.mxu0 %v1365
    %1955 = vmatpush.msra.mxu0 %v1358
    %1956 = vmatpush.msra.mxu0 %v1351
    %1957 = vmatpush.msra.mxu0 %v1344
    %1958 = vmatpush.msra.mxu0 %v1337
    %1959 = vmatpush.msra.mxu0 %v1330
    %1960 = vmatpush.msra.mxu0 %v1323
    %1961 = vmatpush.msra.mxu0 %v1316
    %1962 = vmatpush.msra.mxu0 %v1309
    %1963 = vmatpush.msra.mxu0 %v1302
    %1964 = vmatpush.msra.mxu0 %v1295
    %1965 = vmatpush.msra.mxu0 %v1288
    %1966 = vmatpush.msra.mxu0 %v1281
    %1967 = vmatpush.msra.mxu0 %v1274
    %1968 = vmatmul.f32.gmra.mxu0 %v1266
    %v1969 = vpop.f32.mrf.mxu0
    %v1970 = vadd.f32 %v1619, %v1969
    %1971 = vdwg.mxu0
    %1972 = vmatpush.msra.mxu0 %v1491
    %1973 = vmatpush.msra.mxu0 %v1484
    %1974 = vmatpush.msra.mxu0 %v1477
    %1975 = vmatpush.msra.mxu0 %v1470
    %1976 = vmatpush.msra.mxu0 %v1463
    %1977 = vmatpush.msra.mxu0 %v1456
    %1978 = vmatpush.msra.mxu0 %v1449
    %1979 = vmatpush.msra.mxu0 %v1442
    %1980 = vmatpush.msra.mxu0 %v1435
    %1981 = vmatpush.msra.mxu0 %v1428
    %1982 = vmatpush.msra.mxu0 %v1421
    %1983 = vmatpush.msra.mxu0 %v1414
    %1984 = vmatpush.msra.mxu0 %v1407
    %1985 = vmatpush.msra.mxu0 %v1400
    %1986 = vmatpush.msra.mxu0 %v1393
    %1987 = vmatpush.msra.mxu0 %v1386
    %1988 = vmatmul.f32.gmra.mxu0 %v1267
    %v1989 = vpop.f32.mrf.mxu0
    %v1990 = vadd.f32 %v1970, %v1989
    %1991 = vdwg.mxu0
    %1992 = vmatpush.msra.mxu0 %v1603
    %1993 = vmatpush.msra.mxu0 %v1596
    %1994 = vmatpush.msra.mxu0 %v1589
    %1995 = vmatpush.msra.mxu0 %v1582
    %1996 = vmatpush.msra.mxu0 %v1575
    %1997 = vmatpush.msra.mxu0 %v1568
    %1998 = vmatpush.msra.mxu0 %v1561
    %1999 = vmatpush.msra.mxu0 %v1554
    %2000 = vmatpush.msra.mxu0 %v1547
    %2001 = vmatpush.msra.mxu0 %v1540
    %2002 = vmatpush.msra.mxu0 %v1533
    %2003 = vmatpush.msra.mxu0 %v1526
    %2004 = vmatpush.msra.mxu0 %v1519
    %2005 = vmatpush.msra.mxu0 %v1512
    %2006 = vmatpush.msra.mxu0 %v1505
    %2007 = vmatpush.msra.mxu0 %v1498
    %2008 = vmatmul.f32.gmra.mxu0 %v1268
    %v2009 = vpop.f32.mrf.mxu0
    %v2010 = vadd.f32 %v1990, %v2009
    %2011 = vdwg.mxu0
    %2012 = vmatpush.msra.mxu0 0.0
    %2013 = vmatpush.msra.mxu0 0.0
    %2014 = vmatpush.msra.mxu0 0.0
    %2015 = vmatpush.msra.mxu0 0.0
    %2016 = vmatpush.msra.mxu0 0.0
    %2017 = vmatpush.msra.mxu0 0.0
    %2018 = vmatpush.msra.mxu0 0.0
    %2019 = vmatpush.msra.mxu0 0.0
    %2020 = vmatpush.msra.mxu0 0.0
    %2021 = vmatpush.msra.mxu0 0.0
    %2022 = vmatpush.msra.mxu0 0.0
    %2023 = vmatpush.msra.mxu0 0.0
    %2024 = vmatpush.msra.mxu0 0.0
    %2025 = vmatpush.msra.mxu0 0.0
    %2026 = vmatpush.msra.mxu0 0.0
    %2027 = vmatpush.msra.mxu0 %v1610
    %2028 = vmatmul.f32.gmra.mxu0 %v1630
    %v2029 = vpop.f32.mrf.mxu0
    %v2030 = vadd.f32 %v2010, %v2029
    %2031 = vdwg.mxu0
    %2032 = vmatpush.msra.mxu0 %v1380
    %2033 = vmatpush.msra.mxu0 %v1373
    %2034 = vmatpush.msra.mxu0 %v1366
    %2035 = vmatpush.msra.mxu0 %v1359
    %2036 = vmatpush.msra.mxu0 %v1352
    %2037 = vmatpush.msra.mxu0 %v1345
    %2038 = vmatpush.msra.mxu0 %v1338
    %2039 = vmatpush.msra.mxu0 %v1331
    %2040 = vmatpush.msra.mxu0 %v1324
    %2041 = vmatpush.msra.mxu0 %v1317
    %2042 = vmatpush.msra.mxu0 %v1310
    %2043 = vmatpush.msra.mxu0 %v1303
    %2044 = vmatpush.msra.mxu0 %v1296
    %2045 = vmatpush.msra.mxu0 %v1289
    %2046 = vmatpush.msra.mxu0 %v1282
    %2047 = vmatpush.msra.mxu0 %v1275
    %2048 = vmatmul.f32.gmra.mxu0 %v1266
    %v2049 = vpop.f32.mrf.mxu0
    %v2050 = vadd.f32 %v1620, %v2049
    %2051 = vdwg.mxu0
    %2052 = vmatpush.msra.mxu0 %v1492
    %2053 = vmatpush.msra.mxu0 %v1485
    %2054 = vmatpush.msra.mxu0 %v1478
    %2055 = vmatpush.msra.mxu0 %v1471
    %2056 = vmatpush.msra.mxu0 %v1464
    %2057 = vmatpush.msra.mxu0 %v1457
    %2058 = vmatpush.msra.mxu0 %v1450
    %2059 = vmatpush.msra.mxu0 %v1443
    %2060 = vmatpush.msra.mxu0 %v1436
    %2061 = vmatpush.msra.mxu0 %v1429
    %2062 = vmatpush.msra.mxu0 %v1422
    %2063 = vmatpush.msra.mxu0 %v1415
    %2064 = vmatpush.msra.mxu0 %v1408
    %2065 = vmatpush.msra.mxu0 %v1401
    %2066 = vmatpush.msra.mxu0 %v1394
    %2067 = vmatpush.msra.mxu0 %v1387
    %2068 = vmatmul.f32.gmra.mxu0 %v1267
    %v2069 = vpop.f32.mrf.mxu0
    %v2070 = vadd.f32 %v2050, %v2069
    %2071 = vdwg.mxu0
    %2072 = vmatpush.msra.mxu0 %v1604
    %2073 = vmatpush.msra.mxu0 %v1597
    %2074 = vmatpush.msra.mxu0 %v1590
    %2075 = vmatpush.msra.mxu0 %v1583
    %2076 = vmatpush.msra.mxu0 %v1576
    %2077 = vmatpush.msra.mxu0 %v1569
    %2078 = vmatpush.msra.mxu0 %v1562
    %2079 = vmatpush.msra.mxu0 %v1555
    %2080 = vmatpush.msra.mxu0 %v1548
    %2081 = vmatpush.msra.mxu0 %v1541
    %2082 = vmatpush.msra.mxu0 %v1534
    %2083 = vmatpush.msra.mxu0 %v1527
    %2084 = vmatpush.msra.mxu0 %v1520
    %2085 = vmatpush.msra.mxu0 %v1513
    %2086 = vmatpush.msra.mxu0 %v1506
    %2087 = vmatpush.msra.mxu0 %v1499
    %2088 = vmatmul.f32.gmra.mxu0 %v1268
    %v2089 = vpop.f32.mrf.mxu0
    %v2090 = vadd.f32 %v2070, %v2089
    %2091 = vdwg.mxu0
    %2092 = vmatpush.msra.mxu0 0.0
    %2093 = vmatpush.msra.mxu0 0.0
    %2094 = vmatpush.msra.mxu0 0.0
    %2095 = vmatpush.msra.mxu0 0.0
    %2096 = vmatpush.msra.mxu0 0.0
    %2097 = vmatpush.msra.mxu0 0.0
    %2098 = vmatpush.msra.mxu0 0.0
    %2099 = vmatpush.msra.mxu0 0.0
    %2100 = vmatpush.msra.mxu0 0.0
    %2101 = vmatpush.msra.mxu0 0.0
    %2102 = vmatpush.msra.mxu0 0.0
    %2103 = vmatpush.msra.mxu0 0.0
    %2104 = vmatpush.msra.mxu0 0.0
    %2105 = vmatpush.msra.mxu0 0.0
    %2106 = vmatpush.msra.mxu0 0.0
    %2107 = vmatpush.msra.mxu0 %v1611
    %2108 = vmatmul.f32.gmra.mxu0 %v1630
    %v2109 = vpop.f32.mrf.mxu0
    %v2110 = vadd.f32 %v2090, %v2109
    %2111 = vdwg.mxu0
    %2112 = vmatpush.msra.mxu0 %v1381
    %2113 = vmatpush.msra.mxu0 %v1374
    %2114 = vmatpush.msra.mxu0 %v1367
    %2115 = vmatpush.msra.mxu0 %v1360
    %2116 = vmatpush.msra.mxu0 %v1353
    %2117 = vmatpush.msra.mxu0 %v1346
    %2118 = vmatpush.msra.mxu0 %v1339
    %2119 = vmatpush.msra.mxu0 %v1332
    %2120 = vmatpush.msra.mxu0 %v1325
    %2121 = vmatpush.msra.mxu0 %v1318
    %2122 = vmatpush.msra.mxu0 %v1311
    %2123 = vmatpush.msra.mxu0 %v1304
    %2124 = vmatpush.msra.mxu0 %v1297
    %2125 = vmatpush.msra.mxu0 %v1290
    %2126 = vmatpush.msra.mxu0 %v1283
    %2127 = vmatpush.msra.mxu0 %v1276
    %2128 = vmatmul.f32.gmra.mxu0 %v1266
    %v2129 = vpop.f32.mrf.mxu0
    %v2130 = vadd.f32 %v1621, %v2129
    %2131 = vdwg.mxu0
    %2132 = vmatpush.msra.mxu0 %v1493
    %2133 = vmatpush.msra.mxu0 %v1486
    %2134 = vmatpush.msra.mxu0 %v1479
    %2135 = vmatpush.msra.mxu0 %v1472
    %2136 = vmatpush.msra.mxu0 %v1465
    %2137 = vmatpush.msra.mxu0 %v1458
    %2138 = vmatpush.msra.mxu0 %v1451
    %2139 = vmatpush.msra.mxu0 %v1444
    %2140 = vmatpush.msra.mxu0 %v1437
    %2141 = vmatpush.msra.mxu0 %v1430
    %2142 = vmatpush.msra.mxu0 %v1423
    %2143 = vmatpush.msra.mxu0 %v1416
    %2144 = vmatpush.msra.mxu0 %v1409
    %2145 = vmatpush.msra.mxu0 %v1402
    %2146 = vmatpush.msra.mxu0 %v1395
    %2147 = vmatpush.msra.mxu0 %v1388
    %2148 = vmatmul.f32.gmra.mxu0 %v1267
    %v2149 = vpop.f32.mrf.mxu0
    %v2150 = vadd.f32 %v2130, %v2149
    %2151 = vdwg.mxu0
    %2152 = vmatpush.msra.mxu0 %v1605
    %2153 = vmatpush.msra.mxu0 %v1598
    %2154 = vmatpush.msra.mxu0 %v1591
    %2155 = vmatpush.msra.mxu0 %v1584
    %2156 = vmatpush.msra.mxu0 %v1577
    %2157 = vmatpush.msra.mxu0 %v1570
    %2158 = vmatpush.msra.mxu0 %v1563
    %2159 = vmatpush.msra.mxu0 %v1556
    %2160 = vmatpush.msra.mxu0 %v1549
    %2161 = vmatpush.msra.mxu0 %v1542
    %2162 = vmatpush.msra.mxu0 %v1535
    %2163 = vmatpush.msra.mxu0 %v1528
    %2164 = vmatpush.msra.mxu0 %v1521
    %2165 = vmatpush.msra.mxu0 %v1514
    %2166 = vmatpush.msra.mxu0 %v1507
    %2167 = vmatpush.msra.mxu0 %v1500
    %2168 = vmatmul.f32.gmra.mxu0 %v1268
    %v2169 = vpop.f32.mrf.mxu0
    %v2170 = vadd.f32 %v2150, %v2169
    %2171 = vdwg.mxu0
    %2172 = vmatpush.msra.mxu0 0.0
    %2173 = vmatpush.msra.mxu0 0.0
    %2174 = vmatpush.msra.mxu0 0.0
    %2175 = vmatpush.msra.mxu0 0.0
    %2176 = vmatpush.msra.mxu0 0.0
    %2177 = vmatpush.msra.mxu0 0.0
    %2178 = vmatpush.msra.mxu0 0.0
    %2179 = vmatpush.msra.mxu0 0.0
    %2180 = vmatpush.msra.mxu0 0.0
    %2181 = vmatpush.msra.mxu0 0.0
    %2182 = vmatpush.msra.mxu0 0.0
    %2183 = vmatpush.msra.mxu0 0.0
    %2184 = vmatpush.msra.mxu0 0.0
    %2185 = vmatpush.msra.mxu0 0.0
    %2186 = vmatpush.msra.mxu0 0.0
    %2187 = vmatpush.msra.mxu0 %v1612
    %2188 = vmatmul.f32.gmra.mxu0 %v1630
    %v2189 = vpop.f32.mrf.mxu0
    %v2190 = vadd.f32 %v2170, %v2189
    %2191 = vdwg.mxu0
    %v2192 = vxor.u32 %v1710, 2147483648
    %v2193 = vxor.u32 %v1790, 2147483648
    %v2194 = vxor.u32 %v1870, 2147483648
    %v2195 = vxor.u32 %v1950, 2147483648
    %v2196 = vxor.u32 %v2030, 2147483648
    %v2197 = vxor.u32 %v2110, 2147483648
    %v2198 = vxor.u32 %v2190, 2147483648
    %v2199 = vmul.f32 %v2192, 1.442695
    %v2200 = vpow.pop %v2199
    %v2201 = vmul.f32 %v2193, 1.442695
    %v2202 = vpow.pop %v2201
    %v2203 = vmul.f32 %v2194, 1.442695
    %v2204 = vpow.pop %v2203
    %v2205 = vmul.f32 %v2195, 1.442695
    %v2206 = vpow.pop %v2205
    %v2207 = vmul.f32 %v2196, 1.442695
    %v2208 = vpow.pop %v2207
    %v2209 = vmul.f32 %v2197, 1.442695
    %v2210 = vpow.pop %v2209
    %v2211 = vmul.f32 %v2198, 1.442695
    %v2212 = vpow.pop %v2211
    %v2213 = vadd.f32 %v2200, 1.0
    %v2214 = vadd.f32 %v2202, 1.0
    %v2215 = vadd.f32 %v2204, 1.0
    %v2216 = vadd.f32 %v2206, 1.0
    %v2217 = vadd.f32 %v2208, 1.0
    %v2218 = vadd.f32 %v2210, 1.0
    %v2219 = vadd.f32 %v2212, 1.0
    %v2220 = vrcp.pop %v2213
    %v2221 = vmul.f32 %v2213, %v2220
    %v2222 = vsub.f32 1.0, %v2221
    %v2223 = vmul.f32 %v2220, %v2222
    %v2224 = vadd.f32 %v2220, %v2223
    %vm2225 = vweird.f32 %v2213
    %vm2226 = vweird.f32 %v2220
    %vm2227 = vmor %vm2225, %vm2226
    %v2228 = vsel %vm2227, %v2220, %v2224
    %v2229 = vand.u32 2147483647, %v2213
    %vm2230 = vcmp.eq.f32.partialorder %v2229, 8.507059e+37
    %v2231 = vand.u32 %v2213, 2147483648
    %v2232 = vor.u32 1.1754944e-38, %v2231
    %v2233 = vsel %vm2230, %v2232, %v2228
    %v2234 = vmul.f32 1.0, %v2233
    %v2235 = vrcp.pop %v2214
    %v2236 = vmul.f32 %v2214, %v2235
    %v2237 = vsub.f32 1.0, %v2236
    %v2238 = vmul.f32 %v2235, %v2237
    %v2239 = vadd.f32 %v2235, %v2238
    %vm2240 = vweird.f32 %v2214
    %vm2241 = vweird.f32 %v2235
    %vm2242 = vmor %vm2240, %vm2241
    %v2243 = vsel %vm2242, %v2235, %v2239
    %v2244 = vand.u32 2147483647, %v2214
    %vm2245 = vcmp.eq.f32.partialorder %v2244, 8.507059e+37
    %v2246 = vand.u32 %v2214, 2147483648
    %v2247 = vor.u32 1.1754944e-38, %v2246
    %v2248 = vsel %vm2245, %v2247, %v2243
    %v2249 = vmul.f32 1.0, %v2248
    %v2250 = vrcp.pop %v2215
    %v2251 = vmul.f32 %v2215, %v2250
    %v2252 = vsub.f32 1.0, %v2251
    %v2253 = vmul.f32 %v2250, %v2252
    %v2254 = vadd.f32 %v2250, %v2253
    %vm2255 = vweird.f32 %v2215
    %vm2256 = vweird.f32 %v2250
    %vm2257 = vmor %vm2255, %vm2256
    %v2258 = vsel %vm2257, %v2250, %v2254
    %v2259 = vand.u32 2147483647, %v2215
    %vm2260 = vcmp.eq.f32.partialorder %v2259, 8.507059e+37
    %v2261 = vand.u32 %v2215, 2147483648
    %v2262 = vor.u32 1.1754944e-38, %v2261
    %v2263 = vsel %vm2260, %v2262, %v2258
    %v2264 = vmul.f32 1.0, %v2263
    %v2265 = vrcp.pop %v2216
    %v2266 = vmul.f32 %v2216, %v2265
    %v2267 = vsub.f32 1.0, %v2266
    %v2268 = vmul.f32 %v2265, %v2267
    %v2269 = vadd.f32 %v2265, %v2268
    %vm2270 = vweird.f32 %v2216
    %vm2271 = vweird.f32 %v2265
    %vm2272 = vmor %vm2270, %vm2271
    %v2273 = vsel %vm2272, %v2265, %v2269
    %v2274 = vand.u32 2147483647, %v2216
    %vm2275 = vcmp.eq.f32.partialorder %v2274, 8.507059e+37
    %v2276 = vand.u32 %v2216, 2147483648
    %v2277 = vor.u32 1.1754944e-38, %v2276
    %v2278 = vsel %vm2275, %v2277, %v2273
    %v2279 = vmul.f32 1.0, %v2278
    %v2280 = vrcp.pop %v2217
    %v2281 = vmul.f32 %v2217, %v2280
    %v2282 = vsub.f32 1.0, %v2281
    %v2283 = vmul.f32 %v2280, %v2282
    %v2284 = vadd.f32 %v2280, %v2283
    %vm2285 = vweird.f32 %v2217
    %vm2286 = vweird.f32 %v2280
    %vm2287 = vmor %vm2285, %vm2286
    %v2288 = vsel %vm2287, %v2280, %v2284
    %v2289 = vand.u32 2147483647, %v2217
    %vm2290 = vcmp.eq.f32.partialorder %v2289, 8.507059e+37
    %v2291 = vand.u32 %v2217, 2147483648
    %v2292 = vor.u32 1.1754944e-38, %v2291
    %v2293 = vsel %vm2290, %v2292, %v2288
    %v2294 = vmul.f32 1.0, %v2293
    %v2295 = vrcp.pop %v2218
    %v2296 = vmul.f32 %v2218, %v2295
    %v2297 = vsub.f32 1.0, %v2296
    %v2298 = vmul.f32 %v2295, %v2297
    %v2299 = vadd.f32 %v2295, %v2298
    %vm2300 = vweird.f32 %v2218
    %vm2301 = vweird.f32 %v2295
    %vm2302 = vmor %vm2300, %vm2301
    %v2303 = vsel %vm2302, %v2295, %v2299
    %v2304 = vand.u32 2147483647, %v2218
    %vm2305 = vcmp.eq.f32.partialorder %v2304, 8.507059e+37
    %v2306 = vand.u32 %v2218, 2147483648
    %v2307 = vor.u32 1.1754944e-38, %v2306
    %v2308 = vsel %vm2305, %v2307, %v2303
    %v2309 = vmul.f32 1.0, %v2308
    %v2310 = vrcp.pop %v2219
    %v2311 = vmul.f32 %v2219, %v2310
    %v2312 = vsub.f32 1.0, %v2311
    %v2313 = vmul.f32 %v2310, %v2312
    %v2314 = vadd.f32 %v2310, %v2313
    %vm2315 = vweird.f32 %v2219
    %vm2316 = vweird.f32 %v2310
    %vm2317 = vmor %vm2315, %vm2316
    %v2318 = vsel %vm2317, %v2310, %v2314
    %v2319 = vand.u32 2147483647, %v2219
    %vm2320 = vcmp.eq.f32.partialorder %v2319, 8.507059e+37
    %v2321 = vand.u32 %v2219, 2147483648
    %v2322 = vor.u32 1.1754944e-38, %v2321
    %v2323 = vsel %vm2320, %v2322, %v2318
    %v2324 = vmul.f32 1.0, %v2323
    %2325 = vst [vmem:[#allocation2] sm:$0xff] %v2234
    %2326 = vst [vmem:[#allocation2 + $0x8] sm:$0xff] %v2249
    %2327 = vst [vmem:[#allocation2 + $0x10] sm:$0xff] %v2264
    %2328 = vst [vmem:[#allocation2 + $0x18] sm:$0xff] %v2279
    %2329 = vst [vmem:[#allocation2 + $0x20] sm:$0xff] %v2294
    %2330 = vst [vmem:[#allocation2 + $0x28] sm:$0xff] %v2309
    %2331 = vst.msk [vmem:[#allocation2 + $0x30] sm:$0xff] %vm445, %v2324
    %2332 = vst.msk [vmem:[#allocation4] sm:$0xff] %vm1169, %v1150
    // Predicated region
    $region38: #{tpu_custom_call.1} parent=1 // pred_check
      _
    $region39: #{tpu_custom_call.1} parent=1 // pred_check_branch
      %2334 = sbr.rel (0) target = $region41
    $region40: #{tpu_custom_call.1} parent=1 // pred_region
      %2336 = vsyncadd [#allocation3], 0
      %s2338 = sshll.u32 [#allocation2], 4
      %s2339 = int_to_ptr.vmem [resolvable:$true] %s2338
      %s2340 = sshll.u32 %s9, 4
      %s2341 = int_to_ptr.hbm [resolvable:$true] %s2340
      %2343 = dma.vmem_to_hbm [thread:$0]  %s2339, 896, %s2341, [#allocation3]
    $region41: #{tpu_custom_call.1} parent=1 // pred_fallthru
      _
    // Predicated region
    $region42: #{tpu_custom_call.1} parent=1 // pred_check
      _
    $region43: #{tpu_custom_call.1} parent=1 // pred_check_branch
      %2345 = sbr.rel (0) target = $region45
    $region44: #{tpu_custom_call.1} parent=1 // pred_region
      %2347 = vsyncadd [#allocation5], 0
      %s2349 = sshll.u32 [#allocation4], 4
      %s2350 = int_to_ptr.vmem [resolvable:$true] %s2349
      %s2351 = sshll.u32 %s10, 4
      %s2352 = int_to_ptr.hbm [resolvable:$true] %s2351
      %2354 = dma.vmem_to_hbm [thread:$0]  %s2350, 128, %s2352, [#allocation5]
    $region45: #{tpu_custom_call.1} parent=1 // pred_fallthru
      _
    // Predicated region
    $region46: #{tpu_custom_call.1} parent=1 // pred_check
      _
    $region47: #{tpu_custom_call.1} parent=1 // pred_check_branch
      %2356 = sbr.rel (0) target = $region49
    $region48: #{tpu_custom_call.1} parent=1 // pred_region
      %2358 = dma.done [#allocation3], 896
    $region49: #{tpu_custom_call.1} parent=1 // pred_fallthru
      _
    // Predicated region
    $region50: #{tpu_custom_call.1} parent=1 // pred_check
      _
    $region51: #{tpu_custom_call.1} parent=1 // pred_check_branch
      %2360 = sbr.rel (0) target = $region53
    $region52: #{tpu_custom_call.1} parent=1 // pred_region
      %2362 = dma.done [#allocation5], 128
    $region53: #{tpu_custom_call.1} parent=1 // pred_fallthru
      _
    %2363 = vsyncpa [#allocation3], 1
    %2364 = vsyncpa [#allocation5], 1

// kernel: tpu_custom_call.1
$region0: #{tpu_custom_call.1}
  #allocation0 [shape = 'u32[]', space=smem, size = 0x4, offset = 0x4, fixed_abs, tag = 'smem constant byte address 0x4 - core index']
  #allocation1 [shape = 'u32[72,128]{1,0:T(1,128)}', space=vmem, size = 0x9000, scoped, tag = 'internal scratch']
  %s0 = inlined_call_operand.vmem [shape: f32[8,784], index: 0, kind: input, shape index: {}]
  %s1 = inlined_call_operand.vmem [shape: f32[784,392], index: 1, kind: input, shape index: {}]
  %s2 = inlined_call_operand.vmem [shape: f32[1,392], index: 2, kind: input, shape index: {}]
  %s3 = inlined_call_operand.vmem [shape: f32[392,10], index: 3, kind: input, shape index: {}]
  %s4 = inlined_call_operand.vmem [shape: f32[1,10], index: 4, kind: input, shape index: {}]
  %s5 = inlined_call_operand.vmem [shape: f32[10,392], index: 5, kind: input, shape index: {}]
  %s6 = inlined_call_operand.vmem [shape: f32[1,392], index: 6, kind: input, shape index: {}]
  %s7 = inlined_call_operand.vmem [shape: f32[392,784], index: 7, kind: input, shape index: {}]
  %s8 = inlined_call_operand.vmem [shape: f32[1,784], index: 8, kind: input, shape index: {}]
  %s9 = inlined_call_operand.hbm [shape: f32[8,784], index: 9, kind: output, shape index: {0}]
  %s10 = inlined_call_operand.hbm [shape: f32[8,10], index: 10, kind: output, shape index: {1}]
  %11 = xla_tuple %s9, %s10
  %s12 = sld [smem:[#allocation0]]
  $region54: #{tpu_custom_call.1} parent=0
    _
  %s14 = ssub.s32 1, %s12
  %s15 = scalar_select 0, %s14, %s12
  $region1: #{tpu_custom_call.1} parent=0
    #allocation2 [shape = 'u8[28672]{0}', space=vmem, size = 0x7000, scoped, tag = 'output window, operand 0, single buffered']
    #allocation3 [shape = 's32[1]{0}', space=sflag, size = 0x4, scoped, tag = 'scoped memory for tpu_custom_call.1']
    #allocation4 [shape = 'u8[4096]{0}', space=vmem, size = 0x1000, scoped, tag = 'output window, operand 1, single buffered']
    #allocation5 [shape = 's32[1]{0}', space=sflag, size = 0x4, scoped, tag = 'scoped memory for tpu_custom_call.1']
    %16 = vsyncpa [#allocation3], 0
    %17 = vsyncpa [#allocation5], 0
    // Predicated region
    $region2: #{tpu_custom_call.1} parent=1 // pred_check
      _
    $region3: #{tpu_custom_call.1} parent=1 // pred_check_branch
      %19 = sbr.rel (0) target = $region5
    $region4: #{tpu_custom_call.1} parent=1 // pred_region
      _
    $region5: #{tpu_custom_call.1} parent=1 // pred_fallthru
      _
    // Predicated region
    $region6: #{tpu_custom_call.1} parent=1 // pred_check
      _
    $region7: #{tpu_custom_call.1} parent=1 // pred_check_branch
      %21 = sbr.rel (0) target = $region9
    $region8: #{tpu_custom_call.1} parent=1 // pred_region
      _
    $region9: #{tpu_custom_call.1} parent=1 // pred_fallthru
      _
    // Predicated region
    $region10: #{tpu_custom_call.1} parent=1 // pred_check
      _
    $region11: #{tpu_custom_call.1} parent=1 // pred_check_branch
      %23 = sbr.rel (0) target = $region13
    $region12: #{tpu_custom_call.1} parent=1 // pred_region
      _
    $region13: #{tpu_custom_call.1} parent=1 // pred_fallthru
      _
    // Predicated region
    $region14: #{tpu_custom_call.1} parent=1 // pred_check
      _
    $region15: #{tpu_custom_call.1} parent=1 // pred_check_branch
      %25 = sbr.rel (0) target = $region17
    $region16: #{tpu_custom_call.1} parent=1 // pred_region
      _
    $region17: #{tpu_custom_call.1} parent=1 // pred_fallthru
      _
    // Predicated region
    $region18: #{tpu_custom_call.1} parent=1 // pred_check
      _
    $region19: #{tpu_custom_call.1} parent=1 // pred_check_branch
      %27 = sbr.rel (0) target = $region21
    $region20: #{tpu_custom_call.1} parent=1 // pred_region
      _
    $region21: #{tpu_custom_call.1} parent=1 // pred_fallthru
      _
    // Predicated region
    $region22: #{tpu_custom_call.1} parent=1 // pred_check
      _
    $region23: #{tpu_custom_call.1} parent=1 // pred_check_branch
      %29 = sbr.rel (0) target = $region25
    $region24: #{tpu_custom_call.1} parent=1 // pred_region
      _
    $region25: #{tpu_custom_call.1} parent=1 // pred_fallthru
      _
    // Predicated region
    $region26: #{tpu_custom_call.1} parent=1 // pred_check
      _
    $region27: #{tpu_custom_call.1} parent=1 // pred_check_branch
      %31 = sbr.rel (0) target = $region29
    $region28: #{tpu_custom_call.1} parent=1 // pred_region
      _
    $region29: #{tpu_custom_call.1} parent=1 // pred_fallthru
      _
    // Predicated region
    $region30: #{tpu_custom_call.1} parent=1 // pred_check
      _
    $region31: #{tpu_custom_call.1} parent=1 // pred_check_branch
      %33 = sbr.rel (0) target = $region33
    $region32: #{tpu_custom_call.1} parent=1 // pred_region
      _
    $region33: #{tpu_custom_call.1} parent=1 // pred_fallthru
      _
    // Predicated region
    $region34: #{tpu_custom_call.1} parent=1 // pred_check
      _
    $region35: #{tpu_custom_call.1} parent=1 // pred_check_branch
      %35 = sbr.rel (0) target = $region37
    $region36: #{tpu_custom_call.1} parent=1 // pred_region
      _
    $region37: #{tpu_custom_call.1} parent=1 // pred_fallthru
      _
    %v36 = vld [vmem:[%s0] sm:$0xff]
    %v37 = vld [vmem:[%s0 + $0x8] sm:$0xff]
    %v38 = vld [vmem:[%s0 + $0x10] sm:$0xff]
    %v39 = vld [vmem:[%s0 + $0x18] sm:$0xff]
    %v40 = vld [vmem:[%s0 + $0x20] sm:$0xff]
    %v41 = vld [vmem:[%s0 + $0x28] sm:$0xff]
    %v42 = vld [vmem:[%s0 + $0x30] sm:$0xff]
    %v43 = vld [vmem:[%s1] sm:$0xff]
    %v44 = vld [vmem:[%s1 + $0x8] sm:$0xff]
    %v45 = vld [vmem:[%s1 + $0x10] sm:$0xff]
    %v46 = vld [vmem:[%s1 + $0x18] sm:$0xff]
    %v47 = vld [vmem:[%s1 + $0x20] sm:$0xff]
    %v48 = vld [vmem:[%s1 + $0x28] sm:$0xff]
    %v49 = vld [vmem:[%s1 + $0x30] sm:$0xff]
    %v50 = vld [vmem:[%s1 + $0x38] sm:$0xff]
    %v51 = vld [vmem:[%s1 + $0x40] sm:$0xff]
    %v52 = vld [vmem:[%s1 + $0x48] sm:$0xff]
    %v53 = vld [vmem:[%s1 + $0x50] sm:$0xff]
    %v54 = vld [vmem:[%s1 + $0x58] sm:$0xff]
    %v55 = vld [vmem:[%s1 + $0x60] sm:$0xff]
    %v56 = vld [vmem:[%s1 + $0x68] sm:$0xff]
    %v57 = vld [vmem:[%s1 + $0x70] sm:$0xff]
    %v58 = vld [vmem:[%s1 + $0x78] sm:$0xff]
    %v59 = vld [vmem:[%s1 + $0x80] sm:$0xff]
    %v60 = vld [vmem:[%s1 + $0x88] sm:$0xff]
    %v61 = vld [vmem:[%s1 + $0x90] sm:$0xff]
    %v62 = vld [vmem:[%s1 + $0x98] sm:$0xff]
    %v63 = vld [vmem:[%s1 + $0xa0] sm:$0xff]
    %v64 = vld [vmem:[%s1 + $0xa8] sm:$0xff]
    %v65 = vld [vmem:[%s1 + $0xb0] sm:$0xff]
    %v66 = vld [vmem:[%s1 + $0xb8] sm:$0xff]
    %v67 = vld [vmem:[%s1 + $0xc0] sm:$0xff]
    %v68 = vld [vmem:[%s1 + $0xc8] sm:$0xff]
    %v69 = vld [vmem:[%s1 + $0xd0] sm:$0xff]
    %v70 = vld [vmem:[%s1 + $0xd8] sm:$0xff]
    %v71 = vld [vmem:[%s1 + $0xe0] sm:$0xff]
    %v72 = vld [vmem:[%s1 + $0xe8] sm:$0xff]
    %v73 = vld [vmem:[%s1 + $0xf0] sm:$0xff]
    %v74 = vld [vmem:[%s1 + $0xf8] sm:$0xff]
    %v75 = vld [vmem:[%s1 + $0x100] sm:$0xff]
    %v76 = vld [vmem:[%s1 + $0x108] sm:$0xff]
    %v77 = vld [vmem:[%s1 + $0x110] sm:$0xff]
    %v78 = vld [vmem:[%s1 + $0x118] sm:$0xff]
    %v79 = vld [vmem:[%s1 + $0x120] sm:$0xff]
    %v80 = vld [vmem:[%s1 + $0x128] sm:$0xff]
    %v81 = vld [vmem:[%s1 + $0x130] sm:$0xff]
    %v82 = vld [vmem:[%s1 + $0x138] sm:$0xff]
    %v83 = vld [vmem:[%s1 + $0x140] sm:$0xff]
    %v84 = vld [vmem:[%s1 + $0x148] sm:$0xff]
    %v85 = vld [vmem:[%s1 + $0x150] sm:$0xff]
    %v86 = vld [vmem:[%s1 + $0x158] sm:$0xff]
    %v87 = vld [vmem:[%s1 + $0x160] sm:$0xff]
    %v88 = vld [vmem:[%s1 + $0x168] sm:$0xff]
    %v89 = vld [vmem:[%s1 + $0x170] sm:$0xff]
    %v90 = vld [vmem:[%s1 + $0x178] sm:$0xff]
    %v91 = vld [vmem:[%s1 + $0x180] sm:$0xff]
    %v92 = vld [vmem:[%s1 + $0x188] sm:$0xff]
    %v93 = vld [vmem:[%s1 + $0x190] sm:$0xff]
    %v94 = vld [vmem:[%s1 + $0x198] sm:$0xff]
    %v95 = vld [vmem:[%s1 + $0x1a0] sm:$0xff]
    %v96 = vld [vmem:[%s1 + $0x1a8] sm:$0xff]
    %v97 = vld [vmem:[%s1 + $0x1b0] sm:$0xff]
    %v98 = vld [vmem:[%s1 + $0x1b8] sm:$0xff]
    %v99 = vld [vmem:[%s1 + $0x1c0] sm:$0xff]
    %v100 = vld [vmem:[%s1 + $0x1c8] sm:$0xff]
    %v101 = vld [vmem:[%s1 + $0x1d0] sm:$0xff]
    %v102 = vld [vmem:[%s1 + $0x1d8] sm:$0xff]
    %v103 = vld [vmem:[%s1 + $0x1e0] sm:$0xff]
    %v104 = vld [vmem:[%s1 + $0x1e8] sm:$0xff]
    %v105 = vld [vmem:[%s1 + $0x1f0] sm:$0xff]
    %v106 = vld [vmem:[%s1 + $0x1f8] sm:$0xff]
    %v107 = vld [vmem:[%s1 + $0x200] sm:$0xff]
    %v108 = vld [vmem:[%s1 + $0x208] sm:$0xff]
    %v109 = vld [vmem:[%s1 + $0x210] sm:$0xff]
    %v110 = vld [vmem:[%s1 + $0x218] sm:$0xff]
    %v111 = vld [vmem:[%s1 + $0x220] sm:$0xff]
    %v112 = vld [vmem:[%s1 + $0x228] sm:$0xff]
    %v113 = vld [vmem:[%s1 + $0x230] sm:$0xff]
    %v114 = vld [vmem:[%s1 + $0x238] sm:$0xff]
    %v115 = vld [vmem:[%s1 + $0x240] sm:$0xff]
    %v116 = vld [vmem:[%s1 + $0x248] sm:$0xff]
    %v117 = vld [vmem:[%s1 + $0x250] sm:$0xff]
    %v118 = vld [vmem:[%s1 + $0x258] sm:$0xff]
    %v119 = vld [vmem:[%s1 + $0x260] sm:$0xff]
    %v120 = vld [vmem:[%s1 + $0x268] sm:$0xff]
    %v121 = vld [vmem:[%s1 + $0x270] sm:$0xff]
    %v122 = vld [vmem:[%s1 + $0x278] sm:$0xff]
    %v123 = vld [vmem:[%s1 + $0x280] sm:$0xff]
    %v124 = vld [vmem:[%s1 + $0x288] sm:$0xff]
    %v125 = vld [vmem:[%s1 + $0x290] sm:$0xff]
    %v126 = vld [vmem:[%s1 + $0x298] sm:$0xff]
    %v127 = vld [vmem:[%s1 + $0x2a0] sm:$0xff]
    %v128 = vld [vmem:[%s1 + $0x2a8] sm:$0xff]
    %v129 = vld [vmem:[%s1 + $0x2b0] sm:$0xff]
    %v130 = vld [vmem:[%s1 + $0x2b8] sm:$0xff]
    %v131 = vld [vmem:[%s1 + $0x2c0] sm:$0xff]
    %v132 = vld [vmem:[%s1 + $0x2c8] sm:$0xff]
    %v133 = vld [vmem:[%s1 + $0x2d0] sm:$0xff]
    %v134 = vld [vmem:[%s1 + $0x2d8] sm:$0xff]
    %v135 = vld [vmem:[%s1 + $0x2e0] sm:$0xff]
    %v136 = vld [vmem:[%s1 + $0x2e8] sm:$0xff]
    %v137 = vld [vmem:[%s1 + $0x2f0] sm:$0xff]
    %v138 = vld [vmem:[%s1 + $0x2f8] sm:$0xff]
    %v139 = vld [vmem:[%s1 + $0x300] sm:$0xff]
    %v140 = vld [vmem:[%s1 + $0x308] sm:$0xff]
    %v141 = vld [vmem:[%s1 + $0x310] sm:$0xff]
    %v142 = vld [vmem:[%s1 + $0x318] sm:$0xff]
    %v143 = vld [vmem:[%s1 + $0x320] sm:$0xff]
    %v144 = vld [vmem:[%s1 + $0x328] sm:$0xff]
    %v145 = vld [vmem:[%s1 + $0x330] sm:$0xff]
    %v146 = vld [vmem:[%s1 + $0x338] sm:$0xff]
    %v147 = vld [vmem:[%s1 + $0x340] sm:$0xff]
    %v148 = vld [vmem:[%s1 + $0x348] sm:$0xff]
    %v149 = vld [vmem:[%s1 + $0x350] sm:$0xff]
    %v150 = vld [vmem:[%s1 + $0x358] sm:$0xff]
    %v151 = vld [vmem:[%s1 + $0x360] sm:$0xff]
    %v152 = vld [vmem:[%s1 + $0x368] sm:$0xff]
    %v153 = vld [vmem:[%s1 + $0x370] sm:$0xff]
    %v154 = vld [vmem:[%s1 + $0x378] sm:$0xff]
    %v155 = vld [vmem:[%s1 + $0x380] sm:$0xff]
    %v156 = vld [vmem:[%s1 + $0x388] sm:$0xff]
    %v157 = vld [vmem:[%s1 + $0x390] sm:$0xff]
    %v158 = vld [vmem:[%s1 + $0x398] sm:$0xff]
    %v159 = vld [vmem:[%s1 + $0x3a0] sm:$0xff]
    %v160 = vld [vmem:[%s1 + $0x3a8] sm:$0xff]
    %v161 = vld [vmem:[%s1 + $0x3b0] sm:$0xff]
    %v162 = vld [vmem:[%s1 + $0x3b8] sm:$0xff]
    %v163 = vld [vmem:[%s1 + $0x3c0] sm:$0xff]
    %v164 = vld [vmem:[%s1 + $0x3c8] sm:$0xff]
    %v165 = vld [vmem:[%s1 + $0x3d0] sm:$0xff]
    %v166 = vld [vmem:[%s1 + $0x3d8] sm:$0xff]
    %v167 = vld [vmem:[%s1 + $0x3e0] sm:$0xff]
    %v168 = vld [vmem:[%s1 + $0x3e8] sm:$0xff]
    %v169 = vld [vmem:[%s1 + $0x3f0] sm:$0xff]
    %v170 = vld [vmem:[%s1 + $0x3f8] sm:$0xff]
    %v171 = vld [vmem:[%s1 + $0x400] sm:$0xff]
    %v172 = vld [vmem:[%s1 + $0x408] sm:$0xff]
    %v173 = vld [vmem:[%s1 + $0x410] sm:$0xff]
    %v174 = vld [vmem:[%s1 + $0x418] sm:$0xff]
    %v175 = vld [vmem:[%s1 + $0x420] sm:$0xff]
    %v176 = vld [vmem:[%s1 + $0x428] sm:$0xff]
    %v177 = vld [vmem:[%s1 + $0x430] sm:$0xff]
    %v178 = vld [vmem:[%s1 + $0x438] sm:$0xff]
    %v179 = vld [vmem:[%s1 + $0x440] sm:$0xff]
    %v180 = vld [vmem:[%s1 + $0x448] sm:$0xff]
    %v181 = vld [vmem:[%s1 + $0x450] sm:$0xff]
    %v182 = vld [vmem:[%s1 + $0x458] sm:$0xff]
    %v183 = vld [vmem:[%s1 + $0x460] sm:$0xff]
    %v184 = vld [vmem:[%s1 + $0x468] sm:$0xff]
    %v185 = vld [vmem:[%s1 + $0x470] sm:$0xff]
    %v186 = vld [vmem:[%s1 + $0x478] sm:$0xff]
    %v187 = vld [vmem:[%s1 + $0x480] sm:$0xff]
    %v188 = vld [vmem:[%s1 + $0x488] sm:$0xff]
    %v189 = vld [vmem:[%s1 + $0x490] sm:$0xff]
    %v190 = vld [vmem:[%s1 + $0x498] sm:$0xff]
    %v191 = vld [vmem:[%s1 + $0x4a0] sm:$0xff]
    %v192 = vld [vmem:[%s1 + $0x4a8] sm:$0xff]
    %v193 = vld [vmem:[%s1 + $0x4b0] sm:$0xff]
    %v194 = vld [vmem:[%s1 + $0x4b8] sm:$0xff]
    %v195 = vld [vmem:[%s1 + $0x4c0] sm:$0xff]
    %v196 = vld [vmem:[%s1 + $0x4c8] sm:$0xff]
    %v197 = vld [vmem:[%s1 + $0x4d0] sm:$0xff]
    %v198 = vld [vmem:[%s1 + $0x4d8] sm:$0xff]
    %v199 = vld [vmem:[%s1 + $0x4e0] sm:$0xff]
    %v200 = vld [vmem:[%s1 + $0x4e8] sm:$0xff]
    %v201 = vld [vmem:[%s1 + $0x4f0] sm:$0xff]
    %v202 = vld [vmem:[%s1 + $0x4f8] sm:$0xff]
    %v203 = vld [vmem:[%s1 + $0x500] sm:$0xff]
    %v204 = vld [vmem:[%s1 + $0x508] sm:$0xff]
    %v205 = vld [vmem:[%s1 + $0x510] sm:$0xff]
    %v206 = vld [vmem:[%s1 + $0x518] sm:$0xff]
    %v207 = vld [vmem:[%s1 + $0x520] sm:$0xff]
    %v208 = vld [vmem:[%s1 + $0x528] sm:$0xff]
    %v209 = vld [vmem:[%s1 + $0x530] sm:$0xff]
    %v210 = vld [vmem:[%s1 + $0x538] sm:$0xff]
    %v211 = vld [vmem:[%s1 + $0x540] sm:$0xff]
    %v212 = vld [vmem:[%s1 + $0x548] sm:$0xff]
    %v213 = vld [vmem:[%s1 + $0x550] sm:$0xff]
    %v214 = vld [vmem:[%s1 + $0x558] sm:$0xff]
    %v215 = vld [vmem:[%s1 + $0x560] sm:$0xff]
    %v216 = vld [vmem:[%s1 + $0x568] sm:$0xff]
    %v217 = vld [vmem:[%s1 + $0x570] sm:$0xff]
    %v218 = vld [vmem:[%s1 + $0x578] sm:$0xff]
    %v219 = vld [vmem:[%s1 + $0x580] sm:$0xff]
    %v220 = vld [vmem:[%s1 + $0x588] sm:$0xff]
    %v221 = vld [vmem:[%s1 + $0x590] sm:$0xff]
    %v222 = vld [vmem:[%s1 + $0x598] sm:$0xff]
    %v223 = vld [vmem:[%s1 + $0x5a0] sm:$0xff]
    %v224 = vld [vmem:[%s1 + $0x5a8] sm:$0xff]
    %v225 = vld [vmem:[%s1 + $0x5b0] sm:$0xff]
    %v226 = vld [vmem:[%s1 + $0x5b8] sm:$0xff]
    %v227 = vld [vmem:[%s1 + $0x5c0] sm:$0xff]
    %v228 = vld [vmem:[%s1 + $0x5c8] sm:$0xff]
    %v229 = vld [vmem:[%s1 + $0x5d0] sm:$0xff]
    %v230 = vld [vmem:[%s1 + $0x5d8] sm:$0xff]
    %v231 = vld [vmem:[%s1 + $0x5e0] sm:$0xff]
    %v232 = vld [vmem:[%s1 + $0x5e8] sm:$0xff]
    %v233 = vld [vmem:[%s1 + $0x5f0] sm:$0xff]
    %v234 = vld [vmem:[%s1 + $0x5f8] sm:$0xff]
    %v235 = vld [vmem:[%s1 + $0x600] sm:$0xff]
    %v236 = vld [vmem:[%s1 + $0x608] sm:$0xff]
    %v237 = vld [vmem:[%s1 + $0x610] sm:$0xff]
    %v238 = vld [vmem:[%s1 + $0x618] sm:$0xff]
    %v239 = vld [vmem:[%s1 + $0x620] sm:$0xff]
    %v240 = vld [vmem:[%s1 + $0x628] sm:$0xff]
    %v241 = vld [vmem:[%s1 + $0x630] sm:$0xff]
    %v242 = vld [vmem:[%s1 + $0x638] sm:$0xff]
    %v243 = vld [vmem:[%s1 + $0x640] sm:$0xff]
    %v244 = vld [vmem:[%s1 + $0x648] sm:$0xff]
    %v245 = vld [vmem:[%s1 + $0x650] sm:$0xff]
    %v246 = vld [vmem:[%s1 + $0x658] sm:$0xff]
    %v247 = vld [vmem:[%s1 + $0x660] sm:$0xff]
    %v248 = vld [vmem:[%s1 + $0x668] sm:$0xff]
    %v249 = vld [vmem:[%s1 + $0x670] sm:$0xff]
    %v250 = vld [vmem:[%s1 + $0x678] sm:$0xff]
    %v251 = vld [vmem:[%s1 + $0x680] sm:$0xff]
    %v252 = vld [vmem:[%s1 + $0x688] sm:$0xff]
    %v253 = vld [vmem:[%s1 + $0x690] sm:$0xff]
    %v254 = vld [vmem:[%s1 + $0x698] sm:$0xff]
    %v255 = vld [vmem:[%s1 + $0x6a0] sm:$0xff]
    %v256 = vld [vmem:[%s1 + $0x6a8] sm:$0xff]
    %v257 = vld [vmem:[%s1 + $0x6b0] sm:$0xff]
    %v258 = vld [vmem:[%s1 + $0x6b8] sm:$0xff]
    %v259 = vld [vmem:[%s1 + $0x6c0] sm:$0xff]
    %v260 = vld [vmem:[%s1 + $0x6c8] sm:$0xff]
    %v261 = vld [vmem:[%s1 + $0x6d0] sm:$0xff]
    %v262 = vld [vmem:[%s1 + $0x6d8] sm:$0xff]
    %v263 = vld [vmem:[%s1 + $0x6e0] sm:$0xff]
    %v264 = vld [vmem:[%s1 + $0x6e8] sm:$0xff]
    %v265 = vld [vmem:[%s1 + $0x6f0] sm:$0xff]
    %v266 = vld [vmem:[%s1 + $0x6f8] sm:$0xff]
    %v267 = vld [vmem:[%s1 + $0x700] sm:$0xff]
    %v268 = vld [vmem:[%s1 + $0x708] sm:$0xff]
    %v269 = vld [vmem:[%s1 + $0x710] sm:$0xff]
    %v270 = vld [vmem:[%s1 + $0x718] sm:$0xff]
    %v271 = vld [vmem:[%s1 + $0x720] sm:$0xff]
    %v272 = vld [vmem:[%s1 + $0x728] sm:$0xff]
    %v273 = vld [vmem:[%s1 + $0x730] sm:$0xff]
    %v274 = vld [vmem:[%s1 + $0x738] sm:$0xff]
    %v275 = vld [vmem:[%s1 + $0x740] sm:$0xff]
    %v276 = vld [vmem:[%s1 + $0x748] sm:$0xff]
    %v277 = vld [vmem:[%s1 + $0x750] sm:$0xff]
    %v278 = vld [vmem:[%s1 + $0x758] sm:$0xff]
    %v279 = vld [vmem:[%s1 + $0x760] sm:$0xff]
    %v280 = vld [vmem:[%s1 + $0x768] sm:$0xff]
    %v281 = vld [vmem:[%s1 + $0x770] sm:$0xff]
    %v282 = vld [vmem:[%s1 + $0x778] sm:$0xff]
    %v283 = vld [vmem:[%s1 + $0x780] sm:$0xff]
    %v284 = vld [vmem:[%s1 + $0x788] sm:$0xff]
    %v285 = vld [vmem:[%s1 + $0x790] sm:$0xff]
    %v286 = vld [vmem:[%s1 + $0x798] sm:$0xff]
    %v287 = vld [vmem:[%s1 + $0x7a0] sm:$0xff]
    %v288 = vld [vmem:[%s1 + $0x7a8] sm:$0xff]
    %v289 = vld [vmem:[%s1 + $0x7b0] sm:$0xff]
    %v290 = vld [vmem:[%s1 + $0x7b8] sm:$0xff]
    %v291 = vld [vmem:[%s1 + $0x7c0] sm:$0xff]
    %v292 = vld [vmem:[%s1 + $0x7c8] sm:$0xff]
    %v293 = vld [vmem:[%s1 + $0x7d0] sm:$0xff]
    %v294 = vld [vmem:[%s1 + $0x7d8] sm:$0xff]
    %v295 = vld [vmem:[%s1 + $0x7e0] sm:$0xff]
    %v296 = vld [vmem:[%s1 + $0x7e8] sm:$0xff]
    %v297 = vld [vmem:[%s1 + $0x7f0] sm:$0xff]
    %v298 = vld [vmem:[%s1 + $0x7f8] sm:$0xff]
    %v299 = vld [vmem:[%s1 + $0x800] sm:$0xff]
    %v300 = vld [vmem:[%s1 + $0x808] sm:$0xff]
    %v301 = vld [vmem:[%s1 + $0x810] sm:$0xff]
    %v302 = vld [vmem:[%s1 + $0x818] sm:$0xff]
    %v303 = vld [vmem:[%s1 + $0x820] sm:$0xff]
    %v304 = vld [vmem:[%s1 + $0x828] sm:$0xff]
    %v305 = vld [vmem:[%s1 + $0x830] sm:$0xff]
    %v306 = vld [vmem:[%s1 + $0x838] sm:$0xff]
    %v307 = vld [vmem:[%s1 + $0x840] sm:$0xff]
    %v308 = vld [vmem:[%s1 + $0x848] sm:$0xff]
    %v309 = vld [vmem:[%s1 + $0x850] sm:$0xff]
    %v310 = vld [vmem:[%s1 + $0x858] sm:$0xff]
    %v311 = vld [vmem:[%s1 + $0x860] sm:$0xff]
    %v312 = vld [vmem:[%s1 + $0x868] sm:$0xff]
    %v313 = vld [vmem:[%s1 + $0x870] sm:$0xff]
    %v314 = vld [vmem:[%s1 + $0x878] sm:$0xff]
    %v315 = vld [vmem:[%s1 + $0x880] sm:$0xff]
    %v316 = vld [vmem:[%s1 + $0x888] sm:$0xff]
    %v317 = vld [vmem:[%s1 + $0x890] sm:$0xff]
    %v318 = vld [vmem:[%s1 + $0x898] sm:$0xff]
    %v319 = vld [vmem:[%s1 + $0x8a0] sm:$0xff]
    %v320 = vld [vmem:[%s1 + $0x8a8] sm:$0xff]
    %v321 = vld [vmem:[%s1 + $0x8b0] sm:$0xff]
    %v322 = vld [vmem:[%s1 + $0x8b8] sm:$0xff]
    %v323 = vld [vmem:[%s1 + $0x8c0] sm:$0xff]
    %v324 = vld [vmem:[%s1 + $0x8c8] sm:$0xff]
    %v325 = vld [vmem:[%s1 + $0x8d0] sm:$0xff]
    %v326 = vld [vmem:[%s1 + $0x8d8] sm:$0xff]
    %v327 = vld [vmem:[%s1 + $0x8e0] sm:$0xff]
    %v328 = vld [vmem:[%s1 + $0x8e8] sm:$0xff]
    %v329 = vld [vmem:[%s1 + $0x8f0] sm:$0xff]
    %v330 = vld [vmem:[%s1 + $0x8f8] sm:$0xff]
    %v331 = vld [vmem:[%s1 + $0x900] sm:$0xff]
    %v332 = vld [vmem:[%s1 + $0x908] sm:$0xff]
    %v333 = vld [vmem:[%s1 + $0x910] sm:$0xff]
    %v334 = vld [vmem:[%s1 + $0x918] sm:$0xff]
    %v335 = vld [vmem:[%s1 + $0x920] sm:$0xff]
    %v336 = vld [vmem:[%s1 + $0x928] sm:$0xff]
    %v337 = vld [vmem:[%s1 + $0x930] sm:$0xff]
    %v338 = vld [vmem:[%s1 + $0x938] sm:$0xff]
    %v339 = vld [vmem:[%s1 + $0x940] sm:$0xff]
    %v340 = vld [vmem:[%s1 + $0x948] sm:$0xff]
    %v341 = vld [vmem:[%s1 + $0x950] sm:$0xff]
    %v342 = vld [vmem:[%s1 + $0x958] sm:$0xff]
    %v343 = vld [vmem:[%s1 + $0x960] sm:$0xff]
    %v344 = vld [vmem:[%s1 + $0x968] sm:$0xff]
    %v345 = vld [vmem:[%s1 + $0x970] sm:$0xff]
    %v346 = vld [vmem:[%s1 + $0x978] sm:$0xff]
    %v347 = vld [vmem:[%s1 + $0x980] sm:$0xff]
    %v348 = vld [vmem:[%s1 + $0x988] sm:$0xff]
    %v349 = vld [vmem:[%s1 + $0x990] sm:$0xff]
    %v350 = vld [vmem:[%s1 + $0x998] sm:$0xff]
    %v351 = vld [vmem:[%s1 + $0x9a0] sm:$0xff]
    %v352 = vld [vmem:[%s1 + $0x9a8] sm:$0xff]
    %v353 = vld [vmem:[%s1 + $0x9b0] sm:$0xff]
    %v354 = vld [vmem:[%s1 + $0x9b8] sm:$0xff]
    %v355 = vld [vmem:[%s1 + $0x9c0] sm:$0xff]
    %v356 = vld [vmem:[%s1 + $0x9c8] sm:$0xff]
    %v357 = vld [vmem:[%s1 + $0x9d0] sm:$0xff]
    %v358 = vld [vmem:[%s1 + $0x9d8] sm:$0xff]
    %v359 = vld [vmem:[%s1 + $0x9e0] sm:$0xff]
    %v360 = vld [vmem:[%s1 + $0x9e8] sm:$0xff]
    %v361 = vld [vmem:[%s1 + $0x9f0] sm:$0xff]
    %v362 = vld [vmem:[%s1 + $0x9f8] sm:$0xff]
    %v363 = vld [vmem:[%s1 + $0xa00] sm:$0xff]
    %v364 = vld [vmem:[%s1 + $0xa08] sm:$0xff]
    %v365 = vld [vmem:[%s1 + $0xa10] sm:$0xff]
    %v366 = vld [vmem:[%s1 + $0xa18] sm:$0xff]
    %v367 = vld [vmem:[%s1 + $0xa20] sm:$0xff]
    %v368 = vld [vmem:[%s1 + $0xa28] sm:$0xff]
    %v369 = vld [vmem:[%s1 + $0xa30] sm:$0xff]
    %v370 = vld [vmem:[%s1 + $0xa38] sm:$0xff]
    %v371 = vld [vmem:[%s1 + $0xa40] sm:$0xff]
    %v372 = vld [vmem:[%s1 + $0xa48] sm:$0xff]
    %v373 = vld [vmem:[%s1 + $0xa50] sm:$0xff]
    %v374 = vld [vmem:[%s1 + $0xa58] sm:$0xff]
    %v375 = vld [vmem:[%s1 + $0xa60] sm:$0xff]
    %v376 = vld [vmem:[%s1 + $0xa68] sm:$0xff]
    %v377 = vld [vmem:[%s1 + $0xa70] sm:$0xff]
    %v378 = vld [vmem:[%s1 + $0xa78] sm:$0xff]
    %v379 = vld [vmem:[%s1 + $0xa80] sm:$0xff]
    %v380 = vld [vmem:[%s1 + $0xa88] sm:$0xff]
    %v381 = vld [vmem:[%s1 + $0xa90] sm:$0xff]
    %v382 = vld [vmem:[%s1 + $0xa98] sm:$0xff]
    %v383 = vld [vmem:[%s1 + $0xaa0] sm:$0xff]
    %v384 = vld [vmem:[%s1 + $0xaa8] sm:$0xff]
    %v385 = vld [vmem:[%s1 + $0xab0] sm:$0xff]
    %v386 = vld [vmem:[%s1 + $0xab8] sm:$0xff]
    %v387 = vld [vmem:[%s1 + $0xac0] sm:$0xff]
    %v388 = vld [vmem:[%s1 + $0xac8] sm:$0xff]
    %v389 = vld [vmem:[%s1 + $0xad0] sm:$0xff]
    %v390 = vld [vmem:[%s1 + $0xad8] sm:$0xff]
    %v391 = vld [vmem:[%s1 + $0xae0] sm:$0xff]
    %v392 = vld [vmem:[%s1 + $0xae8] sm:$0xff]
    %v393 = vld [vmem:[%s1 + $0xaf0] sm:$0xff]
    %v394 = vld [vmem:[%s1 + $0xaf8] sm:$0xff]
    %v395 = vld [vmem:[%s1 + $0xb00] sm:$0xff]
    %v396 = vld [vmem:[%s1 + $0xb08] sm:$0xff]
    %v397 = vld [vmem:[%s1 + $0xb10] sm:$0xff]
    %v398 = vld [vmem:[%s1 + $0xb18] sm:$0xff]
    %v399 = vld [vmem:[%s1 + $0xb20] sm:$0xff]
    %v400 = vld [vmem:[%s1 + $0xb28] sm:$0xff]
    %v401 = vld [vmem:[%s1 + $0xb30] sm:$0xff]
    %v402 = vld [vmem:[%s1 + $0xb38] sm:$0xff]
    %v403 = vld [vmem:[%s1 + $0xb40] sm:$0xff]
    %v404 = vld [vmem:[%s1 + $0xb48] sm:$0xff]
    %v405 = vld [vmem:[%s1 + $0xb50] sm:$0xff]
    %v406 = vld [vmem:[%s1 + $0xb58] sm:$0xff]
    %v407 = vld [vmem:[%s1 + $0xb60] sm:$0xff]
    %v408 = vld [vmem:[%s1 + $0xb68] sm:$0xff]
    %v409 = vld [vmem:[%s1 + $0xb70] sm:$0xff]
    %v410 = vld [vmem:[%s1 + $0xb78] sm:$0xff]
    %v411 = vld [vmem:[%s1 + $0xb80] sm:$0xff]
    %v412 = vld [vmem:[%s1 + $0xb88] sm:$0xff]
    %v413 = vld [vmem:[%s1 + $0xb90] sm:$0xff]
    %v414 = vld [vmem:[%s1 + $0xb98] sm:$0xff]
    %v415 = vld [vmem:[%s1 + $0xba0] sm:$0xff]
    %v416 = vld [vmem:[%s1 + $0xba8] sm:$0xff]
    %v417 = vld [vmem:[%s1 + $0xbb0] sm:$0xff]
    %v418 = vld [vmem:[%s1 + $0xbb8] sm:$0xff]
    %v419 = vld [vmem:[%s1 + $0xbc0] sm:$0xff]
    %v420 = vld [vmem:[%s1 + $0xbc8] sm:$0xff]
    %v421 = vld [vmem:[%s1 + $0xbd0] sm:$0xff]
    %v422 = vld [vmem:[%s1 + $0xbd8] sm:$0xff]
    %v423 = vld [vmem:[%s1 + $0xbe0] sm:$0xff]
    %v424 = vld [vmem:[%s1 + $0xbe8] sm:$0xff]
    %v425 = vld [vmem:[%s1 + $0xbf0] sm:$0xff]
    %v426 = vld [vmem:[%s1 + $0xbf8] sm:$0xff]
    %v427 = vld [vmem:[%s1 + $0xc00] sm:$0xff]
    %v428 = vld [vmem:[%s1 + $0xc08] sm:$0xff]
    %v429 = vld [vmem:[%s1 + $0xc10] sm:$0xff]
    %v430 = vld [vmem:[%s1 + $0xc18] sm:$0xff]
    %v431 = vld [vmem:[%s1 + $0xc20] sm:$0xff]
    %v432 = vld [vmem:[%s1 + $0xc28] sm:$0xff]
    %v433 = vld [vmem:[%s1 + $0xc30] sm:$0xff]
    %v434 = vld [vmem:[%s1 + $0xc38] sm:$0xff]
    %v435 = vld [vmem:[%s2] sm:$0xf]
    %v437 = vperm.slane %v435, 0
    %v438 = vperm.slane %v435, 1
    %v439 = vperm.slane %v435, 2
    %v440 = vperm.slane %v435, 3
    %vm445 = vcmask 130048
    %v447 = vsel %vm445, %v42, 0
    %449 = vmatpush.msra.mxu0 %v103
    %450 = vmatpush.msra.mxu0 %v99
    %451 = vmatpush.msra.mxu0 %v95
    %452 = vmatpush.msra.mxu0 %v91
    %453 = vmatpush.msra.mxu0 %v87
    %454 = vmatpush.msra.mxu0 %v83
    %455 = vmatpush.msra.mxu0 %v79
    %456 = vmatpush.msra.mxu0 %v75
    %457 = vmatpush.msra.mxu0 %v71
    %458 = vmatpush.msra.mxu0 %v67
    %459 = vmatpush.msra.mxu0 %v63
    %460 = vmatpush.msra.mxu0 %v59
    %461 = vmatpush.msra.mxu0 %v55
    %462 = vmatpush.msra.mxu0 %v51
    %463 = vmatpush.msra.mxu0 %v47
    %464 = vmatpush.msra.mxu0 %v43
    %465 = vmatmul.f32.gmra.mxu0 %v36
    %v466 = vpop.f32.mrf.mxu0
    %v467 = vadd.f32 %v437, %v466
    %468 = vdwg.mxu0
    %469 = vmatpush.msra.mxu0 %v167
    %470 = vmatpush.msra.mxu0 %v163
    %471 = vmatpush.msra.mxu0 %v159
    %472 = vmatpush.msra.mxu0 %v155
    %473 = vmatpush.msra.mxu0 %v151
    %474 = vmatpush.msra.mxu0 %v147
    %475 = vmatpush.msra.mxu0 %v143
    %476 = vmatpush.msra.mxu0 %v139
    %477 = vmatpush.msra.mxu0 %v135
    %478 = vmatpush.msra.mxu0 %v131
    %479 = vmatpush.msra.mxu0 %v127
    %480 = vmatpush.msra.mxu0 %v123
    %481 = vmatpush.msra.mxu0 %v119
    %482 = vmatpush.msra.mxu0 %v115
    %483 = vmatpush.msra.mxu0 %v111
    %484 = vmatpush.msra.mxu0 %v107
    %485 = vmatmul.f32.gmra.mxu0 %v37
    %v486 = vpop.f32.mrf.mxu0
    %v487 = vadd.f32 %v467, %v486
    %488 = vdwg.mxu0
    %489 = vmatpush.msra.mxu0 %v231
    %490 = vmatpush.msra.mxu0 %v227
    %491 = vmatpush.msra.mxu0 %v223
    %492 = vmatpush.msra.mxu0 %v219
    %493 = vmatpush.msra.mxu0 %v215
    %494 = vmatpush.msra.mxu0 %v211
    %495 = vmatpush.msra.mxu0 %v207
    %496 = vmatpush.msra.mxu0 %v203
    %497 = vmatpush.msra.mxu0 %v199
    %498 = vmatpush.msra.mxu0 %v195
    %499 = vmatpush.msra.mxu0 %v191
    %500 = vmatpush.msra.mxu0 %v187
    %501 = vmatpush.msra.mxu0 %v183
    %502 = vmatpush.msra.mxu0 %v179
    %503 = vmatpush.msra.mxu0 %v175
    %504 = vmatpush.msra.mxu0 %v171
    %505 = vmatmul.f32.gmra.mxu0 %v38
    %v506 = vpop.f32.mrf.mxu0
    %v507 = vadd.f32 %v487, %v506
    %508 = vdwg.mxu0
    %509 = vmatpush.msra.mxu0 %v295
    %510 = vmatpush.msra.mxu0 %v291
    %511 = vmatpush.msra.mxu0 %v287
    %512 = vmatpush.msra.mxu0 %v283
    %513 = vmatpush.msra.mxu0 %v279
    %514 = vmatpush.msra.mxu0 %v275
    %515 = vmatpush.msra.mxu0 %v271
    %516 = vmatpush.msra.mxu0 %v267
    %517 = vmatpush.msra.mxu0 %v263
    %518 = vmatpush.msra.mxu0 %v259
    %519 = vmatpush.msra.mxu0 %v255
    %520 = vmatpush.msra.mxu0 %v251
    %521 = vmatpush.msra.mxu0 %v247
    %522 = vmatpush.msra.mxu0 %v243
    %523 = vmatpush.msra.mxu0 %v239
    %524 = vmatpush.msra.mxu0 %v235
    %525 = vmatmul.f32.gmra.mxu0 %v39
    %v526 = vpop.f32.mrf.mxu0
    %v527 = vadd.f32 %v507, %v526
    %528 = vdwg.mxu0
    %529 = vmatpush.msra.mxu0 %v359
    %530 = vmatpush.msra.mxu0 %v355
    %531 = vmatpush.msra.mxu0 %v351
    %532 = vmatpush.msra.mxu0 %v347
    %533 = vmatpush.msra.mxu0 %v343
    %534 = vmatpush.msra.mxu0 %v339
    %535 = vmatpush.msra.mxu0 %v335
    %536 = vmatpush.msra.mxu0 %v331
    %537 = vmatpush.msra.mxu0 %v327
    %538 = vmatpush.msra.mxu0 %v323
    %539 = vmatpush.msra.mxu0 %v319
    %540 = vmatpush.msra.mxu0 %v315
    %541 = vmatpush.msra.mxu0 %v311
    %542 = vmatpush.msra.mxu0 %v307
    %543 = vmatpush.msra.mxu0 %v303
    %544 = vmatpush.msra.mxu0 %v299
    %545 = vmatmul.f32.gmra.mxu0 %v40
    %v546 = vpop.f32.mrf.mxu0
    %v547 = vadd.f32 %v527, %v546
    %548 = vdwg.mxu0
    %549 = vmatpush.msra.mxu0 %v423
    %550 = vmatpush.msra.mxu0 %v419
    %551 = vmatpush.msra.mxu0 %v415
    %552 = vmatpush.msra.mxu0 %v411
    %553 = vmatpush.msra.mxu0 %v407
    %554 = vmatpush.msra.mxu0 %v403
    %555 = vmatpush.msra.mxu0 %v399
    %556 = vmatpush.msra.mxu0 %v395
    %557 = vmatpush.msra.mxu0 %v391
    %558 = vmatpush.msra.mxu0 %v387
    %559 = vmatpush.msra.mxu0 %v383
    %560 = vmatpush.msra.mxu0 %v379
    %561 = vmatpush.msra.mxu0 %v375
    %562 = vmatpush.msra.mxu0 %v371
    %563 = vmatpush.msra.mxu0 %v367
    %564 = vmatpush.msra.mxu0 %v363
    %565 = vmatmul.f32.gmra.mxu0 %v41
    %v566 = vpop.f32.mrf.mxu0
    %v567 = vadd.f32 %v547, %v566
    %568 = vdwg.mxu0
    %569 = vmatpush.msra.mxu0 0.0
    %570 = vmatpush.msra.mxu0 0.0
    %571 = vmatpush.msra.mxu0 0.0
    %572 = vmatpush.msra.mxu0 0.0
    %573 = vmatpush.msra.mxu0 0.0
    %574 = vmatpush.msra.mxu0 0.0
    %575 = vmatpush.msra.mxu0 0.0
    %576 = vmatpush.msra.mxu0 0.0
    %577 = vmatpush.msra.mxu0 0.0
    %578 = vmatpush.msra.mxu0 0.0
    %579 = vmatpush.msra.mxu0 0.0
    %580 = vmatpush.msra.mxu0 0.0
    %581 = vmatpush.msra.mxu0 0.0
    %582 = vmatpush.msra.mxu0 0.0
    %583 = vmatpush.msra.mxu0 %v431
    %584 = vmatpush.msra.mxu0 %v427
    %585 = vmatmul.f32.gmra.mxu0 %v447
    %v586 = vpop.f32.mrf.mxu0
    %v587 = vadd.f32 %v567, %v586
    %588 = vdwg.mxu0
    %589 = vmatpush.msra.mxu0 %v104
    %590 = vmatpush.msra.mxu0 %v100
    %591 = vmatpush.msra.mxu0 %v96
    %592 = vmatpush.msra.mxu0 %v92
    %593 = vmatpush.msra.mxu0 %v88
    %594 = vmatpush.msra.mxu0 %v84
    %595 = vmatpush.msra.mxu0 %v80
    %596 = vmatpush.msra.mxu0 %v76
    %597 = vmatpush.msra.mxu0 %v72
    %598 = vmatpush.msra.mxu0 %v68
    %599 = vmatpush.msra.mxu0 %v64
    %600 = vmatpush.msra.mxu0 %v60
    %601 = vmatpush.msra.mxu0 %v56
    %602 = vmatpush.msra.mxu0 %v52
    %603 = vmatpush.msra.mxu0 %v48
    %604 = vmatpush.msra.mxu0 %v44
    %605 = vmatmul.f32.gmra.mxu0 %v36
    %v606 = vpop.f32.mrf.mxu0
    %v607 = vadd.f32 %v438, %v606
    %608 = vdwg.mxu0
    %609 = vmatpush.msra.mxu0 %v168
    %610 = vmatpush.msra.mxu0 %v164
    %611 = vmatpush.msra.mxu0 %v160
    %612 = vmatpush.msra.mxu0 %v156
    %613 = vmatpush.msra.mxu0 %v152
    %614 = vmatpush.msra.mxu0 %v148
    %615 = vmatpush.msra.mxu0 %v144
    %616 = vmatpush.msra.mxu0 %v140
    %617 = vmatpush.msra.mxu0 %v136
    %618 = vmatpush.msra.mxu0 %v132
    %619 = vmatpush.msra.mxu0 %v128
    %620 = vmatpush.msra.mxu0 %v124
    %621 = vmatpush.msra.mxu0 %v120
    %622 = vmatpush.msra.mxu0 %v116
    %623 = vmatpush.msra.mxu0 %v112
    %624 = vmatpush.msra.mxu0 %v108
    %625 = vmatmul.f32.gmra.mxu0 %v37
    %v626 = vpop.f32.mrf.mxu0
    %v627 = vadd.f32 %v607, %v626
    %628 = vdwg.mxu0
    %629 = vmatpush.msra.mxu0 %v232
    %630 = vmatpush.msra.mxu0 %v228
    %631 = vmatpush.msra.mxu0 %v224
    %632 = vmatpush.msra.mxu0 %v220
    %633 = vmatpush.msra.mxu0 %v216
    %634 = vmatpush.msra.mxu0 %v212
    %635 = vmatpush.msra.mxu0 %v208
    %636 = vmatpush.msra.mxu0 %v204
    %637 = vmatpush.msra.mxu0 %v200
    %638 = vmatpush.msra.mxu0 %v196
    %639 = vmatpush.msra.mxu0 %v192
    %640 = vmatpush.msra.mxu0 %v188
    %641 = vmatpush.msra.mxu0 %v184
    %642 = vmatpush.msra.mxu0 %v180
    %643 = vmatpush.msra.mxu0 %v176
    %644 = vmatpush.msra.mxu0 %v172
    %645 = vmatmul.f32.gmra.mxu0 %v38
    %v646 = vpop.f32.mrf.mxu0
    %v647 = vadd.f32 %v627, %v646
    %648 = vdwg.mxu0
    %649 = vmatpush.msra.mxu0 %v296
    %650 = vmatpush.msra.mxu0 %v292
    %651 = vmatpush.msra.mxu0 %v288
    %652 = vmatpush.msra.mxu0 %v284
    %653 = vmatpush.msra.mxu0 %v280
    %654 = vmatpush.msra.mxu0 %v276
    %655 = vmatpush.msra.mxu0 %v272
    %656 = vmatpush.msra.mxu0 %v268
    %657 = vmatpush.msra.mxu0 %v264
    %658 = vmatpush.msra.mxu0 %v260
    %659 = vmatpush.msra.mxu0 %v256
    %660 = vmatpush.msra.mxu0 %v252
    %661 = vmatpush.msra.mxu0 %v248
    %662 = vmatpush.msra.mxu0 %v244
    %663 = vmatpush.msra.mxu0 %v240
    %664 = vmatpush.msra.mxu0 %v236
    %665 = vmatmul.f32.gmra.mxu0 %v39
    %v666 = vpop.f32.mrf.mxu0
    %v667 = vadd.f32 %v647, %v666
    %668 = vdwg.mxu0
    %669 = vmatpush.msra.mxu0 %v360
    %670 = vmatpush.msra.mxu0 %v356
    %671 = vmatpush.msra.mxu0 %v352
    %672 = vmatpush.msra.mxu0 %v348
    %673 = vmatpush.msra.mxu0 %v344
    %674 = vmatpush.msra.mxu0 %v340
    %675 = vmatpush.msra.mxu0 %v336
    %676 = vmatpush.msra.mxu0 %v332
    %677 = vmatpush.msra.mxu0 %v328
    %678 = vmatpush.msra.mxu0 %v324
    %679 = vmatpush.msra.mxu0 %v320
    %680 = vmatpush.msra.mxu0 %v316
    %681 = vmatpush.msra.mxu0 %v312
    %682 = vmatpush.msra.mxu0 %v308
    %683 = vmatpush.msra.mxu0 %v304
    %684 = vmatpush.msra.mxu0 %v300
    %685 = vmatmul.f32.gmra.mxu0 %v40
    %v686 = vpop.f32.mrf.mxu0
    %v687 = vadd.f32 %v667, %v686
    %688 = vdwg.mxu0
    %689 = vmatpush.msra.mxu0 %v424
    %690 = vmatpush.msra.mxu0 %v420
    %691 = vmatpush.msra.mxu0 %v416
    %692 = vmatpush.msra.mxu0 %v412
    %693 = vmatpush.msra.mxu0 %v408
    %694 = vmatpush.msra.mxu0 %v404
    %695 = vmatpush.msra.mxu0 %v400
    %696 = vmatpush.msra.mxu0 %v396
    %697 = vmatpush.msra.mxu0 %v392
    %698 = vmatpush.msra.mxu0 %v388
    %699 = vmatpush.msra.mxu0 %v384
    %700 = vmatpush.msra.mxu0 %v380
    %701 = vmatpush.msra.mxu0 %v376
    %702 = vmatpush.msra.mxu0 %v372
    %703 = vmatpush.msra.mxu0 %v368
    %704 = vmatpush.msra.mxu0 %v364
    %705 = vmatmul.f32.gmra.mxu0 %v41
    %v706 = vpop.f32.mrf.mxu0
    %v707 = vadd.f32 %v687, %v706
    %708 = vdwg.mxu0
    %709 = vmatpush.msra.mxu0 0.0
    %710 = vmatpush.msra.mxu0 0.0
    %711 = vmatpush.msra.mxu0 0.0
    %712 = vmatpush.msra.mxu0 0.0
    %713 = vmatpush.msra.mxu0 0.0
    %714 = vmatpush.msra.mxu0 0.0
    %715 = vmatpush.msra.mxu0 0.0
    %716 = vmatpush.msra.mxu0 0.0
    %717 = vmatpush.msra.mxu0 0.0
    %718 = vmatpush.msra.mxu0 0.0
    %719 = vmatpush.msra.mxu0 0.0
    %720 = vmatpush.msra.mxu0 0.0
    %721 = vmatpush.msra.mxu0 0.0
    %722 = vmatpush.msra.mxu0 0.0
    %723 = vmatpush.msra.mxu0 %v432
    %724 = vmatpush.msra.mxu0 %v428
    %725 = vmatmul.f32.gmra.mxu0 %v447
    %v726 = vpop.f32.mrf.mxu0
    %v727 = vadd.f32 %v707, %v726
    %728 = vdwg.mxu0
    %729 = vmatpush.msra.mxu0 %v105
    %730 = vmatpush.msra.mxu0 %v101
    %731 = vmatpush.msra.mxu0 %v97
    %732 = vmatpush.msra.mxu0 %v93
    %733 = vmatpush.msra.mxu0 %v89
    %734 = vmatpush.msra.mxu0 %v85
    %735 = vmatpush.msra.mxu0 %v81
    %736 = vmatpush.msra.mxu0 %v77
    %737 = vmatpush.msra.mxu0 %v73
    %738 = vmatpush.msra.mxu0 %v69
    %739 = vmatpush.msra.mxu0 %v65
    %740 = vmatpush.msra.mxu0 %v61
    %741 = vmatpush.msra.mxu0 %v57
    %742 = vmatpush.msra.mxu0 %v53
    %743 = vmatpush.msra.mxu0 %v49
    %744 = vmatpush.msra.mxu0 %v45
    %745 = vmatmul.f32.gmra.mxu0 %v36
    %v746 = vpop.f32.mrf.mxu0
    %v747 = vadd.f32 %v439, %v746
    %748 = vdwg.mxu0
    %749 = vmatpush.msra.mxu0 %v169
    %750 = vmatpush.msra.mxu0 %v165
    %751 = vmatpush.msra.mxu0 %v161
    %752 = vmatpush.msra.mxu0 %v157
    %753 = vmatpush.msra.mxu0 %v153
    %754 = vmatpush.msra.mxu0 %v149
    %755 = vmatpush.msra.mxu0 %v145
    %756 = vmatpush.msra.mxu0 %v141
    %757 = vmatpush.msra.mxu0 %v137
    %758 = vmatpush.msra.mxu0 %v133
    %759 = vmatpush.msra.mxu0 %v129
    %760 = vmatpush.msra.mxu0 %v125
    %761 = vmatpush.msra.mxu0 %v121
    %762 = vmatpush.msra.mxu0 %v117
    %763 = vmatpush.msra.mxu0 %v113
    %764 = vmatpush.msra.mxu0 %v109
    %765 = vmatmul.f32.gmra.mxu0 %v37
    %v766 = vpop.f32.mrf.mxu0
    %v767 = vadd.f32 %v747, %v766
    %768 = vdwg.mxu0
    %769 = vmatpush.msra.mxu0 %v233
    %770 = vmatpush.msra.mxu0 %v229
    %771 = vmatpush.msra.mxu0 %v225
    %772 = vmatpush.msra.mxu0 %v221
    %773 = vmatpush.msra.mxu0 %v217
    %774 = vmatpush.msra.mxu0 %v213
    %775 = vmatpush.msra.mxu0 %v209
    %776 = vmatpush.msra.mxu0 %v205
    %777 = vmatpush.msra.mxu0 %v201
    %778 = vmatpush.msra.mxu0 %v197
    %779 = vmatpush.msra.mxu0 %v193
    %780 = vmatpush.msra.mxu0 %v189
    %781 = vmatpush.msra.mxu0 %v185
    %782 = vmatpush.msra.mxu0 %v181
    %783 = vmatpush.msra.mxu0 %v177
    %784 = vmatpush.msra.mxu0 %v173
    %785 = vmatmul.f32.gmra.mxu0 %v38
    %v786 = vpop.f32.mrf.mxu0
    %v787 = vadd.f32 %v767, %v786
    %788 = vdwg.mxu0
    %789 = vmatpush.msra.mxu0 %v297
    %790 = vmatpush.msra.mxu0 %v293
    %791 = vmatpush.msra.mxu0 %v289
    %792 = vmatpush.msra.mxu0 %v285
    %793 = vmatpush.msra.mxu0 %v281
    %794 = vmatpush.msra.mxu0 %v277
    %795 = vmatpush.msra.mxu0 %v273
    %796 = vmatpush.msra.mxu0 %v269
    %797 = vmatpush.msra.mxu0 %v265
    %798 = vmatpush.msra.mxu0 %v261
    %799 = vmatpush.msra.mxu0 %v257
    %800 = vmatpush.msra.mxu0 %v253
    %801 = vmatpush.msra.mxu0 %v249
    %802 = vmatpush.msra.mxu0 %v245
    %803 = vmatpush.msra.mxu0 %v241
    %804 = vmatpush.msra.mxu0 %v237
    %805 = vmatmul.f32.gmra.mxu0 %v39
    %v806 = vpop.f32.mrf.mxu0
    %v807 = vadd.f32 %v787, %v806
    %808 = vdwg.mxu0
    %809 = vmatpush.msra.mxu0 %v361
    %810 = vmatpush.msra.mxu0 %v357
    %811 = vmatpush.msra.mxu0 %v353
    %812 = vmatpush.msra.mxu0 %v349
    %813 = vmatpush.msra.mxu0 %v345
    %814 = vmatpush.msra.mxu0 %v341
    %815 = vmatpush.msra.mxu0 %v337
    %816 = vmatpush.msra.mxu0 %v333
    %817 = vmatpush.msra.mxu0 %v329
    %818 = vmatpush.msra.mxu0 %v325
    %819 = vmatpush.msra.mxu0 %v321
    %820 = vmatpush.msra.mxu0 %v317
    %821 = vmatpush.msra.mxu0 %v313
    %822 = vmatpush.msra.mxu0 %v309
    %823 = vmatpush.msra.mxu0 %v305
    %824 = vmatpush.msra.mxu0 %v301
    %825 = vmatmul.f32.gmra.mxu0 %v40
    %v826 = vpop.f32.mrf.mxu0
    %v827 = vadd.f32 %v807, %v826
    %828 = vdwg.mxu0
    %829 = vmatpush.msra.mxu0 %v425
    %830 = vmatpush.msra.mxu0 %v421
    %831 = vmatpush.msra.mxu0 %v417
    %832 = vmatpush.msra.mxu0 %v413
    %833 = vmatpush.msra.mxu0 %v409
    %834 = vmatpush.msra.mxu0 %v405
    %835 = vmatpush.msra.mxu0 %v401
    %836 = vmatpush.msra.mxu0 %v397
    %837 = vmatpush.msra.mxu0 %v393
    %838 = vmatpush.msra.mxu0 %v389
    %839 = vmatpush.msra.mxu0 %v385
    %840 = vmatpush.msra.mxu0 %v381
    %841 = vmatpush.msra.mxu0 %v377
    %842 = vmatpush.msra.mxu0 %v373
    %843 = vmatpush.msra.mxu0 %v369
    %844 = vmatpush.msra.mxu0 %v365
    %845 = vmatmul.f32.gmra.mxu0 %v41
    %v846 = vpop.f32.mrf.mxu0
    %v847 = vadd.f32 %v827, %v846
    %848 = vdwg.mxu0
    %849 = vmatpush.msra.mxu0 0.0
    %850 = vmatpush.msra.mxu0 0.0
    %851 = vmatpush.msra.mxu0 0.0
    %852 = vmatpush.msra.mxu0 0.0
    %853 = vmatpush.msra.mxu0 0.0
    %854 = vmatpush.msra.mxu0 0.0
    %855 = vmatpush.msra.mxu0 0.0
    %856 = vmatpush.msra.mxu0 0.0
    %857 = vmatpush.msra.mxu0 0.0
    %858 = vmatpush.msra.mxu0 0.0
    %859 = vmatpush.msra.mxu0 0.0
    %860 = vmatpush.msra.mxu0 0.0
    %861 = vmatpush.msra.mxu0 0.0
    %862 = vmatpush.msra.mxu0 0.0
    %863 = vmatpush.msra.mxu0 %v433
    %864 = vmatpush.msra.mxu0 %v429
    %865 = vmatmul.f32.gmra.mxu0 %v447
    %v866 = vpop.f32.mrf.mxu0
    %v867 = vadd.f32 %v847, %v866
    %868 = vdwg.mxu0
    %869 = vmatpush.msra.mxu0 %v106
    %870 = vmatpush.msra.mxu0 %v102
    %871 = vmatpush.msra.mxu0 %v98
    %872 = vmatpush.msra.mxu0 %v94
    %873 = vmatpush.msra.mxu0 %v90
    %874 = vmatpush.msra.mxu0 %v86
    %875 = vmatpush.msra.mxu0 %v82
    %876 = vmatpush.msra.mxu0 %v78
    %877 = vmatpush.msra.mxu0 %v74
    %878 = vmatpush.msra.mxu0 %v70
    %879 = vmatpush.msra.mxu0 %v66
    %880 = vmatpush.msra.mxu0 %v62
    %881 = vmatpush.msra.mxu0 %v58
    %882 = vmatpush.msra.mxu0 %v54
    %883 = vmatpush.msra.mxu0 %v50
    %884 = vmatpush.msra.mxu0 %v46
    %885 = vmatmul.f32.gmra.mxu0 %v36
    %v886 = vpop.f32.mrf.mxu0
    %v887 = vadd.f32 %v440, %v886
    %888 = vdwg.mxu0
    %889 = vmatpush.msra.mxu0 %v170
    %890 = vmatpush.msra.mxu0 %v166
    %891 = vmatpush.msra.mxu0 %v162
    %892 = vmatpush.msra.mxu0 %v158
    %893 = vmatpush.msra.mxu0 %v154
    %894 = vmatpush.msra.mxu0 %v150
    %895 = vmatpush.msra.mxu0 %v146
    %896 = vmatpush.msra.mxu0 %v142
    %897 = vmatpush.msra.mxu0 %v138
    %898 = vmatpush.msra.mxu0 %v134
    %899 = vmatpush.msra.mxu0 %v130
    %900 = vmatpush.msra.mxu0 %v126
    %901 = vmatpush.msra.mxu0 %v122
    %902 = vmatpush.msra.mxu0 %v118
    %903 = vmatpush.msra.mxu0 %v114
    %904 = vmatpush.msra.mxu0 %v110
    %905 = vmatmul.f32.gmra.mxu0 %v37
    %v906 = vpop.f32.mrf.mxu0
    %v907 = vadd.f32 %v887, %v906
    %908 = vdwg.mxu0
    %909 = vmatpush.msra.mxu0 %v234
    %910 = vmatpush.msra.mxu0 %v230
    %911 = vmatpush.msra.mxu0 %v226
    %912 = vmatpush.msra.mxu0 %v222
    %913 = vmatpush.msra.mxu0 %v218
    %914 = vmatpush.msra.mxu0 %v214
    %915 = vmatpush.msra.mxu0 %v210
    %916 = vmatpush.msra.mxu0 %v206
    %917 = vmatpush.msra.mxu0 %v202
    %918 = vmatpush.msra.mxu0 %v198
    %919 = vmatpush.msra.mxu0 %v194
    %920 = vmatpush.msra.mxu0 %v190
    %921 = vmatpush.msra.mxu0 %v186
    %922 = vmatpush.msra.mxu0 %v182
    %923 = vmatpush.msra.mxu0 %v178
    %924 = vmatpush.msra.mxu0 %v174
    %925 = vmatmul.f32.gmra.mxu0 %v38
    %v926 = vpop.f32.mrf.mxu0
    %v927 = vadd.f32 %v907, %v926
    %928 = vdwg.mxu0
    %929 = vmatpush.msra.mxu0 %v298
    %930 = vmatpush.msra.mxu0 %v294
    %931 = vmatpush.msra.mxu0 %v290
    %932 = vmatpush.msra.mxu0 %v286
    %933 = vmatpush.msra.mxu0 %v282
    %934 = vmatpush.msra.mxu0 %v278
    %935 = vmatpush.msra.mxu0 %v274
    %936 = vmatpush.msra.mxu0 %v270
    %937 = vmatpush.msra.mxu0 %v266
    %938 = vmatpush.msra.mxu0 %v262
    %939 = vmatpush.msra.mxu0 %v258
    %940 = vmatpush.msra.mxu0 %v254
    %941 = vmatpush.msra.mxu0 %v250
    %942 = vmatpush.msra.mxu0 %v246
    %943 = vmatpush.msra.mxu0 %v242
    %944 = vmatpush.msra.mxu0 %v238
    %945 = vmatmul.f32.gmra.mxu0 %v39
    %v946 = vpop.f32.mrf.mxu0
    %v947 = vadd.f32 %v927, %v946
    %948 = vdwg.mxu0
    %949 = vmatpush.msra.mxu0 %v362
    %950 = vmatpush.msra.mxu0 %v358
    %951 = vmatpush.msra.mxu0 %v354
    %952 = vmatpush.msra.mxu0 %v350
    %953 = vmatpush.msra.mxu0 %v346
    %954 = vmatpush.msra.mxu0 %v342
    %955 = vmatpush.msra.mxu0 %v338
    %956 = vmatpush.msra.mxu0 %v334
    %957 = vmatpush.msra.mxu0 %v330
    %958 = vmatpush.msra.mxu0 %v326
    %959 = vmatpush.msra.mxu0 %v322
    %960 = vmatpush.msra.mxu0 %v318
    %961 = vmatpush.msra.mxu0 %v314
    %962 = vmatpush.msra.mxu0 %v310
    %963 = vmatpush.msra.mxu0 %v306
    %964 = vmatpush.msra.mxu0 %v302
    %965 = vmatmul.f32.gmra.mxu0 %v40
    %v966 = vpop.f32.mrf.mxu0
    %v967 = vadd.f32 %v947, %v966
    %968 = vdwg.mxu0
    %969 = vmatpush.msra.mxu0 %v426
    %970 = vmatpush.msra.mxu0 %v422
    %971 = vmatpush.msra.mxu0 %v418
    %972 = vmatpush.msra.mxu0 %v414
    %973 = vmatpush.msra.mxu0 %v410
    %974 = vmatpush.msra.mxu0 %v406
    %975 = vmatpush.msra.mxu0 %v402
    %976 = vmatpush.msra.mxu0 %v398
    %977 = vmatpush.msra.mxu0 %v394
    %978 = vmatpush.msra.mxu0 %v390
    %979 = vmatpush.msra.mxu0 %v386
    %980 = vmatpush.msra.mxu0 %v382
    %981 = vmatpush.msra.mxu0 %v378
    %982 = vmatpush.msra.mxu0 %v374
    %983 = vmatpush.msra.mxu0 %v370
    %984 = vmatpush.msra.mxu0 %v366
    %985 = vmatmul.f32.gmra.mxu0 %v41
    %v986 = vpop.f32.mrf.mxu0
    %v987 = vadd.f32 %v967, %v986
    %988 = vdwg.mxu0
    %989 = vmatpush.msra.mxu0 0.0
    %990 = vmatpush.msra.mxu0 0.0
    %991 = vmatpush.msra.mxu0 0.0
    %992 = vmatpush.msra.mxu0 0.0
    %993 = vmatpush.msra.mxu0 0.0
    %994 = vmatpush.msra.mxu0 0.0
    %995 = vmatpush.msra.mxu0 0.0
    %996 = vmatpush.msra.mxu0 0.0
    %997 = vmatpush.msra.mxu0 0.0
    %998 = vmatpush.msra.mxu0 0.0
    %999 = vmatpush.msra.mxu0 0.0
    %1000 = vmatpush.msra.mxu0 0.0
    %1001 = vmatpush.msra.mxu0 0.0
    %1002 = vmatpush.msra.mxu0 0.0
    %1003 = vmatpush.msra.mxu0 %v434
    %1004 = vmatpush.msra.mxu0 %v430
    %1005 = vmatmul.f32.gmra.mxu0 %v447
    %v1006 = vpop.f32.mrf.mxu0
    %v1007 = vadd.f32 %v987, %v1006
    %1008 = vdwg.mxu0
    %v1009 = vmax.f32 %v587, 0.0
    %v1010 = vmax.f32 %v727, 0.0
    %v1011 = vmax.f32 %v867, 0.0
    %v1012 = vmax.f32 %v1007, 0.0
    %v1013 = vld [vmem:[%s3] sm:$0xff]
    %v1014 = vld [vmem:[%s3 + $0x8] sm:$0xff]
    %v1015 = vld [vmem:[%s3 + $0x10] sm:$0xff]
    %v1016 = vld [vmem:[%s3 + $0x18] sm:$0xff]
    %v1017 = vld [vmem:[%s3 + $0x20] sm:$0xff]
    %v1018 = vld [vmem:[%s3 + $0x28] sm:$0xff]
    %v1019 = vld [vmem:[%s3 + $0x30] sm:$0xff]
    %v1020 = vld [vmem:[%s3 + $0x38] sm:$0xff]
    %v1021 = vld [vmem:[%s3 + $0x40] sm:$0xff]
    %v1022 = vld [vmem:[%s3 + $0x48] sm:$0xff]
    %v1023 = vld [vmem:[%s3 + $0x50] sm:$0xff]
    %v1024 = vld [vmem:[%s3 + $0x58] sm:$0xff]
    %v1025 = vld [vmem:[%s3 + $0x60] sm:$0xff]
    %v1026 = vld [vmem:[%s3 + $0x68] sm:$0xff]
    %v1027 = vld [vmem:[%s3 + $0x70] sm:$0xff]
    %v1028 = vld [vmem:[%s3 + $0x78] sm:$0xff]
    %v1029 = vld [vmem:[%s3 + $0x80] sm:$0xff]
    %v1030 = vld [vmem:[%s3 + $0x88] sm:$0xff]
    %v1031 = vld [vmem:[%s3 + $0x90] sm:$0xff]
    %v1032 = vld [vmem:[%s3 + $0x98] sm:$0xff]
    %v1033 = vld [vmem:[%s3 + $0xa0] sm:$0xff]
    %v1034 = vld [vmem:[%s3 + $0xa8] sm:$0xff]
    %v1035 = vld [vmem:[%s3 + $0xb0] sm:$0xff]
    %v1036 = vld [vmem:[%s3 + $0xb8] sm:$0xff]
    %v1037 = vld [vmem:[%s3 + $0xc0] sm:$0xff]
    %v1038 = vld [vmem:[%s3 + $0xc8] sm:$0xff]
    %v1039 = vld [vmem:[%s3 + $0xd0] sm:$0xff]
    %v1040 = vld [vmem:[%s3 + $0xd8] sm:$0xff]
    %v1041 = vld [vmem:[%s3 + $0xe0] sm:$0xff]
    %v1042 = vld [vmem:[%s3 + $0xe8] sm:$0xff]
    %v1043 = vld [vmem:[%s3 + $0xf0] sm:$0xff]
    %v1044 = vld [vmem:[%s3 + $0xf8] sm:$0xff]
    %v1045 = vld [vmem:[%s3 + $0x100] sm:$0xff]
    %v1046 = vld [vmem:[%s3 + $0x108] sm:$0xff]
    %v1047 = vld [vmem:[%s3 + $0x110] sm:$0xff]
    %v1048 = vld [vmem:[%s3 + $0x118] sm:$0xff]
    %v1049 = vld [vmem:[%s3 + $0x120] sm:$0xff]
    %v1050 = vld [vmem:[%s3 + $0x128] sm:$0xff]
    %v1051 = vld [vmem:[%s3 + $0x130] sm:$0xff]
    %v1052 = vld [vmem:[%s3 + $0x138] sm:$0xff]
    %v1053 = vld [vmem:[%s3 + $0x140] sm:$0xff]
    %v1054 = vld [vmem:[%s3 + $0x148] sm:$0xff]
    %v1055 = vld [vmem:[%s3 + $0x150] sm:$0xff]
    %v1056 = vld [vmem:[%s3 + $0x158] sm:$0xff]
    %v1057 = vld [vmem:[%s3 + $0x160] sm:$0xff]
    %v1058 = vld [vmem:[%s3 + $0x168] sm:$0xff]
    %v1059 = vld [vmem:[%s3 + $0x170] sm:$0xff]
    %v1060 = vld [vmem:[%s3 + $0x178] sm:$0xff]
    %v1061 = vld [vmem:[%s3 + $0x180] sm:$0xff]
    %v1062 = vld [vmem:[%s4] sm:$0x1]
    %v1064 = vperm.slane %v1062, 0
    %vm1066 = vcmask 64512
    %v1068 = vsel %vm1066, %v1012, 0
    %1070 = vmatpush.msra.mxu0 %v1028
    %1071 = vmatpush.msra.mxu0 %v1027
    %1072 = vmatpush.msra.mxu0 %v1026
    %1073 = vmatpush.msra.mxu0 %v1025
    %1074 = vmatpush.msra.mxu0 %v1024
    %1075 = vmatpush.msra.mxu0 %v1023
    %1076 = vmatpush.msra.mxu0 %v1022
    %1077 = vmatpush.msra.mxu0 %v1021
    %1078 = vmatpush.msra.mxu0 %v1020
    %1079 = vmatpush.msra.mxu0 %v1019
    %1080 = vmatpush.msra.mxu0 %v1018
    %1081 = vmatpush.msra.mxu0 %v1017
    %1082 = vmatpush.msra.mxu0 %v1016
    %1083 = vmatpush.msra.mxu0 %v1015
    %1084 = vmatpush.msra.mxu0 %v1014
    %1085 = vmatpush.msra.mxu0 %v1013
    %1086 = vmatmul.f32.gmra.mxu0 %v1009
    %v1087 = vpop.f32.mrf.mxu0
    %v1088 = vadd.f32 %v1064, %v1087
    %1089 = vdwg.mxu0
    %1090 = vmatpush.msra.mxu0 %v1044
    %1091 = vmatpush.msra.mxu0 %v1043
    %1092 = vmatpush.msra.mxu0 %v1042
    %1093 = vmatpush.msra.mxu0 %v1041
    %1094 = vmatpush.msra.mxu0 %v1040
    %1095 = vmatpush.msra.mxu0 %v1039
    %1096 = vmatpush.msra.mxu0 %v1038
    %1097 = vmatpush.msra.mxu0 %v1037
    %1098 = vmatpush.msra.mxu0 %v1036
    %1099 = vmatpush.msra.mxu0 %v1035
    %1100 = vmatpush.msra.mxu0 %v1034
    %1101 = vmatpush.msra.mxu0 %v1033
    %1102 = vmatpush.msra.mxu0 %v1032
    %1103 = vmatpush.msra.mxu0 %v1031
    %1104 = vmatpush.msra.mxu0 %v1030
    %1105 = vmatpush.msra.mxu0 %v1029
    %1106 = vmatmul.f32.gmra.mxu0 %v1010
    %v1107 = vpop.f32.mrf.mxu0
    %v1108 = vadd.f32 %v1088, %v1107
    %1109 = vdwg.mxu0
    %1110 = vmatpush.msra.mxu0 %v1060
    %1111 = vmatpush.msra.mxu0 %v1059
    %1112 = vmatpush.msra.mxu0 %v1058
    %1113 = vmatpush.msra.mxu0 %v1057
    %1114 = vmatpush.msra.mxu0 %v1056
    %1115 = vmatpush.msra.mxu0 %v1055
    %1116 = vmatpush.msra.mxu0 %v1054
    %1117 = vmatpush.msra.mxu0 %v1053
    %1118 = vmatpush.msra.mxu0 %v1052
    %1119 = vmatpush.msra.mxu0 %v1051
    %1120 = vmatpush.msra.mxu0 %v1050
    %1121 = vmatpush.msra.mxu0 %v1049
    %1122 = vmatpush.msra.mxu0 %v1048
    %1123 = vmatpush.msra.mxu0 %v1047
    %1124 = vmatpush.msra.mxu0 %v1046
    %1125 = vmatpush.msra.mxu0 %v1045
    %1126 = vmatmul.f32.gmra.mxu0 %v1011
    %v1127 = vpop.f32.mrf.mxu0
    %v1128 = vadd.f32 %v1108, %v1127
    %1129 = vdwg.mxu0
    %1130 = vmatpush.msra.mxu0 0.0
    %1131 = vmatpush.msra.mxu0 0.0
    %1132 = vmatpush.msra.mxu0 0.0
    %1133 = vmatpush.msra.mxu0 0.0
    %1134 = vmatpush.msra.mxu0 0.0
    %1135 = vmatpush.msra.mxu0 0.0
    %1136 = vmatpush.msra.mxu0 0.0
    %1137 = vmatpush.msra.mxu0 0.0
    %1138 = vmatpush.msra.mxu0 0.0
    %1139 = vmatpush.msra.mxu0 0.0
    %1140 = vmatpush.msra.mxu0 0.0
    %1141 = vmatpush.msra.mxu0 0.0
    %1142 = vmatpush.msra.mxu0 0.0
    %1143 = vmatpush.msra.mxu0 0.0
    %1144 = vmatpush.msra.mxu0 0.0
    %1145 = vmatpush.msra.mxu0 %v1061
    %1146 = vmatmul.f32.gmra.mxu0 %v1068
    %v1147 = vpop.f32.mrf.mxu0
    %v1148 = vadd.f32 %v1128, %v1147
    %1149 = vdwg.mxu0
    %v1150 = vmax.f32 %v1148, 0.0
    %v1151 = vld [vmem:[%s5] sm:$0xff]
    %v1152 = vld [vmem:[%s5 + $0x8] sm:$0xff]
    %v1153 = vld [vmem:[%s5 + $0x10] sm:$0xff]
    %v1154 = vld [vmem:[%s5 + $0x18] sm:$0xff]
    %v1155 = vld [vmem:[%s5 + $0x20] sm:$0x3]
    %v1156 = vld [vmem:[%s5 + $0x28] sm:$0x3]
    %v1157 = vld [vmem:[%s5 + $0x30] sm:$0x3]
    %v1158 = vld [vmem:[%s5 + $0x38] sm:$0x3]
    %v1159 = vld [vmem:[%s6] sm:$0xf]
    %v1161 = vperm.slane %v1159, 0
    %v1162 = vperm.slane %v1159, 1
    %v1163 = vperm.slane %v1159, 2
    %v1164 = vperm.slane %v1159, 3
    %vm1169 = vcmask 80896
    %v1171 = vsel %vm1169, %v1150, 0
    %vm1173 = vcmask 1041408
    %v1175 = vsel %vm1173, %v1155, 0
    %v1178 = vsel %vm1173, %v1156, 0
    %v1181 = vsel %vm1173, %v1157, 0
    %v1184 = vsel %vm1173, %v1158, 0
    %1186 = vmatpush.msra.mxu0 0.0
    %1187 = vmatpush.msra.mxu0 0.0
    %1188 = vmatpush.msra.mxu0 0.0
    %1189 = vmatpush.msra.mxu0 0.0
    %1190 = vmatpush.msra.mxu0 0.0
    %1191 = vmatpush.msra.mxu0 0.0
    %1192 = vmatpush.msra.mxu0 0.0
    %1193 = vmatpush.msra.mxu0 0.0
    %1194 = vmatpush.msra.mxu0 0.0
    %1195 = vmatpush.msra.mxu0 0.0
    %1196 = vmatpush.msra.mxu0 0.0
    %1197 = vmatpush.msra.mxu0 0.0
    %1198 = vmatpush.msra.mxu0 0.0
    %1199 = vmatpush.msra.mxu0 0.0
    %1200 = vmatpush.msra.mxu0 %v1175
    %1201 = vmatpush.msra.mxu0 %v1151
    %1202 = vmatmul.f32.gmra.mxu0 %v1171
    %v1203 = vpop.f32.mrf.mxu0
    %v1204 = vadd.f32 %v1161, %v1203
    %1205 = vdwg.mxu0
    %1206 = vmatpush.msra.mxu0 0.0
    %1207 = vmatpush.msra.mxu0 0.0
    %1208 = vmatpush.msra.mxu0 0.0
    %1209 = vmatpush.msra.mxu0 0.0
    %1210 = vmatpush.msra.mxu0 0.0
    %1211 = vmatpush.msra.mxu0 0.0
    %1212 = vmatpush.msra.mxu0 0.0
    %1213 = vmatpush.msra.mxu0 0.0
    %1214 = vmatpush.msra.mxu0 0.0
    %1215 = vmatpush.msra.mxu0 0.0
    %1216 = vmatpush.msra.mxu0 0.0
    %1217 = vmatpush.msra.mxu0 0.0
    %1218 = vmatpush.msra.mxu0 0.0
    %1219 = vmatpush.msra.mxu0 0.0
    %1220 = vmatpush.msra.mxu0 %v1178
    %1221 = vmatpush.msra.mxu0 %v1152
    %1222 = vmatmul.f32.gmra.mxu0 %v1171
    %v1223 = vpop.f32.mrf.mxu0
    %v1224 = vadd.f32 %v1162, %v1223
    %1225 = vdwg.mxu0
    %1226 = vmatpush.msra.mxu0 0.0
    %1227 = vmatpush.msra.mxu0 0.0
    %1228 = vmatpush.msra.mxu0 0.0
    %1229 = vmatpush.msra.mxu0 0.0
    %1230 = vmatpush.msra.mxu0 0.0
    %1231 = vmatpush.msra.mxu0 0.0
    %1232 = vmatpush.msra.mxu0 0.0
    %1233 = vmatpush.msra.mxu0 0.0
    %1234 = vmatpush.msra.mxu0 0.0
    %1235 = vmatpush.msra.mxu0 0.0
    %1236 = vmatpush.msra.mxu0 0.0
    %1237 = vmatpush.msra.mxu0 0.0
    %1238 = vmatpush.msra.mxu0 0.0
    %1239 = vmatpush.msra.mxu0 0.0
    %1240 = vmatpush.msra.mxu0 %v1181
    %1241 = vmatpush.msra.mxu0 %v1153
    %1242 = vmatmul.f32.gmra.mxu0 %v1171
    %v1243 = vpop.f32.mrf.mxu0
    %v1244 = vadd.f32 %v1163, %v1243
    %1245 = vdwg.mxu0
    %1246 = vmatpush.msra.mxu0 0.0
    %1247 = vmatpush.msra.mxu0 0.0
    %1248 = vmatpush.msra.mxu0 0.0
    %1249 = vmatpush.msra.mxu0 0.0
    %1250 = vmatpush.msra.mxu0 0.0
    %1251 = vmatpush.msra.mxu0 0.0
    %1252 = vmatpush.msra.mxu0 0.0
    %1253 = vmatpush.msra.mxu0 0.0
    %1254 = vmatpush.msra.mxu0 0.0
    %1255 = vmatpush.msra.mxu0 0.0
    %1256 = vmatpush.msra.mxu0 0.0
    %1257 = vmatpush.msra.mxu0 0.0
    %1258 = vmatpush.msra.mxu0 0.0
    %1259 = vmatpush.msra.mxu0 0.0
    %1260 = vmatpush.msra.mxu0 %v1184
    %1261 = vmatpush.msra.mxu0 %v1154
    %1262 = vmatmul.f32.gmra.mxu0 %v1171
    %v1263 = vpop.f32.mrf.mxu0
    %v1264 = vadd.f32 %v1164, %v1263
    %1265 = vdwg.mxu0
    %v1266 = vmax.f32 %v1204, 0.0
    %v1267 = vmax.f32 %v1224, 0.0
    %v1268 = vmax.f32 %v1244, 0.0
    %v1269 = vmax.f32 %v1264, 0.0
    %v1270 = vld [vmem:[%s7] sm:$0xff]
    %v1271 = vld [vmem:[%s7 + $0x8] sm:$0xff]
    %v1272 = vld [vmem:[%s7 + $0x10] sm:$0xff]
    %v1273 = vld [vmem:[%s7 + $0x18] sm:$0xff]
    %v1274 = vld [vmem:[%s7 + $0x20] sm:$0xff]
    %v1275 = vld [vmem:[%s7 + $0x28] sm:$0xff]
    %v1276 = vld [vmem:[%s7 + $0x30] sm:$0xff]
    %v1277 = vld [vmem:[%s7 + $0x38] sm:$0xff]
    %v1278 = vld [vmem:[%s7 + $0x40] sm:$0xff]
    %v1279 = vld [vmem:[%s7 + $0x48] sm:$0xff]
    %v1280 = vld [vmem:[%s7 + $0x50] sm:$0xff]
    %v1281 = vld [vmem:[%s7 + $0x58] sm:$0xff]
    %v1282 = vld [vmem:[%s7 + $0x60] sm:$0xff]
    %v1283 = vld [vmem:[%s7 + $0x68] sm:$0xff]
    %v1284 = vld [vmem:[%s7 + $0x70] sm:$0xff]
    %v1285 = vld [vmem:[%s7 + $0x78] sm:$0xff]
    %v1286 = vld [vmem:[%s7 + $0x80] sm:$0xff]
    %v1287 = vld [vmem:[%s7 + $0x88] sm:$0xff]
    %v1288 = vld [vmem:[%s7 + $0x90] sm:$0xff]
    %v1289 = vld [vmem:[%s7 + $0x98] sm:$0xff]
    %v1290 = vld [vmem:[%s7 + $0xa0] sm:$0xff]
    %v1291 = vld [vmem:[%s7 + $0xa8] sm:$0xff]
    %v1292 = vld [vmem:[%s7 + $0xb0] sm:$0xff]
    %v1293 = vld [vmem:[%s7 + $0xb8] sm:$0xff]
    %v1294 = vld [vmem:[%s7 + $0xc0] sm:$0xff]
    %v1295 = vld [vmem:[%s7 + $0xc8] sm:$0xff]
    %v1296 = vld [vmem:[%s7 + $0xd0] sm:$0xff]
    %v1297 = vld [vmem:[%s7 + $0xd8] sm:$0xff]
    %v1298 = vld [vmem:[%s7 + $0xe0] sm:$0xff]
    %v1299 = vld [vmem:[%s7 + $0xe8] sm:$0xff]
    %v1300 = vld [vmem:[%s7 + $0xf0] sm:$0xff]
    %v1301 = vld [vmem:[%s7 + $0xf8] sm:$0xff]
    %v1302 = vld [vmem:[%s7 + $0x100] sm:$0xff]
    %v1303 = vld [vmem:[%s7 + $0x108] sm:$0xff]
    %v1304 = vld [vmem:[%s7 + $0x110] sm:$0xff]
    %v1305 = vld [vmem:[%s7 + $0x118] sm:$0xff]
    %v1306 = vld [vmem:[%s7 + $0x120] sm:$0xff]
    %v1307 = vld [vmem:[%s7 + $0x128] sm:$0xff]
    %v1308 = vld [vmem:[%s7 + $0x130] sm:$0xff]
    %v1309 = vld [vmem:[%s7 + $0x138] sm:$0xff]
    %v1310 = vld [vmem:[%s7 + $0x140] sm:$0xff]
    %v1311 = vld [vmem:[%s7 + $0x148] sm:$0xff]
    %v1312 = vld [vmem:[%s7 + $0x150] sm:$0xff]
    %v1313 = vld [vmem:[%s7 + $0x158] sm:$0xff]
    %v1314 = vld [vmem:[%s7 + $0x160] sm:$0xff]
    %v1315 = vld [vmem:[%s7 + $0x168] sm:$0xff]
    %v1316 = vld [vmem:[%s7 + $0x170] sm:$0xff]
    %v1317 = vld [vmem:[%s7 + $0x178] sm:$0xff]
    %v1318 = vld [vmem:[%s7 + $0x180] sm:$0xff]
    %v1319 = vld [vmem:[%s7 + $0x188] sm:$0xff]
    %v1320 = vld [vmem:[%s7 + $0x190] sm:$0xff]
    %v1321 = vld [vmem:[%s7 + $0x198] sm:$0xff]
    %v1322 = vld [vmem:[%s7 + $0x1a0] sm:$0xff]
    %v1323 = vld [vmem:[%s7 + $0x1a8] sm:$0xff]
    %v1324 = vld [vmem:[%s7 + $0x1b0] sm:$0xff]
    %v1325 = vld [vmem:[%s7 + $0x1b8] sm:$0xff]
    %v1326 = vld [vmem:[%s7 + $0x1c0] sm:$0xff]
    %v1327 = vld [vmem:[%s7 + $0x1c8] sm:$0xff]
    %v1328 = vld [vmem:[%s7 + $0x1d0] sm:$0xff]
    %v1329 = vld [vmem:[%s7 + $0x1d8] sm:$0xff]
    %v1330 = vld [vmem:[%s7 + $0x1e0] sm:$0xff]
    %v1331 = vld [vmem:[%s7 + $0x1e8] sm:$0xff]
    %v1332 = vld [vmem:[%s7 + $0x1f0] sm:$0xff]
    %v1333 = vld [vmem:[%s7 + $0x1f8] sm:$0xff]
    %v1334 = vld [vmem:[%s7 + $0x200] sm:$0xff]
    %v1335 = vld [vmem:[%s7 + $0x208] sm:$0xff]
    %v1336 = vld [vmem:[%s7 + $0x210] sm:$0xff]
    %v1337 = vld [vmem:[%s7 + $0x218] sm:$0xff]
    %v1338 = vld [vmem:[%s7 + $0x220] sm:$0xff]
    %v1339 = vld [vmem:[%s7 + $0x228] sm:$0xff]
    %v1340 = vld [vmem:[%s7 + $0x230] sm:$0xff]
    %v1341 = vld [vmem:[%s7 + $0x238] sm:$0xff]
    %v1342 = vld [vmem:[%s7 + $0x240] sm:$0xff]
    %v1343 = vld [vmem:[%s7 + $0x248] sm:$0xff]
    %v1344 = vld [vmem:[%s7 + $0x250] sm:$0xff]
    %v1345 = vld [vmem:[%s7 + $0x258] sm:$0xff]
    %v1346 = vld [vmem:[%s7 + $0x260] sm:$0xff]
    %v1347 = vld [vmem:[%s7 + $0x268] sm:$0xff]
    %v1348 = vld [vmem:[%s7 + $0x270] sm:$0xff]
    %v1349 = vld [vmem:[%s7 + $0x278] sm:$0xff]
    %v1350 = vld [vmem:[%s7 + $0x280] sm:$0xff]
    %v1351 = vld [vmem:[%s7 + $0x288] sm:$0xff]
    %v1352 = vld [vmem:[%s7 + $0x290] sm:$0xff]
    %v1353 = vld [vmem:[%s7 + $0x298] sm:$0xff]
    %v1354 = vld [vmem:[%s7 + $0x2a0] sm:$0xff]
    %v1355 = vld [vmem:[%s7 + $0x2a8] sm:$0xff]
    %v1356 = vld [vmem:[%s7 + $0x2b0] sm:$0xff]
    %v1357 = vld [vmem:[%s7 + $0x2b8] sm:$0xff]
    %v1358 = vld [vmem:[%s7 + $0x2c0] sm:$0xff]
    %v1359 = vld [vmem:[%s7 + $0x2c8] sm:$0xff]
    %v1360 = vld [vmem:[%s7 + $0x2d0] sm:$0xff]
    %v1361 = vld [vmem:[%s7 + $0x2d8] sm:$0xff]
    %v1362 = vld [vmem:[%s7 + $0x2e0] sm:$0xff]
    %v1363 = vld [vmem:[%s7 + $0x2e8] sm:$0xff]
    %v1364 = vld [vmem:[%s7 + $0x2f0] sm:$0xff]
    %v1365 = vld [vmem:[%s7 + $0x2f8] sm:$0xff]
    %v1366 = vld [vmem:[%s7 + $0x300] sm:$0xff]
    %v1367 = vld [vmem:[%s7 + $0x308] sm:$0xff]
    %v1368 = vld [vmem:[%s7 + $0x310] sm:$0xff]
    %v1369 = vld [vmem:[%s7 + $0x318] sm:$0xff]
    %v1370 = vld [vmem:[%s7 + $0x320] sm:$0xff]
    %v1371 = vld [vmem:[%s7 + $0x328] sm:$0xff]
    %v1372 = vld [vmem:[%s7 + $0x330] sm:$0xff]
    %v1373 = vld [vmem:[%s7 + $0x338] sm:$0xff]
    %v1374 = vld [vmem:[%s7 + $0x340] sm:$0xff]
    %v1375 = vld [vmem:[%s7 + $0x348] sm:$0xff]
    %v1376 = vld [vmem:[%s7 + $0x350] sm:$0xff]
    %v1377 = vld [vmem:[%s7 + $0x358] sm:$0xff]
    %v1378 = vld [vmem:[%s7 + $0x360] sm:$0xff]
    %v1379 = vld [vmem:[%s7 + $0x368] sm:$0xff]
    %v1380 = vld [vmem:[%s7 + $0x370] sm:$0xff]
    %v1381 = vld [vmem:[%s7 + $0x378] sm:$0xff]
    %v1382 = vld [vmem:[%s7 + $0x380] sm:$0xff]
    %v1383 = vld [vmem:[%s7 + $0x388] sm:$0xff]
    %v1384 = vld [vmem:[%s7 + $0x390] sm:$0xff]
    %v1385 = vld [vmem:[%s7 + $0x398] sm:$0xff]
    %v1386 = vld [vmem:[%s7 + $0x3a0] sm:$0xff]
    %v1387 = vld [vmem:[%s7 + $0x3a8] sm:$0xff]
    %v1388 = vld [vmem:[%s7 + $0x3b0] sm:$0xff]
    %v1389 = vld [vmem:[%s7 + $0x3b8] sm:$0xff]
    %v1390 = vld [vmem:[%s7 + $0x3c0] sm:$0xff]
    %v1391 = vld [vmem:[%s7 + $0x3c8] sm:$0xff]
    %v1392 = vld [vmem:[%s7 + $0x3d0] sm:$0xff]
    %v1393 = vld [vmem:[%s7 + $0x3d8] sm:$0xff]
    %v1394 = vld [vmem:[%s7 + $0x3e0] sm:$0xff]
    %v1395 = vld [vmem:[%s7 + $0x3e8] sm:$0xff]
    %v1396 = vld [vmem:[%s7 + $0x3f0] sm:$0xff]
    %v1397 = vld [vmem:[%s7 + $0x3f8] sm:$0xff]
    %v1398 = vld [vmem:[%s7 + $0x400] sm:$0xff]
    %v1399 = vld [vmem:[%s7 + $0x408] sm:$0xff]
    %v1400 = vld [vmem:[%s7 + $0x410] sm:$0xff]
    %v1401 = vld [vmem:[%s7 + $0x418] sm:$0xff]
    %v1402 = vld [vmem:[%s7 + $0x420] sm:$0xff]
    %v1403 = vld [vmem:[%s7 + $0x428] sm:$0xff]
    %v1404 = vld [vmem:[%s7 + $0x430] sm:$0xff]
    %v1405 = vld [vmem:[%s7 + $0x438] sm:$0xff]
    %v1406 = vld [vmem:[%s7 + $0x440] sm:$0xff]
    %v1407 = vld [vmem:[%s7 + $0x448] sm:$0xff]
    %v1408 = vld [vmem:[%s7 + $0x450] sm:$0xff]
    %v1409 = vld [vmem:[%s7 + $0x458] sm:$0xff]
    %v1410 = vld [vmem:[%s7 + $0x460] sm:$0xff]
    %v1411 = vld [vmem:[%s7 + $0x468] sm:$0xff]
    %v1412 = vld [vmem:[%s7 + $0x470] sm:$0xff]
    %v1413 = vld [vmem:[%s7 + $0x478] sm:$0xff]
    %v1414 = vld [vmem:[%s7 + $0x480] sm:$0xff]
    %v1415 = vld [vmem:[%s7 + $0x488] sm:$0xff]
    %v1416 = vld [vmem:[%s7 + $0x490] sm:$0xff]
    %v1417 = vld [vmem:[%s7 + $0x498] sm:$0xff]
    %v1418 = vld [vmem:[%s7 + $0x4a0] sm:$0xff]
    %v1419 = vld [vmem:[%s7 + $0x4a8] sm:$0xff]
    %v1420 = vld [vmem:[%s7 + $0x4b0] sm:$0xff]
    %v1421 = vld [vmem:[%s7 + $0x4b8] sm:$0xff]
    %v1422 = vld [vmem:[%s7 + $0x4c0] sm:$0xff]
    %v1423 = vld [vmem:[%s7 + $0x4c8] sm:$0xff]
    %v1424 = vld [vmem:[%s7 + $0x4d0] sm:$0xff]
    %v1425 = vld [vmem:[%s7 + $0x4d8] sm:$0xff]
    %v1426 = vld [vmem:[%s7 + $0x4e0] sm:$0xff]
    %v1427 = vld [vmem:[%s7 + $0x4e8] sm:$0xff]
    %v1428 = vld [vmem:[%s7 + $0x4f0] sm:$0xff]
    %v1429 = vld [vmem:[%s7 + $0x4f8] sm:$0xff]
    %v1430 = vld [vmem:[%s7 + $0x500] sm:$0xff]
    %v1431 = vld [vmem:[%s7 + $0x508] sm:$0xff]
    %v1432 = vld [vmem:[%s7 + $0x510] sm:$0xff]
    %v1433 = vld [vmem:[%s7 + $0x518] sm:$0xff]
    %v1434 = vld [vmem:[%s7 + $0x520] sm:$0xff]
    %v1435 = vld [vmem:[%s7 + $0x528] sm:$0xff]
    %v1436 = vld [vmem:[%s7 + $0x530] sm:$0xff]
    %v1437 = vld [vmem:[%s7 + $0x538] sm:$0xff]
    %v1438 = vld [vmem:[%s7 + $0x540] sm:$0xff]
    %v1439 = vld [vmem:[%s7 + $0x548] sm:$0xff]
    %v1440 = vld [vmem:[%s7 + $0x550] sm:$0xff]
    %v1441 = vld [vmem:[%s7 + $0x558] sm:$0xff]
    %v1442 = vld [vmem:[%s7 + $0x560] sm:$0xff]
    %v1443 = vld [vmem:[%s7 + $0x568] sm:$0xff]
    %v1444 = vld [vmem:[%s7 + $0x570] sm:$0xff]
    %v1445 = vld [vmem:[%s7 + $0x578] sm:$0xff]
    %v1446 = vld [vmem:[%s7 + $0x580] sm:$0xff]
    %v1447 = vld [vmem:[%s7 + $0x588] sm:$0xff]
    %v1448 = vld [vmem:[%s7 + $0x590] sm:$0xff]
    %v1449 = vld [vmem:[%s7 + $0x598] sm:$0xff]
    %v1450 = vld [vmem:[%s7 + $0x5a0] sm:$0xff]
    %v1451 = vld [vmem:[%s7 + $0x5a8] sm:$0xff]
    %v1452 = vld [vmem:[%s7 + $0x5b0] sm:$0xff]
    %v1453 = vld [vmem:[%s7 + $0x5b8] sm:$0xff]
    %v1454 = vld [vmem:[%s7 + $0x5c0] sm:$0xff]
    %v1455 = vld [vmem:[%s7 + $0x5c8] sm:$0xff]
    %v1456 = vld [vmem:[%s7 + $0x5d0] sm:$0xff]
    %v1457 = vld [vmem:[%s7 + $0x5d8] sm:$0xff]
    %v1458 = vld [vmem:[%s7 + $0x5e0] sm:$0xff]
    %v1459 = vld [vmem:[%s7 + $0x5e8] sm:$0xff]
    %v1460 = vld [vmem:[%s7 + $0x5f0] sm:$0xff]
    %v1461 = vld [vmem:[%s7 + $0x5f8] sm:$0xff]
    %v1462 = vld [vmem:[%s7 + $0x600] sm:$0xff]
    %v1463 = vld [vmem:[%s7 + $0x608] sm:$0xff]
    %v1464 = vld [vmem:[%s7 + $0x610] sm:$0xff]
    %v1465 = vld [vmem:[%s7 + $0x618] sm:$0xff]
    %v1466 = vld [vmem:[%s7 + $0x620] sm:$0xff]
    %v1467 = vld [vmem:[%s7 + $0x628] sm:$0xff]
    %v1468 = vld [vmem:[%s7 + $0x630] sm:$0xff]
    %v1469 = vld [vmem:[%s7 + $0x638] sm:$0xff]
    %v1470 = vld [vmem:[%s7 + $0x640] sm:$0xff]
    %v1471 = vld [vmem:[%s7 + $0x648] sm:$0xff]
    %v1472 = vld [vmem:[%s7 + $0x650] sm:$0xff]
    %v1473 = vld [vmem:[%s7 + $0x658] sm:$0xff]
    %v1474 = vld [vmem:[%s7 + $0x660] sm:$0xff]
    %v1475 = vld [vmem:[%s7 + $0x668] sm:$0xff]
    %v1476 = vld [vmem:[%s7 + $0x670] sm:$0xff]
    %v1477 = vld [vmem:[%s7 + $0x678] sm:$0xff]
    %v1478 = vld [vmem:[%s7 + $0x680] sm:$0xff]
    %v1479 = vld [vmem:[%s7 + $0x688] sm:$0xff]
    %v1480 = vld [vmem:[%s7 + $0x690] sm:$0xff]
    %v1481 = vld [vmem:[%s7 + $0x698] sm:$0xff]
    %v1482 = vld [vmem:[%s7 + $0x6a0] sm:$0xff]
    %v1483 = vld [vmem:[%s7 + $0x6a8] sm:$0xff]
    %v1484 = vld [vmem:[%s7 + $0x6b0] sm:$0xff]
    %v1485 = vld [vmem:[%s7 + $0x6b8] sm:$0xff]
    %v1486 = vld [vmem:[%s7 + $0x6c0] sm:$0xff]
    %v1487 = vld [vmem:[%s7 + $0x6c8] sm:$0xff]
    %v1488 = vld [vmem:[%s7 + $0x6d0] sm:$0xff]
    %v1489 = vld [vmem:[%s7 + $0x6d8] sm:$0xff]
    %v1490 = vld [vmem:[%s7 + $0x6e0] sm:$0xff]
    %v1491 = vld [vmem:[%s7 + $0x6e8] sm:$0xff]
    %v1492 = vld [vmem:[%s7 + $0x6f0] sm:$0xff]
    %v1493 = vld [vmem:[%s7 + $0x6f8] sm:$0xff]
    %v1494 = vld [vmem:[%s7 + $0x700] sm:$0xff]
    %v1495 = vld [vmem:[%s7 + $0x708] sm:$0xff]
    %v1496 = vld [vmem:[%s7 + $0x710] sm:$0xff]
    %v1497 = vld [vmem:[%s7 + $0x718] sm:$0xff]
    %v1498 = vld [vmem:[%s7 + $0x720] sm:$0xff]
    %v1499 = vld [vmem:[%s7 + $0x728] sm:$0xff]
    %v1500 = vld [vmem:[%s7 + $0x730] sm:$0xff]
    %v1501 = vld [vmem:[%s7 + $0x738] sm:$0xff]
    %v1502 = vld [vmem:[%s7 + $0x740] sm:$0xff]
    %v1503 = vld [vmem:[%s7 + $0x748] sm:$0xff]
    %v1504 = vld [vmem:[%s7 + $0x750] sm:$0xff]
    %v1505 = vld [vmem:[%s7 + $0x758] sm:$0xff]
    %v1506 = vld [vmem:[%s7 + $0x760] sm:$0xff]
    %v1507 = vld [vmem:[%s7 + $0x768] sm:$0xff]
    %v1508 = vld [vmem:[%s7 + $0x770] sm:$0xff]
    %v1509 = vld [vmem:[%s7 + $0x778] sm:$0xff]
    %v1510 = vld [vmem:[%s7 + $0x780] sm:$0xff]
    %v1511 = vld [vmem:[%s7 + $0x788] sm:$0xff]
    %v1512 = vld [vmem:[%s7 + $0x790] sm:$0xff]
    %v1513 = vld [vmem:[%s7 + $0x798] sm:$0xff]
    %v1514 = vld [vmem:[%s7 + $0x7a0] sm:$0xff]
    %v1515 = vld [vmem:[%s7 + $0x7a8] sm:$0xff]
    %v1516 = vld [vmem:[%s7 + $0x7b0] sm:$0xff]
    %v1517 = vld [vmem:[%s7 + $0x7b8] sm:$0xff]
    %v1518 = vld [vmem:[%s7 + $0x7c0] sm:$0xff]
    %v1519 = vld [vmem:[%s7 + $0x7c8] sm:$0xff]
    %v1520 = vld [vmem:[%s7 + $0x7d0] sm:$0xff]
    %v1521 = vld [vmem:[%s7 + $0x7d8] sm:$0xff]
    %v1522 = vld [vmem:[%s7 + $0x7e0] sm:$0xff]
    %v1523 = vld [vmem:[%s7 + $0x7e8] sm:$0xff]
    %v1524 = vld [vmem:[%s7 + $0x7f0] sm:$0xff]
    %v1525 = vld [vmem:[%s7 + $0x7f8] sm:$0xff]
    %v1526 = vld [vmem:[%s7 + $0x800] sm:$0xff]
    %v1527 = vld [vmem:[%s7 + $0x808] sm:$0xff]
    %v1528 = vld [vmem:[%s7 + $0x810] sm:$0xff]
    %v1529 = vld [vmem:[%s7 + $0x818] sm:$0xff]
    %v1530 = vld [vmem:[%s7 + $0x820] sm:$0xff]
    %v1531 = vld [vmem:[%s7 + $0x828] sm:$0xff]
    %v1532 = vld [vmem:[%s7 + $0x830] sm:$0xff]
    %v1533 = vld [vmem:[%s7 + $0x838] sm:$0xff]
    %v1534 = vld [vmem:[%s7 + $0x840] sm:$0xff]
    %v1535 = vld [vmem:[%s7 + $0x848] sm:$0xff]
    %v1536 = vld [vmem:[%s7 + $0x850] sm:$0xff]
    %v1537 = vld [vmem:[%s7 + $0x858] sm:$0xff]
    %v1538 = vld [vmem:[%s7 + $0x860] sm:$0xff]
    %v1539 = vld [vmem:[%s7 + $0x868] sm:$0xff]
    %v1540 = vld [vmem:[%s7 + $0x870] sm:$0xff]
    %v1541 = vld [vmem:[%s7 + $0x878] sm:$0xff]
    %v1542 = vld [vmem:[%s7 + $0x880] sm:$0xff]
    %v1543 = vld [vmem:[%s7 + $0x888] sm:$0xff]
    %v1544 = vld [vmem:[%s7 + $0x890] sm:$0xff]
    %v1545 = vld [vmem:[%s7 + $0x898] sm:$0xff]
    %v1546 = vld [vmem:[%s7 + $0x8a0] sm:$0xff]
    %v1547 = vld [vmem:[%s7 + $0x8a8] sm:$0xff]
    %v1548 = vld [vmem:[%s7 + $0x8b0] sm:$0xff]
    %v1549 = vld [vmem:[%s7 + $0x8b8] sm:$0xff]
    %v1550 = vld [vmem:[%s7 + $0x8c0] sm:$0xff]
    %v1551 = vld [vmem:[%s7 + $0x8c8] sm:$0xff]
    %v1552 = vld [vmem:[%s7 + $0x8d0] sm:$0xff]
    %v1553 = vld [vmem:[%s7 + $0x8d8] sm:$0xff]
    %v1554 = vld [vmem:[%s7 + $0x8e0] sm:$0xff]
    %v1555 = vld [vmem:[%s7 + $0x8e8] sm:$0xff]
    %v1556 = vld [vmem:[%s7 + $0x8f0] sm:$0xff]
    %v1557 = vld [vmem:[%s7 + $0x8f8] sm:$0xff]
    %v1558 = vld [vmem:[%s7 + $0x900] sm:$0xff]
    %v1559 = vld [vmem:[%s7 + $0x908] sm:$0xff]
    %v1560 = vld [vmem:[%s7 + $0x910] sm:$0xff]
    %v1561 = vld [vmem:[%s7 + $0x918] sm:$0xff]
    %v1562 = vld [vmem:[%s7 + $0x920] sm:$0xff]
    %v1563 = vld [vmem:[%s7 + $0x928] sm:$0xff]
    %v1564 = vld [vmem:[%s7 + $0x930] sm:$0xff]
    %v1565 = vld [vmem:[%s7 + $0x938] sm:$0xff]
    %v1566 = vld [vmem:[%s7 + $0x940] sm:$0xff]
    %v1567 = vld [vmem:[%s7 + $0x948] sm:$0xff]
    %v1568 = vld [vmem:[%s7 + $0x950] sm:$0xff]
    %v1569 = vld [vmem:[%s7 + $0x958] sm:$0xff]
    %v1570 = vld [vmem:[%s7 + $0x960] sm:$0xff]
    %v1571 = vld [vmem:[%s7 + $0x968] sm:$0xff]
    %v1572 = vld [vmem:[%s7 + $0x970] sm:$0xff]
    %v1573 = vld [vmem:[%s7 + $0x978] sm:$0xff]
    %v1574 = vld [vmem:[%s7 + $0x980] sm:$0xff]
    %v1575 = vld [vmem:[%s7 + $0x988] sm:$0xff]
    %v1576 = vld [vmem:[%s7 + $0x990] sm:$0xff]
    %v1577 = vld [vmem:[%s7 + $0x998] sm:$0xff]
    %v1578 = vld [vmem:[%s7 + $0x9a0] sm:$0xff]
    %v1579 = vld [vmem:[%s7 + $0x9a8] sm:$0xff]
    %v1580 = vld [vmem:[%s7 + $0x9b0] sm:$0xff]
    %v1581 = vld [vmem:[%s7 + $0x9b8] sm:$0xff]
    %v1582 = vld [vmem:[%s7 + $0x9c0] sm:$0xff]
    %v1583 = vld [vmem:[%s7 + $0x9c8] sm:$0xff]
    %v1584 = vld [vmem:[%s7 + $0x9d0] sm:$0xff]
    %v1585 = vld [vmem:[%s7 + $0x9d8] sm:$0xff]
    %v1586 = vld [vmem:[%s7 + $0x9e0] sm:$0xff]
    %v1587 = vld [vmem:[%s7 + $0x9e8] sm:$0xff]
    %v1588 = vld [vmem:[%s7 + $0x9f0] sm:$0xff]
    %v1589 = vld [vmem:[%s7 + $0x9f8] sm:$0xff]
    %v1590 = vld [vmem:[%s7 + $0xa00] sm:$0xff]
    %v1591 = vld [vmem:[%s7 + $0xa08] sm:$0xff]
    %v1592 = vld [vmem:[%s7 + $0xa10] sm:$0xff]
    %v1593 = vld [vmem:[%s7 + $0xa18] sm:$0xff]
    %v1594 = vld [vmem:[%s7 + $0xa20] sm:$0xff]
    %v1595 = vld [vmem:[%s7 + $0xa28] sm:$0xff]
    %v1596 = vld [vmem:[%s7 + $0xa30] sm:$0xff]
    %v1597 = vld [vmem:[%s7 + $0xa38] sm:$0xff]
    %v1598 = vld [vmem:[%s7 + $0xa40] sm:$0xff]
    %v1599 = vld [vmem:[%s7 + $0xa48] sm:$0xff]
    %v1600 = vld [vmem:[%s7 + $0xa50] sm:$0xff]
    %v1601 = vld [vmem:[%s7 + $0xa58] sm:$0xff]
    %v1602 = vld [vmem:[%s7 + $0xa60] sm:$0xff]
    %v1603 = vld [vmem:[%s7 + $0xa68] sm:$0xff]
    %v1604 = vld [vmem:[%s7 + $0xa70] sm:$0xff]
    %v1605 = vld [vmem:[%s7 + $0xa78] sm:$0xff]
    %v1606 = vld [vmem:[%s7 + $0xa80] sm:$0xff]
    %v1607 = vld [vmem:[%s7 + $0xa88] sm:$0xff]
    %v1608 = vld [vmem:[%s7 + $0xa90] sm:$0xff]
    %v1609 = vld [vmem:[%s7 + $0xa98] sm:$0xff]
    %v1610 = vld [vmem:[%s7 + $0xaa0] sm:$0xff]
    %v1611 = vld [vmem:[%s7 + $0xaa8] sm:$0xff]
    %v1612 = vld [vmem:[%s7 + $0xab0] sm:$0xff]
    %v1613 = vld [vmem:[%s8] sm:$0x7f]
    %v1615 = vperm.slane %v1613, 0
    %v1616 = vperm.slane %v1613, 1
    %v1617 = vperm.slane %v1613, 2
    %v1618 = vperm.slane %v1613, 3
    %v1619 = vperm.slane %v1613, 4
    %v1620 = vperm.slane %v1613, 5
    %v1621 = vperm.slane %v1613, 6
    %v1630 = vsel %vm1066, %v1269, 0
    %1632 = vmatpush.msra.mxu0 %v1375
    %1633 = vmatpush.msra.mxu0 %v1368
    %1634 = vmatpush.msra.mxu0 %v1361
    %1635 = vmatpush.msra.mxu0 %v1354
    %1636 = vmatpush.msra.mxu0 %v1347
    %1637 = vmatpush.msra.mxu0 %v1340
    %1638 = vmatpush.msra.mxu0 %v1333
    %1639 = vmatpush.msra.mxu0 %v1326
    %1640 = vmatpush.msra.mxu0 %v1319
    %1641 = vmatpush.msra.mxu0 %v1312
    %1642 = vmatpush.msra.mxu0 %v1305
    %1643 = vmatpush.msra.mxu0 %v1298
    %1644 = vmatpush.msra.mxu0 %v1291
    %1645 = vmatpush.msra.mxu0 %v1284
    %1646 = vmatpush.msra.mxu0 %v1277
    %1647 = vmatpush.msra.mxu0 %v1270
    %1648 = vmatmul.f32.gmra.mxu0 %v1266
    %v1649 = vpop.f32.mrf.mxu0
    %v1650 = vadd.f32 %v1615, %v1649
    %1651 = vdwg.mxu0
    %1652 = vmatpush.msra.mxu0 %v1487
    %1653 = vmatpush.msra.mxu0 %v1480
    %1654 = vmatpush.msra.mxu0 %v1473
    %1655 = vmatpush.msra.mxu0 %v1466
    %1656 = vmatpush.msra.mxu0 %v1459
    %1657 = vmatpush.msra.mxu0 %v1452
    %1658 = vmatpush.msra.mxu0 %v1445
    %1659 = vmatpush.msra.mxu0 %v1438
    %1660 = vmatpush.msra.mxu0 %v1431
    %1661 = vmatpush.msra.mxu0 %v1424
    %1662 = vmatpush.msra.mxu0 %v1417
    %1663 = vmatpush.msra.mxu0 %v1410
    %1664 = vmatpush.msra.mxu0 %v1403
    %1665 = vmatpush.msra.mxu0 %v1396
    %1666 = vmatpush.msra.mxu0 %v1389
    %1667 = vmatpush.msra.mxu0 %v1382
    %1668 = vmatmul.f32.gmra.mxu0 %v1267
    %v1669 = vpop.f32.mrf.mxu0
    %v1670 = vadd.f32 %v1650, %v1669
    %1671 = vdwg.mxu0
    %1672 = vmatpush.msra.mxu0 %v1599
    %1673 = vmatpush.msra.mxu0 %v1592
    %1674 = vmatpush.msra.mxu0 %v1585
    %1675 = vmatpush.msra.mxu0 %v1578
    %1676 = vmatpush.msra.mxu0 %v1571
    %1677 = vmatpush.msra.mxu0 %v1564
    %1678 = vmatpush.msra.mxu0 %v1557
    %1679 = vmatpush.msra.mxu0 %v1550
    %1680 = vmatpush.msra.mxu0 %v1543
    %1681 = vmatpush.msra.mxu0 %v1536
    %1682 = vmatpush.msra.mxu0 %v1529
    %1683 = vmatpush.msra.mxu0 %v1522
    %1684 = vmatpush.msra.mxu0 %v1515
    %1685 = vmatpush.msra.mxu0 %v1508
    %1686 = vmatpush.msra.mxu0 %v1501
    %1687 = vmatpush.msra.mxu0 %v1494
    %1688 = vmatmul.f32.gmra.mxu0 %v1268
    %v1689 = vpop.f32.mrf.mxu0
    %v1690 = vadd.f32 %v1670, %v1689
    %1691 = vdwg.mxu0
    %1692 = vmatpush.msra.mxu0 0.0
    %1693 = vmatpush.msra.mxu0 0.0
    %1694 = vmatpush.msra.mxu0 0.0
    %1695 = vmatpush.msra.mxu0 0.0
    %1696 = vmatpush.msra.mxu0 0.0
    %1697 = vmatpush.msra.mxu0 0.0
    %1698 = vmatpush.msra.mxu0 0.0
    %1699 = vmatpush.msra.mxu0 0.0
    %1700 = vmatpush.msra.mxu0 0.0
    %1701 = vmatpush.msra.mxu0 0.0
    %1702 = vmatpush.msra.mxu0 0.0
    %1703 = vmatpush.msra.mxu0 0.0
    %1704 = vmatpush.msra.mxu0 0.0
    %1705 = vmatpush.msra.mxu0 0.0
    %1706 = vmatpush.msra.mxu0 0.0
    %1707 = vmatpush.msra.mxu0 %v1606
    %1708 = vmatmul.f32.gmra.mxu0 %v1630
    %v1709 = vpop.f32.mrf.mxu0
    %v1710 = vadd.f32 %v1690, %v1709
    %1711 = vdwg.mxu0
    %1712 = vmatpush.msra.mxu0 %v1376
    %1713 = vmatpush.msra.mxu0 %v1369
    %1714 = vmatpush.msra.mxu0 %v1362
    %1715 = vmatpush.msra.mxu0 %v1355
    %1716 = vmatpush.msra.mxu0 %v1348
    %1717 = vmatpush.msra.mxu0 %v1341
    %1718 = vmatpush.msra.mxu0 %v1334
    %1719 = vmatpush.msra.mxu0 %v1327
    %1720 = vmatpush.msra.mxu0 %v1320
    %1721 = vmatpush.msra.mxu0 %v1313
    %1722 = vmatpush.msra.mxu0 %v1306
    %1723 = vmatpush.msra.mxu0 %v1299
    %1724 = vmatpush.msra.mxu0 %v1292
    %1725 = vmatpush.msra.mxu0 %v1285
    %1726 = vmatpush.msra.mxu0 %v1278
    %1727 = vmatpush.msra.mxu0 %v1271
    %1728 = vmatmul.f32.gmra.mxu0 %v1266
    %v1729 = vpop.f32.mrf.mxu0
    %v1730 = vadd.f32 %v1616, %v1729
    %1731 = vdwg.mxu0
    %1732 = vmatpush.msra.mxu0 %v1488
    %1733 = vmatpush.msra.mxu0 %v1481
    %1734 = vmatpush.msra.mxu0 %v1474
    %1735 = vmatpush.msra.mxu0 %v1467
    %1736 = vmatpush.msra.mxu0 %v1460
    %1737 = vmatpush.msra.mxu0 %v1453
    %1738 = vmatpush.msra.mxu0 %v1446
    %1739 = vmatpush.msra.mxu0 %v1439
    %1740 = vmatpush.msra.mxu0 %v1432
    %1741 = vmatpush.msra.mxu0 %v1425
    %1742 = vmatpush.msra.mxu0 %v1418
    %1743 = vmatpush.msra.mxu0 %v1411
    %1744 = vmatpush.msra.mxu0 %v1404
    %1745 = vmatpush.msra.mxu0 %v1397
    %1746 = vmatpush.msra.mxu0 %v1390
    %1747 = vmatpush.msra.mxu0 %v1383
    %1748 = vmatmul.f32.gmra.mxu0 %v1267
    %v1749 = vpop.f32.mrf.mxu0
    %v1750 = vadd.f32 %v1730, %v1749
    %1751 = vdwg.mxu0
    %1752 = vmatpush.msra.mxu0 %v1600
    %1753 = vmatpush.msra.mxu0 %v1593
    %1754 = vmatpush.msra.mxu0 %v1586
    %1755 = vmatpush.msra.mxu0 %v1579
    %1756 = vmatpush.msra.mxu0 %v1572
    %1757 = vmatpush.msra.mxu0 %v1565
    %1758 = vmatpush.msra.mxu0 %v1558
    %1759 = vmatpush.msra.mxu0 %v1551
    %1760 = vmatpush.msra.mxu0 %v1544
    %1761 = vmatpush.msra.mxu0 %v1537
    %1762 = vmatpush.msra.mxu0 %v1530
    %1763 = vmatpush.msra.mxu0 %v1523
    %1764 = vmatpush.msra.mxu0 %v1516
    %1765 = vmatpush.msra.mxu0 %v1509
    %1766 = vmatpush.msra.mxu0 %v1502
    %1767 = vmatpush.msra.mxu0 %v1495
    %1768 = vmatmul.f32.gmra.mxu0 %v1268
    %v1769 = vpop.f32.mrf.mxu0
    %v1770 = vadd.f32 %v1750, %v1769
    %1771 = vdwg.mxu0
    %1772 = vmatpush.msra.mxu0 0.0
    %1773 = vmatpush.msra.mxu0 0.0
    %1774 = vmatpush.msra.mxu0 0.0
    %1775 = vmatpush.msra.mxu0 0.0
    %1776 = vmatpush.msra.mxu0 0.0
    %1777 = vmatpush.msra.mxu0 0.0
    %1778 = vmatpush.msra.mxu0 0.0
    %1779 = vmatpush.msra.mxu0 0.0
    %1780 = vmatpush.msra.mxu0 0.0
    %1781 = vmatpush.msra.mxu0 0.0
    %1782 = vmatpush.msra.mxu0 0.0
    %1783 = vmatpush.msra.mxu0 0.0
    %1784 = vmatpush.msra.mxu0 0.0
    %1785 = vmatpush.msra.mxu0 0.0
    %1786 = vmatpush.msra.mxu0 0.0
    %1787 = vmatpush.msra.mxu0 %v1607
    %1788 = vmatmul.f32.gmra.mxu0 %v1630
    %v1789 = vpop.f32.mrf.mxu0
    %v1790 = vadd.f32 %v1770, %v1789
    %1791 = vdwg.mxu0
    %1792 = vmatpush.msra.mxu0 %v1377
    %1793 = vmatpush.msra.mxu0 %v1370
    %1794 = vmatpush.msra.mxu0 %v1363
    %1795 = vmatpush.msra.mxu0 %v1356
    %1796 = vmatpush.msra.mxu0 %v1349
    %1797 = vmatpush.msra.mxu0 %v1342
    %1798 = vmatpush.msra.mxu0 %v1335
    %1799 = vmatpush.msra.mxu0 %v1328
    %1800 = vmatpush.msra.mxu0 %v1321
    %1801 = vmatpush.msra.mxu0 %v1314
    %1802 = vmatpush.msra.mxu0 %v1307
    %1803 = vmatpush.msra.mxu0 %v1300
    %1804 = vmatpush.msra.mxu0 %v1293
    %1805 = vmatpush.msra.mxu0 %v1286
    %1806 = vmatpush.msra.mxu0 %v1279
    %1807 = vmatpush.msra.mxu0 %v1272
    %1808 = vmatmul.f32.gmra.mxu0 %v1266
    %v1809 = vpop.f32.mrf.mxu0
    %v1810 = vadd.f32 %v1617, %v1809
    %1811 = vdwg.mxu0
    %1812 = vmatpush.msra.mxu0 %v1489
    %1813 = vmatpush.msra.mxu0 %v1482
    %1814 = vmatpush.msra.mxu0 %v1475
    %1815 = vmatpush.msra.mxu0 %v1468
    %1816 = vmatpush.msra.mxu0 %v1461
    %1817 = vmatpush.msra.mxu0 %v1454
    %1818 = vmatpush.msra.mxu0 %v1447
    %1819 = vmatpush.msra.mxu0 %v1440
    %1820 = vmatpush.msra.mxu0 %v1433
    %1821 = vmatpush.msra.mxu0 %v1426
    %1822 = vmatpush.msra.mxu0 %v1419
    %1823 = vmatpush.msra.mxu0 %v1412
    %1824 = vmatpush.msra.mxu0 %v1405
    %1825 = vmatpush.msra.mxu0 %v1398
    %1826 = vmatpush.msra.mxu0 %v1391
    %1827 = vmatpush.msra.mxu0 %v1384
    %1828 = vmatmul.f32.gmra.mxu0 %v1267
    %v1829 = vpop.f32.mrf.mxu0
    %v1830 = vadd.f32 %v1810, %v1829
    %1831 = vdwg.mxu0
    %1832 = vmatpush.msra.mxu0 %v1601
    %1833 = vmatpush.msra.mxu0 %v1594
    %1834 = vmatpush.msra.mxu0 %v1587
    %1835 = vmatpush.msra.mxu0 %v1580
    %1836 = vmatpush.msra.mxu0 %v1573
    %1837 = vmatpush.msra.mxu0 %v1566
    %1838 = vmatpush.msra.mxu0 %v1559
    %1839 = vmatpush.msra.mxu0 %v1552
    %1840 = vmatpush.msra.mxu0 %v1545
    %1841 = vmatpush.msra.mxu0 %v1538
    %1842 = vmatpush.msra.mxu0 %v1531
    %1843 = vmatpush.msra.mxu0 %v1524
    %1844 = vmatpush.msra.mxu0 %v1517
    %1845 = vmatpush.msra.mxu0 %v1510
    %1846 = vmatpush.msra.mxu0 %v1503
    %1847 = vmatpush.msra.mxu0 %v1496
    %1848 = vmatmul.f32.gmra.mxu0 %v1268
    %v1849 = vpop.f32.mrf.mxu0
    %v1850 = vadd.f32 %v1830, %v1849
    %1851 = vdwg.mxu0
    %1852 = vmatpush.msra.mxu0 0.0
    %1853 = vmatpush.msra.mxu0 0.0
    %1854 = vmatpush.msra.mxu0 0.0
    %1855 = vmatpush.msra.mxu0 0.0
    %1856 = vmatpush.msra.mxu0 0.0
    %1857 = vmatpush.msra.mxu0 0.0
    %1858 = vmatpush.msra.mxu0 0.0
    %1859 = vmatpush.msra.mxu0 0.0
    %1860 = vmatpush.msra.mxu0 0.0
    %1861 = vmatpush.msra.mxu0 0.0
    %1862 = vmatpush.msra.mxu0 0.0
    %1863 = vmatpush.msra.mxu0 0.0
    %1864 = vmatpush.msra.mxu0 0.0
    %1865 = vmatpush.msra.mxu0 0.0
    %1866 = vmatpush.msra.mxu0 0.0
    %1867 = vmatpush.msra.mxu0 %v1608
    %1868 = vmatmul.f32.gmra.mxu0 %v1630
    %v1869 = vpop.f32.mrf.mxu0
    %v1870 = vadd.f32 %v1850, %v1869
    %1871 = vdwg.mxu0
    %1872 = vmatpush.msra.mxu0 %v1378
    %1873 = vmatpush.msra.mxu0 %v1371
    %1874 = vmatpush.msra.mxu0 %v1364
    %1875 = vmatpush.msra.mxu0 %v1357
    %1876 = vmatpush.msra.mxu0 %v1350
    %1877 = vmatpush.msra.mxu0 %v1343
    %1878 = vmatpush.msra.mxu0 %v1336
    %1879 = vmatpush.msra.mxu0 %v1329
    %1880 = vmatpush.msra.mxu0 %v1322
    %1881 = vmatpush.msra.mxu0 %v1315
    %1882 = vmatpush.msra.mxu0 %v1308
    %1883 = vmatpush.msra.mxu0 %v1301
    %1884 = vmatpush.msra.mxu0 %v1294
    %1885 = vmatpush.msra.mxu0 %v1287
    %1886 = vmatpush.msra.mxu0 %v1280
    %1887 = vmatpush.msra.mxu0 %v1273
    %1888 = vmatmul.f32.gmra.mxu0 %v1266
    %v1889 = vpop.f32.mrf.mxu0
    %v1890 = vadd.f32 %v1618, %v1889
    %1891 = vdwg.mxu0
    %1892 = vmatpush.msra.mxu0 %v1490
    %1893 = vmatpush.msra.mxu0 %v1483
    %1894 = vmatpush.msra.mxu0 %v1476
    %1895 = vmatpush.msra.mxu0 %v1469
    %1896 = vmatpush.msra.mxu0 %v1462
    %1897 = vmatpush.msra.mxu0 %v1455
    %1898 = vmatpush.msra.mxu0 %v1448
    %1899 = vmatpush.msra.mxu0 %v1441
    %1900 = vmatpush.msra.mxu0 %v1434
    %1901 = vmatpush.msra.mxu0 %v1427
    %1902 = vmatpush.msra.mxu0 %v1420
    %1903 = vmatpush.msra.mxu0 %v1413
    %1904 = vmatpush.msra.mxu0 %v1406
    %1905 = vmatpush.msra.mxu0 %v1399
    %1906 = vmatpush.msra.mxu0 %v1392
    %1907 = vmatpush.msra.mxu0 %v1385
    %1908 = vmatmul.f32.gmra.mxu0 %v1267
    %v1909 = vpop.f32.mrf.mxu0
    %v1910 = vadd.f32 %v1890, %v1909
    %1911 = vdwg.mxu0
    %1912 = vmatpush.msra.mxu0 %v1602
    %1913 = vmatpush.msra.mxu0 %v1595
    %1914 = vmatpush.msra.mxu0 %v1588
    %1915 = vmatpush.msra.mxu0 %v1581
    %1916 = vmatpush.msra.mxu0 %v1574
    %1917 = vmatpush.msra.mxu0 %v1567
    %1918 = vmatpush.msra.mxu0 %v1560
    %1919 = vmatpush.msra.mxu0 %v1553
    %1920 = vmatpush.msra.mxu0 %v1546
    %1921 = vmatpush.msra.mxu0 %v1539
    %1922 = vmatpush.msra.mxu0 %v1532
    %1923 = vmatpush.msra.mxu0 %v1525
    %1924 = vmatpush.msra.mxu0 %v1518
    %1925 = vmatpush.msra.mxu0 %v1511
    %1926 = vmatpush.msra.mxu0 %v1504
    %1927 = vmatpush.msra.mxu0 %v1497
    %1928 = vmatmul.f32.gmra.mxu0 %v1268
    %v1929 = vpop.f32.mrf.mxu0
    %v1930 = vadd.f32 %v1910, %v1929
    %1931 = vdwg.mxu0
    %1932 = vmatpush.msra.mxu0 0.0
    %1933 = vmatpush.msra.mxu0 0.0
    %1934 = vmatpush.msra.mxu0 0.0
    %1935 = vmatpush.msra.mxu0 0.0
    %1936 = vmatpush.msra.mxu0 0.0
    %1937 = vmatpush.msra.mxu0 0.0
    %1938 = vmatpush.msra.mxu0 0.0
    %1939 = vmatpush.msra.mxu0 0.0
    %1940 = vmatpush.msra.mxu0 0.0
    %1941 = vmatpush.msra.mxu0 0.0
    %1942 = vmatpush.msra.mxu0 0.0
    %1943 = vmatpush.msra.mxu0 0.0
    %1944 = vmatpush.msra.mxu0 0.0
    %1945 = vmatpush.msra.mxu0 0.0
    %1946 = vmatpush.msra.mxu0 0.0
    %1947 = vmatpush.msra.mxu0 %v1609
    %1948 = vmatmul.f32.gmra.mxu0 %v1630
    %v1949 = vpop.f32.mrf.mxu0
    %v1950 = vadd.f32 %v1930, %v1949
    %1951 = vdwg.mxu0
    %1952 = vmatpush.msra.mxu0 %v1379
    %1953 = vmatpush.msra.mxu0 %v1372
    %1954 = vmatpush.msra.mxu0 %v1365
    %1955 = vmatpush.msra.mxu0 %v1358
    %1956 = vmatpush.msra.mxu0 %v1351
    %1957 = vmatpush.msra.mxu0 %v1344
    %1958 = vmatpush.msra.mxu0 %v1337
    %1959 = vmatpush.msra.mxu0 %v1330
    %1960 = vmatpush.msra.mxu0 %v1323
    %1961 = vmatpush.msra.mxu0 %v1316
    %1962 = vmatpush.msra.mxu0 %v1309
    %1963 = vmatpush.msra.mxu0 %v1302
    %1964 = vmatpush.msra.mxu0 %v1295
    %1965 = vmatpush.msra.mxu0 %v1288
    %1966 = vmatpush.msra.mxu0 %v1281
    %1967 = vmatpush.msra.mxu0 %v1274
    %1968 = vmatmul.f32.gmra.mxu0 %v1266
    %v1969 = vpop.f32.mrf.mxu0
    %v1970 = vadd.f32 %v1619, %v1969
    %1971 = vdwg.mxu0
    %1972 = vmatpush.msra.mxu0 %v1491
    %1973 = vmatpush.msra.mxu0 %v1484
    %1974 = vmatpush.msra.mxu0 %v1477
    %1975 = vmatpush.msra.mxu0 %v1470
    %1976 = vmatpush.msra.mxu0 %v1463
    %1977 = vmatpush.msra.mxu0 %v1456
    %1978 = vmatpush.msra.mxu0 %v1449
    %1979 = vmatpush.msra.mxu0 %v1442
    %1980 = vmatpush.msra.mxu0 %v1435
    %1981 = vmatpush.msra.mxu0 %v1428
    %1982 = vmatpush.msra.mxu0 %v1421
    %1983 = vmatpush.msra.mxu0 %v1414
    %1984 = vmatpush.msra.mxu0 %v1407
    %1985 = vmatpush.msra.mxu0 %v1400
    %1986 = vmatpush.msra.mxu0 %v1393
    %1987 = vmatpush.msra.mxu0 %v1386
    %1988 = vmatmul.f32.gmra.mxu0 %v1267
    %v1989 = vpop.f32.mrf.mxu0
    %v1990 = vadd.f32 %v1970, %v1989
    %1991 = vdwg.mxu0
    %1992 = vmatpush.msra.mxu0 %v1603
    %1993 = vmatpush.msra.mxu0 %v1596
    %1994 = vmatpush.msra.mxu0 %v1589
    %1995 = vmatpush.msra.mxu0 %v1582
    %1996 = vmatpush.msra.mxu0 %v1575
    %1997 = vmatpush.msra.mxu0 %v1568
    %1998 = vmatpush.msra.mxu0 %v1561
    %1999 = vmatpush.msra.mxu0 %v1554
    %2000 = vmatpush.msra.mxu0 %v1547
    %2001 = vmatpush.msra.mxu0 %v1540
    %2002 = vmatpush.msra.mxu0 %v1533
    %2003 = vmatpush.msra.mxu0 %v1526
    %2004 = vmatpush.msra.mxu0 %v1519
    %2005 = vmatpush.msra.mxu0 %v1512
    %2006 = vmatpush.msra.mxu0 %v1505
    %2007 = vmatpush.msra.mxu0 %v1498
    %2008 = vmatmul.f32.gmra.mxu0 %v1268
    %v2009 = vpop.f32.mrf.mxu0
    %v2010 = vadd.f32 %v1990, %v2009
    %2011 = vdwg.mxu0
    %2012 = vmatpush.msra.mxu0 0.0
    %2013 = vmatpush.msra.mxu0 0.0
    %2014 = vmatpush.msra.mxu0 0.0
    %2015 = vmatpush.msra.mxu0 0.0
    %2016 = vmatpush.msra.mxu0 0.0
    %2017 = vmatpush.msra.mxu0 0.0
    %2018 = vmatpush.msra.mxu0 0.0
    %2019 = vmatpush.msra.mxu0 0.0
    %2020 = vmatpush.msra.mxu0 0.0
    %2021 = vmatpush.msra.mxu0 0.0
    %2022 = vmatpush.msra.mxu0 0.0
    %2023 = vmatpush.msra.mxu0 0.0
    %2024 = vmatpush.msra.mxu0 0.0
    %2025 = vmatpush.msra.mxu0 0.0
    %2026 = vmatpush.msra.mxu0 0.0
    %2027 = vmatpush.msra.mxu0 %v1610
    %2028 = vmatmul.f32.gmra.mxu0 %v1630
    %v2029 = vpop.f32.mrf.mxu0
    %v2030 = vadd.f32 %v2010, %v2029
    %2031 = vdwg.mxu0
    %2032 = vmatpush.msra.mxu0 %v1380
    %2033 = vmatpush.msra.mxu0 %v1373
    %2034 = vmatpush.msra.mxu0 %v1366
    %2035 = vmatpush.msra.mxu0 %v1359
    %2036 = vmatpush.msra.mxu0 %v1352
    %2037 = vmatpush.msra.mxu0 %v1345
    %2038 = vmatpush.msra.mxu0 %v1338
    %2039 = vmatpush.msra.mxu0 %v1331
    %2040 = vmatpush.msra.mxu0 %v1324
    %2041 = vmatpush.msra.mxu0 %v1317
    %2042 = vmatpush.msra.mxu0 %v1310
    %2043 = vmatpush.msra.mxu0 %v1303
    %2044 = vmatpush.msra.mxu0 %v1296
    %2045 = vmatpush.msra.mxu0 %v1289
    %2046 = vmatpush.msra.mxu0 %v1282
    %2047 = vmatpush.msra.mxu0 %v1275
    %2048 = vmatmul.f32.gmra.mxu0 %v1266
    %v2049 = vpop.f32.mrf.mxu0
    %v2050 = vadd.f32 %v1620, %v2049
    %2051 = vdwg.mxu0
    %2052 = vmatpush.msra.mxu0 %v1492
    %2053 = vmatpush.msra.mxu0 %v1485
    %2054 = vmatpush.msra.mxu0 %v1478
    %2055 = vmatpush.msra.mxu0 %v1471
    %2056 = vmatpush.msra.mxu0 %v1464
    %2057 = vmatpush.msra.mxu0 %v1457
    %2058 = vmatpush.msra.mxu0 %v1450
    %2059 = vmatpush.msra.mxu0 %v1443
    %2060 = vmatpush.msra.mxu0 %v1436
    %2061 = vmatpush.msra.mxu0 %v1429
    %2062 = vmatpush.msra.mxu0 %v1422
    %2063 = vmatpush.msra.mxu0 %v1415
    %2064 = vmatpush.msra.mxu0 %v1408
    %2065 = vmatpush.msra.mxu0 %v1401
    %2066 = vmatpush.msra.mxu0 %v1394
    %2067 = vmatpush.msra.mxu0 %v1387
    %2068 = vmatmul.f32.gmra.mxu0 %v1267
    %v2069 = vpop.f32.mrf.mxu0
    %v2070 = vadd.f32 %v2050, %v2069
    %2071 = vdwg.mxu0
    %2072 = vmatpush.msra.mxu0 %v1604
    %2073 = vmatpush.msra.mxu0 %v1597
    %2074 = vmatpush.msra.mxu0 %v1590
    %2075 = vmatpush.msra.mxu0 %v1583
    %2076 = vmatpush.msra.mxu0 %v1576
    %2077 = vmatpush.msra.mxu0 %v1569
    %2078 = vmatpush.msra.mxu0 %v1562
    %2079 = vmatpush.msra.mxu0 %v1555
    %2080 = vmatpush.msra.mxu0 %v1548
    %2081 = vmatpush.msra.mxu0 %v1541
    %2082 = vmatpush.msra.mxu0 %v1534
    %2083 = vmatpush.msra.mxu0 %v1527
    %2084 = vmatpush.msra.mxu0 %v1520
    %2085 = vmatpush.msra.mxu0 %v1513
    %2086 = vmatpush.msra.mxu0 %v1506
    %2087 = vmatpush.msra.mxu0 %v1499
    %2088 = vmatmul.f32.gmra.mxu0 %v1268
    %v2089 = vpop.f32.mrf.mxu0
    %v2090 = vadd.f32 %v2070, %v2089
    %2091 = vdwg.mxu0
    %2092 = vmatpush.msra.mxu0 0.0
    %2093 = vmatpush.msra.mxu0 0.0
    %2094 = vmatpush.msra.mxu0 0.0
    %2095 = vmatpush.msra.mxu0 0.0
    %2096 = vmatpush.msra.mxu0 0.0
    %2097 = vmatpush.msra.mxu0 0.0
    %2098 = vmatpush.msra.mxu0 0.0
    %2099 = vmatpush.msra.mxu0 0.0
    %2100 = vmatpush.msra.mxu0 0.0
    %2101 = vmatpush.msra.mxu0 0.0
    %2102 = vmatpush.msra.mxu0 0.0
    %2103 = vmatpush.msra.mxu0 0.0
    %2104 = vmatpush.msra.mxu0 0.0
    %2105 = vmatpush.msra.mxu0 0.0
    %2106 = vmatpush.msra.mxu0 0.0
    %2107 = vmatpush.msra.mxu0 %v1611
    %2108 = vmatmul.f32.gmra.mxu0 %v1630
    %v2109 = vpop.f32.mrf.mxu0
    %v2110 = vadd.f32 %v2090, %v2109
    %2111 = vdwg.mxu0
    %2112 = vmatpush.msra.mxu0 %v1381
    %2113 = vmatpush.msra.mxu0 %v1374
    %2114 = vmatpush.msra.mxu0 %v1367
    %2115 = vmatpush.msra.mxu0 %v1360
    %2116 = vmatpush.msra.mxu0 %v1353
    %2117 = vmatpush.msra.mxu0 %v1346
    %2118 = vmatpush.msra.mxu0 %v1339
    %2119 = vmatpush.msra.mxu0 %v1332
    %2120 = vmatpush.msra.mxu0 %v1325
    %2121 = vmatpush.msra.mxu0 %v1318
    %2122 = vmatpush.msra.mxu0 %v1311
    %2123 = vmatpush.msra.mxu0 %v1304
    %2124 = vmatpush.msra.mxu0 %v1297
    %2125 = vmatpush.msra.mxu0 %v1290
    %2126 = vmatpush.msra.mxu0 %v1283
    %2127 = vmatpush.msra.mxu0 %v1276
    %2128 = vmatmul.f32.gmra.mxu0 %v1266
    %v2129 = vpop.f32.mrf.mxu0
    %v2130 = vadd.f32 %v1621, %v2129
    %2131 = vdwg.mxu0
    %2132 = vmatpush.msra.mxu0 %v1493
    %2133 = vmatpush.msra.mxu0 %v1486
    %2134 = vmatpush.msra.mxu0 %v1479
    %2135 = vmatpush.msra.mxu0 %v1472
    %2136 = vmatpush.msra.mxu0 %v1465
    %2137 = vmatpush.msra.mxu0 %v1458
    %2138 = vmatpush.msra.mxu0 %v1451
    %2139 = vmatpush.msra.mxu0 %v1444
    %2140 = vmatpush.msra.mxu0 %v1437
    %2141 = vmatpush.msra.mxu0 %v1430
    %2142 = vmatpush.msra.mxu0 %v1423
    %2143 = vmatpush.msra.mxu0 %v1416
    %2144 = vmatpush.msra.mxu0 %v1409
    %2145 = vmatpush.msra.mxu0 %v1402
    %2146 = vmatpush.msra.mxu0 %v1395
    %2147 = vmatpush.msra.mxu0 %v1388
    %2148 = vmatmul.f32.gmra.mxu0 %v1267
    %v2149 = vpop.f32.mrf.mxu0
    %v2150 = vadd.f32 %v2130, %v2149
    %2151 = vdwg.mxu0
    %2152 = vmatpush.msra.mxu0 %v1605
    %2153 = vmatpush.msra.mxu0 %v1598
    %2154 = vmatpush.msra.mxu0 %v1591
    %2155 = vmatpush.msra.mxu0 %v1584
    %2156 = vmatpush.msra.mxu0 %v1577
    %2157 = vmatpush.msra.mxu0 %v1570
    %2158 = vmatpush.msra.mxu0 %v1563
    %2159 = vmatpush.msra.mxu0 %v1556
    %2160 = vmatpush.msra.mxu0 %v1549
    %2161 = vmatpush.msra.mxu0 %v1542
    %2162 = vmatpush.msra.mxu0 %v1535
    %2163 = vmatpush.msra.mxu0 %v1528
    %2164 = vmatpush.msra.mxu0 %v1521
    %2165 = vmatpush.msra.mxu0 %v1514
    %2166 = vmatpush.msra.mxu0 %v1507
    %2167 = vmatpush.msra.mxu0 %v1500
    %2168 = vmatmul.f32.gmra.mxu0 %v1268
    %v2169 = vpop.f32.mrf.mxu0
    %v2170 = vadd.f32 %v2150, %v2169
    %2171 = vdwg.mxu0
    %2172 = vmatpush.msra.mxu0 0.0
    %2173 = vmatpush.msra.mxu0 0.0
    %2174 = vmatpush.msra.mxu0 0.0
    %2175 = vmatpush.msra.mxu0 0.0
    %2176 = vmatpush.msra.mxu0 0.0
    %2177 = vmatpush.msra.mxu0 0.0
    %2178 = vmatpush.msra.mxu0 0.0
    %2179 = vmatpush.msra.mxu0 0.0
    %2180 = vmatpush.msra.mxu0 0.0
    %2181 = vmatpush.msra.mxu0 0.0
    %2182 = vmatpush.msra.mxu0 0.0
    %2183 = vmatpush.msra.mxu0 0.0
    %2184 = vmatpush.msra.mxu0 0.0
    %2185 = vmatpush.msra.mxu0 0.0
    %2186 = vmatpush.msra.mxu0 0.0
    %2187 = vmatpush.msra.mxu0 %v1612
    %2188 = vmatmul.f32.gmra.mxu0 %v1630
    %v2189 = vpop.f32.mrf.mxu0
    %v2190 = vadd.f32 %v2170, %v2189
    %2191 = vdwg.mxu0
    %v2192 = vxor.u32 %v1710, 2147483648
    %v2193 = vxor.u32 %v1790, 2147483648
    %v2194 = vxor.u32 %v1870, 2147483648
    %v2195 = vxor.u32 %v1950, 2147483648
    %v2196 = vxor.u32 %v2030, 2147483648
    %v2197 = vxor.u32 %v2110, 2147483648
    %v2198 = vxor.u32 %v2190, 2147483648
    %v2199 = vmul.f32 %v2192, 1.442695
    %v2200 = vpow.pop %v2199
    %v2201 = vmul.f32 %v2193, 1.442695
    %v2202 = vpow.pop %v2201
    %v2203 = vmul.f32 %v2194, 1.442695
    %v2204 = vpow.pop %v2203
    %v2205 = vmul.f32 %v2195, 1.442695
    %v2206 = vpow.pop %v2205
    %v2207 = vmul.f32 %v2196, 1.442695
    %v2208 = vpow.pop %v2207
    %v2209 = vmul.f32 %v2197, 1.442695
    %v2210 = vpow.pop %v2209
    %v2211 = vmul.f32 %v2198, 1.442695
    %v2212 = vpow.pop %v2211
    %v2213 = vadd.f32 %v2200, 1.0
    %v2214 = vadd.f32 %v2202, 1.0
    %v2215 = vadd.f32 %v2204, 1.0
    %v2216 = vadd.f32 %v2206, 1.0
    %v2217 = vadd.f32 %v2208, 1.0
    %v2218 = vadd.f32 %v2210, 1.0
    %v2219 = vadd.f32 %v2212, 1.0
    %v2220 = vrcp.pop %v2213
    %v2221 = vmul.f32 %v2213, %v2220
    %v2222 = vsub.f32 1.0, %v2221
    %v2223 = vmul.f32 %v2220, %v2222
    %v2224 = vadd.f32 %v2220, %v2223
    %vm2225 = vweird.f32 %v2213
    %vm2226 = vweird.f32 %v2220
    %vm2227 = vmor %vm2225, %vm2226
    %v2228 = vsel %vm2227, %v2220, %v2224
    %v2229 = vand.u32 2147483647, %v2213
    %vm2230 = vcmp.eq.f32.partialorder %v2229, 8.507059e+37
    %v2231 = vand.u32 %v2213, 2147483648
    %v2232 = vor.u32 1.1754944e-38, %v2231
    %v2233 = vsel %vm2230, %v2232, %v2228
    %v2234 = vmul.f32 1.0, %v2233
    %v2235 = vrcp.pop %v2214
    %v2236 = vmul.f32 %v2214, %v2235
    %v2237 = vsub.f32 1.0, %v2236
    %v2238 = vmul.f32 %v2235, %v2237
    %v2239 = vadd.f32 %v2235, %v2238
    %vm2240 = vweird.f32 %v2214
    %vm2241 = vweird.f32 %v2235
    %vm2242 = vmor %vm2240, %vm2241
    %v2243 = vsel %vm2242, %v2235, %v2239
    %v2244 = vand.u32 2147483647, %v2214
    %vm2245 = vcmp.eq.f32.partialorder %v2244, 8.507059e+37
    %v2246 = vand.u32 %v2214, 2147483648
    %v2247 = vor.u32 1.1754944e-38, %v2246
    %v2248 = vsel %vm2245, %v2247, %v2243
    %v2249 = vmul.f32 1.0, %v2248
    %v2250 = vrcp.pop %v2215
    %v2251 = vmul.f32 %v2215, %v2250
    %v2252 = vsub.f32 1.0, %v2251
    %v2253 = vmul.f32 %v2250, %v2252
    %v2254 = vadd.f32 %v2250, %v2253
    %vm2255 = vweird.f32 %v2215
    %vm2256 = vweird.f32 %v2250
    %vm2257 = vmor %vm2255, %vm2256
    %v2258 = vsel %vm2257, %v2250, %v2254
    %v2259 = vand.u32 2147483647, %v2215
    %vm2260 = vcmp.eq.f32.partialorder %v2259, 8.507059e+37
    %v2261 = vand.u32 %v2215, 2147483648
    %v2262 = vor.u32 1.1754944e-38, %v2261
    %v2263 = vsel %vm2260, %v2262, %v2258
    %v2264 = vmul.f32 1.0, %v2263
    %v2265 = vrcp.pop %v2216
    %v2266 = vmul.f32 %v2216, %v2265
    %v2267 = vsub.f32 1.0, %v2266
    %v2268 = vmul.f32 %v2265, %v2267
    %v2269 = vadd.f32 %v2265, %v2268
    %vm2270 = vweird.f32 %v2216
    %vm2271 = vweird.f32 %v2265
    %vm2272 = vmor %vm2270, %vm2271
    %v2273 = vsel %vm2272, %v2265, %v2269
    %v2274 = vand.u32 2147483647, %v2216
    %vm2275 = vcmp.eq.f32.partialorder %v2274, 8.507059e+37
    %v2276 = vand.u32 %v2216, 2147483648
    %v2277 = vor.u32 1.1754944e-38, %v2276
    %v2278 = vsel %vm2275, %v2277, %v2273
    %v2279 = vmul.f32 1.0, %v2278
    %v2280 = vrcp.pop %v2217
    %v2281 = vmul.f32 %v2217, %v2280
    %v2282 = vsub.f32 1.0, %v2281
    %v2283 = vmul.f32 %v2280, %v2282
    %v2284 = vadd.f32 %v2280, %v2283
    %vm2285 = vweird.f32 %v2217
    %vm2286 = vweird.f32 %v2280
    %vm2287 = vmor %vm2285, %vm2286
    %v2288 = vsel %vm2287, %v2280, %v2284
    %v2289 = vand.u32 2147483647, %v2217
    %vm2290 = vcmp.eq.f32.partialorder %v2289, 8.507059e+37
    %v2291 = vand.u32 %v2217, 2147483648
    %v2292 = vor.u32 1.1754944e-38, %v2291
    %v2293 = vsel %vm2290, %v2292, %v2288
    %v2294 = vmul.f32 1.0, %v2293
    %v2295 = vrcp.pop %v2218
    %v2296 = vmul.f32 %v2218, %v2295
    %v2297 = vsub.f32 1.0, %v2296
    %v2298 = vmul.f32 %v2295, %v2297
    %v2299 = vadd.f32 %v2295, %v2298
    %vm2300 = vweird.f32 %v2218
    %vm2301 = vweird.f32 %v2295
    %vm2302 = vmor %vm2300, %vm2301
    %v2303 = vsel %vm2302, %v2295, %v2299
    %v2304 = vand.u32 2147483647, %v2218
    %vm2305 = vcmp.eq.f32.partialorder %v2304, 8.507059e+37
    %v2306 = vand.u32 %v2218, 2147483648
    %v2307 = vor.u32 1.1754944e-38, %v2306
    %v2308 = vsel %vm2305, %v2307, %v2303
    %v2309 = vmul.f32 1.0, %v2308
    %v2310 = vrcp.pop %v2219
    %v2311 = vmul.f32 %v2219, %v2310
    %v2312 = vsub.f32 1.0, %v2311
    %v2313 = vmul.f32 %v2310, %v2312
    %v2314 = vadd.f32 %v2310, %v2313
    %vm2315 = vweird.f32 %v2219
    %vm2316 = vweird.f32 %v2310
    %vm2317 = vmor %vm2315, %vm2316
    %v2318 = vsel %vm2317, %v2310, %v2314
    %v2319 = vand.u32 2147483647, %v2219
    %vm2320 = vcmp.eq.f32.partialorder %v2319, 8.507059e+37
    %v2321 = vand.u32 %v2219, 2147483648
    %v2322 = vor.u32 1.1754944e-38, %v2321
    %v2323 = vsel %vm2320, %v2322, %v2318
    %v2324 = vmul.f32 1.0, %v2323
    %2325 = vst [vmem:[#allocation2] sm:$0xff] %v2234
    %2326 = vst [vmem:[#allocation2 + $0x8] sm:$0xff] %v2249
    %2327 = vst [vmem:[#allocation2 + $0x10] sm:$0xff] %v2264
    %2328 = vst [vmem:[#allocation2 + $0x18] sm:$0xff] %v2279
    %2329 = vst [vmem:[#allocation2 + $0x20] sm:$0xff] %v2294
    %2330 = vst [vmem:[#allocation2 + $0x28] sm:$0xff] %v2309
    %2331 = vst.msk [vmem:[#allocation2 + $0x30] sm:$0xff] %vm445, %v2324
    %2332 = vst.msk [vmem:[#allocation4] sm:$0xff] %vm1169, %v1150
    // Predicated region
    $region38: #{tpu_custom_call.1} parent=1 // pred_check
      _
    $region39: #{tpu_custom_call.1} parent=1 // pred_check_branch
      %2334 = sbr.rel (0) target = $region41
    $region40: #{tpu_custom_call.1} parent=1 // pred_region
      %2336 = vsyncadd [#allocation3], 0
      %s2338 = sshll.u32 [#allocation2], 4
      %s2339 = int_to_ptr.vmem [resolvable:$true] %s2338
      %s2340 = sshll.u32 %s9, 4
      %s2341 = int_to_ptr.hbm [resolvable:$true] %s2340
      %2343 = dma.vmem_to_hbm [thread:$0]  %s2339, 896, %s2341, [#allocation3]
    $region41: #{tpu_custom_call.1} parent=1 // pred_fallthru
      _
    // Predicated region
    $region42: #{tpu_custom_call.1} parent=1 // pred_check
      _
    $region43: #{tpu_custom_call.1} parent=1 // pred_check_branch
      %2345 = sbr.rel (0) target = $region45
    $region44: #{tpu_custom_call.1} parent=1 // pred_region
      %2347 = vsyncadd [#allocation5], 0
      %s2349 = sshll.u32 [#allocation4], 4
      %s2350 = int_to_ptr.vmem [resolvable:$true] %s2349
      %s2351 = sshll.u32 %s10, 4
      %s2352 = int_to_ptr.hbm [resolvable:$true] %s2351
      %2354 = dma.vmem_to_hbm [thread:$0]  %s2350, 128, %s2352, [#allocation5]
    $region45: #{tpu_custom_call.1} parent=1 // pred_fallthru
      _
    // Predicated region
    $region46: #{tpu_custom_call.1} parent=1 // pred_check
      _
    $region47: #{tpu_custom_call.1} parent=1 // pred_check_branch
      %2356 = sbr.rel (0) target = $region49
    $region48: #{tpu_custom_call.1} parent=1 // pred_region
      %2358 = dma.done [#allocation3], 896
    $region49: #{tpu_custom_call.1} parent=1 // pred_fallthru
      _
    // Predicated region
    $region50: #{tpu_custom_call.1} parent=1 // pred_check
      _
    $region51: #{tpu_custom_call.1} parent=1 // pred_check_branch
      %2360 = sbr.rel (0) target = $region53
    $region52: #{tpu_custom_call.1} parent=1 // pred_region
      %2362 = dma.done [#allocation5], 128
    $region53: #{tpu_custom_call.1} parent=1 // pred_fallthru
      _
    %2363 = vsyncpa [#allocation3], 1
    %2364 = vsyncpa [#allocation5], 1

</llo_original>
